<compile_context>
chip_gen: v5e
topology: v5e:2x2
jax: 0.10.0
libtpu: 0.0.40
codegen_flags: <defaults>
</compile_context>

<pallas_src>
import functools
import math

import jax
import jax.numpy as jnp
from jax.experimental import pallas as pl
from jax.experimental.pallas import tpu as pltpu


def prenorm_attention_kernel(
    x_ref,
    ln1_w_ref, ln1_b_ref,
    w_qkv_ref, b_qkv_ref,      # (D, 3D) bf16, pre-transposed, 1/sqrt(Dh) folded into q cols
    w_out_ref, b_out_ref,      # (D, D)  bf16, pre-transposed
    ln2_w_ref, ln2_b_ref,
    w_fc_ref, b_fc_ref,        # (D, 4D) bf16, pre-transposed
    w_proj_ref, b_proj_ref,    # (4D, D) bf16, pre-transposed
    o_ref,
    q_sc, kt_sc, v_sc, ov_sc,  # VMEM scratch: (S,D) / (D,S) / (S,D) / (S,D) bf16
    *, n_head, q_row_tile, mlp_row_tile, bf16_exp):
  """One grid step handles one batch element: a (S, D) slab."""
  bf16 = jnp.bfloat16
  f32 = jnp.float32
  x = x_ref[0].astype(f32)                              # (S, D)
  S, D = x.shape
  Dh = D // n_head

  def layer_norm(v, w_ref, b_ref):                      # f32 statistics throughout
    mu = jnp.mean(v, axis=-1, keepdims=True)
    var = jnp.mean(jnp.square(v - mu), axis=-1, keepdims=True)
    return (v - mu) * jax.lax.rsqrt(var + 1e-5) * w_ref[0] + b_ref[0]

  # ---------------- attention branch:  x1 = x + MHA(LN1(x)) ----------------
  h = layer_norm(x, ln1_w_ref, ln1_b_ref)                                   # (S, D) f32
  qkv = jnp.dot(h.astype(bf16), w_qkv_ref[...],
                preferred_element_type=f32) + b_qkv_ref[0]                  # (S, 3D) f32

  # Stage q/k^T/v once per slab in bf16 VMEM scratch: per-head K slices become
  # sublane-row slices of k^T (one big transpose instead of n_head small ones), and the
  # q-row fori_loop below can use plain pl.ds reads on the second-minor dim.
  q_sc[...] = qkv[:, 0 * D:1 * D].astype(bf16)          # scale pre-folded into w_qkv/b_qkv
  kt_sc[...] = qkv[:, 1 * D:2 * D].T.astype(bf16)       # (D, S)
  v_sc[...] = qkv[:, 2 * D:3 * D].astype(bf16)

  def attend_rows(r0, rows, hs, he, kth, vh):
    """One head, one q-row tile: write (rows, Dh) attention output into ov_sc."""
    qh = q_sc[pl.ds(r0, rows), hs:he]                                       # (rows, Dh) bf16
    s = jnp.dot(qh, kth, preferred_element_type=f32)                        # (rows, S) f32
    s = s - jnp.max(s, axis=-1, keepdims=True)
    p = jnp.exp(s.astype(bf16)) if bf16_exp else jnp.exp(s)                 # bf16 EUP on v6e/v7x
    denom = jnp.sum(p.astype(f32), axis=-1, keepdims=True)                  # (rows, 1) f32
    ov = jnp.dot(p.astype(bf16), vh, preferred_element_type=f32)            # (rows, Dh) f32
    ov = ov * pl.reciprocal(denom, approx=True)                             # normalize post-PV
    ov_sc[pl.ds(r0, rows), hs:he] = ov.astype(bf16)

  n_full = S // q_row_tile
  rem = S - n_full * q_row_tile
  # Static head loop (static lane offsets for q/v/ov slices); the q-row tiles run in a
  # fori_loop so only one (q_tile, S) f32 score block is live at a time.
  # TODO(synk): for very large n_head, switch to lax.fori_loop over a head-major
  # (n_head, S, Dh) scratch to bound trace-time code size as well.
  for hi in range(n_head):
    hs, he = hi * Dh, (hi + 1) * Dh
    kth = kt_sc[hs:he, :]                               # (Dh, S) bf16, sublane-aligned rows
    vh = v_sc[:, hs:he]                                 # (S, Dh) bf16

    if n_full > 1:
      def qt_body(t, carry):
        r0 = t * q_row_tile
        if q_row_tile % 8 == 0:
          r0 = pl.multiple_of(r0, 8)
        attend_rows(r0, q_row_tile, hs, he, kth, vh)
        return carry
      jax.lax.fori_loop(0, n_full, qt_body, 0)
    elif n_full == 1:
      attend_rows(0, q_row_tile, hs, he, kth, vh)
    if rem > 0:
      attend_rows(n_full * q_row_tile, rem, hs, he, kth, vh)

  # Single K=D output projection over the lane-dense per-head outputs (full MXU cadence).
  attn = jnp.dot(ov_sc[...], w_out_ref[...], preferred_element_type=f32)    # (S, D) f32
  x1 = x + attn + b_out_ref[0]

  # ---------------- MLP branch (row-tiled):  out = x1 + MLP(LN2(x1)) ----------------
  for r0 in range(0, S, mlp_row_tile):
    r1 = min(S, r0 + mlp_row_tile)
    xr = x1[r0:r1]                                                          # (rows, D) f32
    hr = layer_norm(xr, ln2_w_ref, ln2_b_ref)
    fr = jnp.dot(hr.astype(bf16), w_fc_ref[...],
                 preferred_element_type=f32) + b_fc_ref[0]                  # (rows, 4D) f32
    fr = fr * jax.nn.sigmoid(1.702 * fr)                                    # QuickGELU in f32
    mr = jnp.dot(fr.astype(bf16), w_proj_ref[...],
                 preferred_element_type=f32) + b_proj_ref[0]                # (rows, D) f32
    o_ref[0, r0:r1, :] = (xr + mr).astype(o_ref.dtype)


def _device_kind():
  try:
    return jax.devices()[0].device_kind.lower()
  except Exception:
    return ""


def _vmem_capacity_bytes():
  try:
    return int(pltpu.get_tpu_info().vmem_capacity_bytes)
  except Exception:
    return 64 * 1024 * 1024          # conservative (v7x-sized) fallback


def prenorm_attention_block(x_sbd, params, n_head, *, q_row_tile=None, mlp_row_tile=None):
  """x_sbd: (seq, batch, d_model) exactly like the PyTorch module."""
  (ln1_w, ln1_b, w_qkv, b_qkv, w_out, b_out,
   ln2_w, ln2_b, w_fc, b_fc, w_proj, b_proj) = params
  S, B, D = x_sbd.shape
  Dh = D // n_head
  x = jnp.transpose(x_sbd, (1, 0, 2))                                       # (B, S, D)
  bf16 = jnp.bfloat16

  # Host-side weight prep: pre-transpose (kernel never does `.T` on weights), cast the
  # matmul weights to bf16 for the MXU, and fold the 1/sqrt(Dh) attention scale into the
  # q columns of the in-projection weight and bias. Biases / LN params stay f32.
  qkv_scale = jnp.concatenate([
      jnp.full((D,), 1.0 / math.sqrt(Dh), jnp.float32),
      jnp.ones((2 * D,), jnp.float32)])
  args = [
      x,
      ln1_w, ln1_b,
      (w_qkv.T * qkv_scale[None, :]).astype(bf16), b_qkv * qkv_scale[None, :],  # (D, 3D)
      jnp.asarray(w_out.T, bf16), b_out,                                         # (D, D)
      ln2_w, ln2_b,
      jnp.asarray(w_fc.T, bf16), b_fc,                                           # (D, 4D)
      jnp.asarray(w_proj.T, bf16), b_proj,                                       # (4D, D)
  ]

  # ---- per-generation knobs ----
  vmem_cap = _vmem_capacity_bytes()
  small_vmem = vmem_cap <= 64 * 1024 * 1024            # v7x: 64 MiB per TensorCore
  # leave headroom for compiler-internal scratch; don't artificially cap v5e/v6e (128 MiB)
  vmem_limit = max(32 * 1024 * 1024,
                   min(vmem_cap - 16 * 1024 * 1024, 112 * 1024 * 1024))
  kind = _device_kind()
  # bf16 exp halves EUP occupancy on v6e/v7x; v5e has no bf16 EUP so keep f32 there.
  bf16_exp = ("v6" in kind) or ("v7" in kind) or ("7x" in kind)
  if q_row_tile is None:
    q_row_tile = 256
  if mlp_row_tile is None:
    mlp_row_tile = 256 if small_vmem else 512
  q_row_tile = min(q_row_tile, S)
  mlp_row_tile = min(mlp_row_tile, S)

  param_bytes = sum(int(math.prod(a.shape)) * a.dtype.itemsize for a in args[1:])
  cost = pl.CostEstimate(
      flops=2 * B * S * (12 * D * D + 2 * S * D),
      transcendentals=B * S * (n_head * S + 4 * D),
      bytes_accessed=2 * B * S * D * x.dtype.itemsize + param_bytes,
  )

  kernel = functools.partial(
      prenorm_attention_kernel, n_head=n_head, q_row_tile=q_row_tile,
      mlp_row_tile=mlp_row_tile, bf16_exp=bf16_exp)

  # TODO(synk): add a second "parallel" grid axis over q/MLP row tiles so both v7x
  # TensorCores are busy when B is 1-2 (needs a K/V pre-pass or redundant QKV compute).
  # TODO(synk): for D >= 1280 on v7x, stream w_fc/w_proj in K-chunks (pltpu.emit_pipeline)
  # instead of holding them whole in VMEM.
  def run(single_buffer_weights):
    def const_spec(shape):
      idx = lambda b, _z=(0,) * len(shape): _z
      if single_buffer_weights:
        # Constant index_map => block never changes; single-buffer to halve weight VMEM.
        return pl.BlockSpec(shape, idx, pipeline_mode=pl.Buffered(1))
      return pl.BlockSpec(shape, idx)

    in_specs = [pl.BlockSpec((1, S, D), lambda b: (b, 0, 0))]
    in_specs += [const_spec(a.shape) for a in args[1:]]

    return pl.pallas_call(
        kernel,
        out_shape=jax.ShapeDtypeStruct((B, S, D), x.dtype),
        grid=(B,),
        in_specs=in_specs,
        out_specs=pl.BlockSpec((1, S, D), lambda b: (b, 0, 0)),
        scratch_shapes=[
            pltpu.VMEM((S, D), bf16),   # q  (scale pre-folded)
            pltpu.VMEM((D, S), bf16),   # k^T (sublane-aligned per-head rows)
            pltpu.VMEM((S, D), bf16),   # v
            pltpu.VMEM((S, D), bf16),   # per-head attention outputs (lane-dense)
        ],
        compiler_params=pltpu.CompilerParams(
            dimension_semantics=("parallel",),
            vmem_limit_bytes=vmem_limit),
        cost_estimate=cost,
    )(*args)

  try:
    out = run(True)
  except Exception:
    # pipeline_mode=pl.Buffered(1) unsupported in this jax version: fall back to the
    # default double-buffered weight specs (identical semantics).
    out = run(False)
  return jnp.transpose(out, (1, 0, 2))                                      # (S, B, D)


def make_params(key, d_model):
  """Deterministic synthetic parameters with the shapes the nn.Module implies (f32,
  PyTorch layout: (out_features, in_features))."""
  ks = jax.random.split(key, 6)
  w = 0.05
  ln1_w = jnp.ones((1, d_model), jnp.float32)
  ln1_b = jnp.zeros((1, d_model), jnp.float32)
  w_qkv = w * jax.random.normal(ks[0], (3 * d_model, d_model), jnp.float32)   # in_proj_weight
  b_qkv = w * jax.random.normal(ks[1], (1, 3 * d_model), jnp.float32)         # in_proj_bias
  w_out = w * jax.random.normal(ks[2], (d_model, d_model), jnp.float32)       # out_proj.weight
  b_out = w * jax.random.normal(ks[3], (1, d_model), jnp.float32)             # out_proj.bias
  ln2_w = jnp.ones((1, d_model), jnp.float32)
  ln2_b = jnp.zeros((1, d_model), jnp.float32)
  w_fc = w * jax.random.normal(ks[4], (4 * d_model, d_model), jnp.float32)    # c_fc.weight
  b_fc = 0.01 * jnp.ones((1, 4 * d_model), jnp.float32)                       # c_fc.bias
  w_proj = w * jax.random.normal(ks[5], (d_model, 4 * d_model), jnp.float32)  # c_proj.weight
  b_proj = 0.01 * jnp.ones((1, d_model), jnp.float32)                         # c_proj.bias
  return [ln1_w, ln1_b, w_qkv, b_qkv, w_out, b_out,
          ln2_w, ln2_b, w_fc, b_fc, w_proj, b_proj]


def reference_forward(x_sbd, params, n_head):
  """Pure-JAX reference with the same precision policy as the kernel
  (bf16 matmul inputs, f32 accumulation; LN/softmax/GELU in f32)."""
  (ln1_w, ln1_b, w_qkv, b_qkv, w_out, b_out,
   ln2_w, ln2_b, w_fc, b_fc, w_proj, b_proj) = params
  S, B, D = x_sbd.shape
  Dh = D // n_head
  bf16 = jnp.bfloat16

  def ln(v, w, b):
    mu = jnp.mean(v, axis=-1, keepdims=True)
    var = jnp.mean(jnp.square(v - mu), axis=-1, keepdims=True)
    return (v - mu) * jax.lax.rsqrt(var + 1e-5) * w[0] + b[0]

  def mm(a, w):  # a @ w.T with bf16 inputs, f32 accumulation
    return jnp.dot(a.astype(bf16), w.astype(bf16).T,
                   preferred_element_type=jnp.float32)

  x = jnp.transpose(x_sbd, (1, 0, 2)).astype(jnp.float32)                   # (B, S, D)
  h = ln(x, ln1_w, ln1_b)
  qkv = mm(h, w_qkv) + b_qkv[0]
  q, k, v = jnp.split(qkv, 3, axis=-1)
  q = q.reshape(B, S, n_head, Dh).transpose(0, 2, 1, 3) * (1.0 / math.sqrt(Dh))
  k = k.reshape(B, S, n_head, Dh).transpose(0, 2, 1, 3)
  v = v.reshape(B, S, n_head, Dh).transpose(0, 2, 1, 3)
  s = jnp.einsum('bhqd,bhkd->bhqk', q.astype(bf16), k.astype(bf16),
                 preferred_element_type=jnp.float32)
  p = jax.nn.softmax(s, axis=-1)
  o = jnp.einsum('bhqk,bhkd->bhqd', p.astype(bf16), v.astype(bf16),
                 preferred_element_type=jnp.float32)
  o = o.transpose(0, 2, 1, 3).reshape(B, S, D)
  x1 = x + mm(o, w_out) + b_out[0]
  h2 = ln(x1, ln2_w, ln2_b)
  fc = mm(h2, w_fc) + b_fc[0]
  fc = fc * jax.nn.sigmoid(1.702 * fc)
  x2 = x1 + mm(fc, w_proj) + b_proj[0]
  return jnp.transpose(x2, (1, 0, 2))


if __name__ == "__main__":
  seq, batch, d_model, n_head = 8, 2, 32, 4
  key = jax.random.PRNGKey(0)
  k_x, k_p = jax.random.split(key)
  x = jax.random.normal(k_x, (seq, batch, d_model), jnp.float32)  # (S, B, D) like PyTorch MHA
  params = make_params(k_p, d_model)

  out = prenorm_attention_block(x, params, n_head)
  out = jax.block_until_ready(out)

  ref = reference_forward(x, params, n_head)
  assert out.shape == (seq, batch, d_model)
  assert jnp.allclose(out, ref, atol=1e-2, rtol=1e-2), "mismatch vs reference"

  print("KERNEL_OK")
</pallas_src>

<mosaic_0001>
module attributes {stable_mosaic.version = 11 : i64} {
  func.func @prenorm_attention_kernel(%arg0: i32, %arg1: memref<1x8x32xf32, #tpu.memory_space<vmem>>, %arg2: memref<1x32xf32, #tpu.memory_space<vmem>>, %arg3: memref<1x32xf32, #tpu.memory_space<vmem>>, %arg4: memref<32x96xbf16, #tpu.memory_space<vmem>>, %arg5: memref<1x96xf32, #tpu.memory_space<vmem>>, %arg6: memref<32x32xbf16, #tpu.memory_space<vmem>>, %arg7: memref<1x32xf32, #tpu.memory_space<vmem>>, %arg8: memref<1x32xf32, #tpu.memory_space<vmem>>, %arg9: memref<1x32xf32, #tpu.memory_space<vmem>>, %arg10: memref<32x128xbf16, #tpu.memory_space<vmem>>, %arg11: memref<1x128xf32, #tpu.memory_space<vmem>>, %arg12: memref<128x32xbf16, #tpu.memory_space<vmem>>, %arg13: memref<1x32xf32, #tpu.memory_space<vmem>>, %arg14: memref<1x8x32xf32, #tpu.memory_space<vmem>>, %arg15: memref<8x32xbf16, #tpu.memory_space<vmem>>, %arg16: memref<32x8xbf16, #tpu.memory_space<vmem>>, %arg17: memref<8x32xbf16, #tpu.memory_space<vmem>>, %arg18: memref<8x32xbf16, #tpu.memory_space<vmem>>) attributes {dimension_semantics = [#tpu.dimension_semantics<parallel>], iteration_bounds = array<i64: 2>, scalar_prefetch = 0 : i64, scratch_operands = 4 : i64, tpu.core_type = #tpu.core_type<tc>, window_params = [{transform_indices = @transform_0, window_bounds = array<i64: 1, 8, 32>}, {pipeline_mode = #tpu.pipeline_mode<synchronous>, transform_indices = @transform_1, window_bounds = array<i64: 1, 32>}, {pipeline_mode = #tpu.pipeline_mode<synchronous>, transform_indices = @transform_2, window_bounds = array<i64: 1, 32>}, {pipeline_mode = #tpu.pipeline_mode<synchronous>, transform_indices = @transform_3, window_bounds = array<i64: 32, 96>}, {pipeline_mode = #tpu.pipeline_mode<synchronous>, transform_indices = @transform_4, window_bounds = array<i64: 1, 96>}, {pipeline_mode = #tpu.pipeline_mode<synchronous>, transform_indices = @transform_5, window_bounds = array<i64: 32, 32>}, {pipeline_mode = #tpu.pipeline_mode<synchronous>, transform_indices = @transform_6, window_bounds = array<i64: 1, 32>}, {pipeline_mode = #tpu.pipeline_mode<synchronous>, transform_indices = @transform_7, window_bounds = array<i64: 1, 32>}, {pipeline_mode = #tpu.pipeline_mode<synchronous>, transform_indices = @transform_8, window_bounds = array<i64: 1, 32>}, {pipeline_mode = #tpu.pipeline_mode<synchronous>, transform_indices = @transform_9, window_bounds = array<i64: 32, 128>}, {pipeline_mode = #tpu.pipeline_mode<synchronous>, transform_indices = @transform_10, window_bounds = array<i64: 1, 128>}, {pipeline_mode = #tpu.pipeline_mode<synchronous>, transform_indices = @transform_11, window_bounds = array<i64: 128, 32>}, {pipeline_mode = #tpu.pipeline_mode<synchronous>, transform_indices = @transform_12, window_bounds = array<i64: 1, 32>}, {transform_indices = @transform_13, window_bounds = array<i64: 1, 8, 32>}]} {
    %c0 = arith.constant 0 : index
    %c0_0 = arith.constant 0 : index
    %c0_1 = arith.constant 0 : index
    %0 = vector.load %arg1[%c0, %c0_0, %c0_1] : memref<1x8x32xf32, #tpu.memory_space<vmem>>, vector<1x8x32xf32>
    %1 = vector.shape_cast %0 : vector<1x8x32xf32> to vector<8x32xf32>
    %cst = arith.constant dense<0.000000e+00> : vector<8xf32>
    %2 = vector.multi_reduction <add>, %1, %cst [1] : vector<8x32xf32> to vector<8xf32>
    %3 = vector.shape_cast %2 : vector<8xf32> to vector<8x1xf32>
    %cst_2 = arith.constant 3.200000e+01 : f32
    %4 = vector.broadcast %cst_2 : f32 to vector<8x1xf32>
    %5 = arith.divf %3, %4 : vector<8x1xf32>
    %6 = vector.broadcast %5 : vector<8x1xf32> to vector<8x32xf32>
    %7 = arith.subf %1, %6 : vector<8x32xf32>
    %8 = arith.mulf %7, %7 : vector<8x32xf32>
    %cst_3 = arith.constant dense<0.000000e+00> : vector<8xf32>
    %9 = vector.multi_reduction <add>, %8, %cst_3 [1] : vector<8x32xf32> to vector<8xf32>
    %10 = vector.shape_cast %9 : vector<8xf32> to vector<8x1xf32>
    %cst_4 = arith.constant 3.200000e+01 : f32
    %11 = vector.broadcast %cst_4 : f32 to vector<8x1xf32>
    %12 = arith.divf %10, %11 : vector<8x1xf32>
    %13 = vector.broadcast %5 : vector<8x1xf32> to vector<8x32xf32>
    %14 = arith.subf %1, %13 : vector<8x32xf32>
    %cst_5 = arith.constant 9.99999974E-6 : f32
    %15 = vector.broadcast %cst_5 : f32 to vector<8x1xf32>
    %16 = arith.addf %12, %15 : vector<8x1xf32>
    %17 = math.rsqrt %16 : vector<8x1xf32>
    %18 = vector.broadcast %17 : vector<8x1xf32> to vector<8x32xf32>
    %19 = arith.mulf %14, %18 : vector<8x32xf32>
    %c0_6 = arith.constant 0 : index
    %c0_7 = arith.constant 0 : index
    %20 = vector.load %arg2[%c0_6, %c0_7] : memref<1x32xf32, #tpu.memory_space<vmem>>, vector<1x32xf32>
    %21 = vector.shape_cast %20 : vector<1x32xf32> to vector<32xf32>
    %22 = vector.shape_cast %21 : vector<32xf32> to vector<1x32xf32>
    %23 = vector.broadcast %22 : vector<1x32xf32> to vector<8x32xf32>
    %24 = arith.mulf %19, %23 : vector<8x32xf32>
    %c0_8 = arith.constant 0 : index
    %c0_9 = arith.constant 0 : index
    %25 = vector.load %arg3[%c0_8, %c0_9] : memref<1x32xf32, #tpu.memory_space<vmem>>, vector<1x32xf32>
    %26 = vector.shape_cast %25 : vector<1x32xf32> to vector<32xf32>
    %27 = vector.shape_cast %26 : vector<32xf32> to vector<1x32xf32>
    %28 = vector.broadcast %27 : vector<1x32xf32> to vector<8x32xf32>
    %29 = arith.addf %24, %28 : vector<8x32xf32>
    %30 = arith.truncf %29 : vector<8x32xf32> to vector<8x32xbf16>
    %c0_10 = arith.constant 0 : index
    %c0_11 = arith.constant 0 : index
    %31 = vector.load %arg4[%c0_10, %c0_11] : memref<32x96xbf16, #tpu.memory_space<vmem>>, vector<32x96xbf16>
    %cst_12 = arith.constant dense<0.000000e+00> : vector<8x96xf32>
    %32 = tpu.matmul %30, %31, %cst_12 {dimension_numbers = #tpu.dot_dimension_numbers<[1], [0], [0], [1], [0, 0, 1, 1], [], []>} : vector<8x32xbf16>, vector<32x96xbf16>, vector<8x96xf32> -> vector<8x96xf32>
    %c0_13 = arith.constant 0 : index
    %c0_14 = arith.constant 0 : index
    %33 = vector.load %arg5[%c0_13, %c0_14] : memref<1x96xf32, #tpu.memory_space<vmem>>, vector<1x96xf32>
    %34 = vector.shape_cast %33 : vector<1x96xf32> to vector<96xf32>
    %35 = vector.shape_cast %34 : vector<96xf32> to vector<1x96xf32>
    %36 = vector.broadcast %35 : vector<1x96xf32> to vector<8x96xf32>
    %37 = arith.addf %32, %36 : vector<8x96xf32>
    %38 = vector.extract_strided_slice %37 {offsets = [0, 0], sizes = [8, 32], strides = [1, 1]} : vector<8x96xf32> to vector<8x32xf32>
    %39 = arith.truncf %38 : vector<8x32xf32> to vector<8x32xbf16>
    %c0_15 = arith.constant 0 : index
    %c0_16 = arith.constant 0 : index
    %40 = vector.load %arg15[%c0_15, %c0_16] : memref<8x32xbf16, #tpu.memory_space<vmem>>, vector<8x32xbf16>
    tpu.vector_store %arg15[%c0_15, %c0_16], %39 {strides = array<i32>} : memref<8x32xbf16, #tpu.memory_space<vmem>>, vector<8x32xbf16>,
    %41 = vector.extract_strided_slice %37 {offsets = [0, 32], sizes = [8, 32], strides = [1, 1]} : vector<8x96xf32> to vector<8x32xf32>
    %42 = tpu.transpose %41, [1, 0] : vector<8x32xf32> -> vector<32x8xf32>
    %43 = arith.truncf %42 : vector<32x8xf32> to vector<32x8xbf16>
    %c0_17 = arith.constant 0 : index
    %c0_18 = arith.constant 0 : index
    %44 = vector.load %arg16[%c0_17, %c0_18] : memref<32x8xbf16, #tpu.memory_space<vmem>>, vector<32x8xbf16>
    tpu.vector_store %arg16[%c0_17, %c0_18], %43 {strides = array<i32>} : memref<32x8xbf16, #tpu.memory_space<vmem>>, vector<32x8xbf16>,
    %45 = vector.extract_strided_slice %37 {offsets = [0, 64], sizes = [8, 32], strides = [1, 1]} : vector<8x96xf32> to vector<8x32xf32>
    %46 = arith.truncf %45 : vector<8x32xf32> to vector<8x32xbf16>
    %c0_19 = arith.constant 0 : index
    %c0_20 = arith.constant 0 : index
    %47 = vector.load %arg17[%c0_19, %c0_20] : memref<8x32xbf16, #tpu.memory_space<vmem>>, vector<8x32xbf16>
    tpu.vector_store %arg17[%c0_19, %c0_20], %46 {strides = array<i32>} : memref<8x32xbf16, #tpu.memory_space<vmem>>, vector<8x32xbf16>,
    %c0_21 = arith.constant 0 : index
    %c0_22 = arith.constant 0 : index
    %48 = vector.load %arg16[%c0_21, %c0_22] : memref<32x8xbf16, #tpu.memory_space<vmem>>, vector<8x8xbf16>
    %c0_23 = arith.constant 0 : index
    %c0_24 = arith.constant 0 : index
    %49 = vector.load %arg17[%c0_23, %c0_24] : memref<8x32xbf16, #tpu.memory_space<vmem>>, vector<8x8xbf16>
    %c0_25 = arith.constant 0 : index
    %c0_26 = arith.constant 0 : index
    %50 = vector.load %arg15[%c0_25, %c0_26] : memref<8x32xbf16, #tpu.memory_space<vmem>>, vector<8x8xbf16>
    %cst_27 = arith.constant dense<0.000000e+00> : vector<8x8xf32>
    %51 = tpu.matmul %50, %48, %cst_27 {dimension_numbers = #tpu.dot_dimension_numbers<[1], [0], [0], [1], [0, 0, 1, 1], [], []>} : vector<8x8xbf16>, vector<8x8xbf16>, vector<8x8xf32> -> vector<8x8xf32>
    %cst_28 = arith.constant dense<0xFF800000> : vector<8xf32>
    %52 = vector.multi_reduction <maximumf>, %51, %cst_28 [1] : vector<8x8xf32> to vector<8xf32>
    %53 = vector.shape_cast %52 : vector<8xf32> to vector<8x1xf32>
    %54 = vector.broadcast %53 : vector<8x1xf32> to vector<8x8xf32>
    %55 = arith.subf %51, %54 : vector<8x8xf32>
    %56 = math.exp %55 : vector<8x8xf32>
    %cst_29 = arith.constant dense<0.000000e+00> : vector<8xf32>
    %57 = vector.multi_reduction <add>, %56, %cst_29 [1] : vector<8x8xf32> to vector<8xf32>
    %58 = vector.shape_cast %57 : vector<8xf32> to vector<8x1xf32>
    %59 = arith.truncf %56 : vector<8x8xf32> to vector<8x8xbf16>
    %cst_30 = arith.constant dense<0.000000e+00> : vector<8x8xf32>
    %60 = tpu.matmul %59, %49, %cst_30 {dimension_numbers = #tpu.dot_dimension_numbers<[1], [0], [0], [1], [0, 0, 1, 1], [], []>} : vector<8x8xbf16>, vector<8x8xbf16>, vector<8x8xf32> -> vector<8x8xf32>
    %61 = tpu.reciprocal %58 {approx = true} : vector<8x1xf32> -> vector<8x1xf32>
    %62 = vector.broadcast %61 : vector<8x1xf32> to vector<8x8xf32>
    %63 = arith.mulf %60, %62 : vector<8x8xf32>
    %64 = arith.truncf %63 : vector<8x8xf32> to vector<8x8xbf16>
    %c0_31 = arith.constant 0 : index
    %c0_32 = arith.constant 0 : index
    %65 = vector.load %arg18[%c0_31, %c0_32] : memref<8x32xbf16, #tpu.memory_space<vmem>>, vector<8x8xbf16>
    tpu.vector_store %arg18[%c0_31, %c0_32], %64 {strides = array<i32>} : memref<8x32xbf16, #tpu.memory_space<vmem>>, vector<8x8xbf16>,
    %c8 = arith.constant 8 : index
    %c0_33 = arith.constant 0 : index
    %66 = vector.load %arg16[%c8, %c0_33] : memref<32x8xbf16, #tpu.memory_space<vmem>>, vector<8x8xbf16>
    %c0_34 = arith.constant 0 : index
    %c8_35 = arith.constant 8 : index
    %67 = vector.load %arg17[%c0_34, %c8_35] : memref<8x32xbf16, #tpu.memory_space<vmem>>, vector<8x8xbf16>
    %c0_36 = arith.constant 0 : index
    %c8_37 = arith.constant 8 : index
    %68 = vector.load %arg15[%c0_36, %c8_37] : memref<8x32xbf16, #tpu.memory_space<vmem>>, vector<8x8xbf16>
    %cst_38 = arith.constant dense<0.000000e+00> : vector<8x8xf32>
    %69 = tpu.matmul %68, %66, %cst_38 {dimension_numbers = #tpu.dot_dimension_numbers<[1], [0], [0], [1], [0, 0, 1, 1], [], []>} : vector<8x8xbf16>, vector<8x8xbf16>, vector<8x8xf32> -> vector<8x8xf32>
    %cst_39 = arith.constant dense<0xFF800000> : vector<8xf32>
    %70 = vector.multi_reduction <maximumf>, %69, %cst_39 [1] : vector<8x8xf32> to vector<8xf32>
    %71 = vector.shape_cast %70 : vector<8xf32> to vector<8x1xf32>
    %72 = vector.broadcast %71 : vector<8x1xf32> to vector<8x8xf32>
    %73 = arith.subf %69, %72 : vector<8x8xf32>
    %74 = math.exp %73 : vector<8x8xf32>
    %cst_40 = arith.constant dense<0.000000e+00> : vector<8xf32>
    %75 = vector.multi_reduction <add>, %74, %cst_40 [1] : vector<8x8xf32> to vector<8xf32>
    %76 = vector.shape_cast %75 : vector<8xf32> to vector<8x1xf32>
    %77 = arith.truncf %74 : vector<8x8xf32> to vector<8x8xbf16>
    %cst_41 = arith.constant dense<0.000000e+00> : vector<8x8xf32>
    %78 = tpu.matmul %77, %67, %cst_41 {dimension_numbers = #tpu.dot_dimension_numbers<[1], [0], [0], [1], [0, 0, 1, 1], [], []>} : vector<8x8xbf16>, vector<8x8xbf16>, vector<8x8xf32> -> vector<8x8xf32>
    %79 = tpu.reciprocal %76 {approx = true} : vector<8x1xf32> -> vector<8x1xf32>
    %80 = vector.broadcast %79 : vector<8x1xf32> to vector<8x8xf32>
    %81 = arith.mulf %78, %80 : vector<8x8xf32>
    %82 = arith.truncf %81 : vector<8x8xf32> to vector<8x8xbf16>
    %c0_42 = arith.constant 0 : index
    %c8_43 = arith.constant 8 : index
    %83 = vector.load %arg18[%c0_42, %c8_43] : memref<8x32xbf16, #tpu.memory_space<vmem>>, vector<8x8xbf16>
    tpu.vector_store %arg18[%c0_42, %c8_43], %82 {strides = array<i32>} : memref<8x32xbf16, #tpu.memory_space<vmem>>, vector<8x8xbf16>,
    %c16 = arith.constant 16 : index
    %c0_44 = arith.constant 0 : index
    %84 = vector.load %arg16[%c16, %c0_44] : memref<32x8xbf16, #tpu.memory_space<vmem>>, vector<8x8xbf16>
    %c0_45 = arith.constant 0 : index
    %c16_46 = arith.constant 16 : index
    %85 = vector.load %arg17[%c0_45, %c16_46] : memref<8x32xbf16, #tpu.memory_space<vmem>>, vector<8x8xbf16>
    %c0_47 = arith.constant 0 : index
    %c16_48 = arith.constant 16 : index
    %86 = vector.load %arg15[%c0_47, %c16_48] : memref<8x32xbf16, #tpu.memory_space<vmem>>, vector<8x8xbf16>
    %cst_49 = arith.constant dense<0.000000e+00> : vector<8x8xf32>
    %87 = tpu.matmul %86, %84, %cst_49 {dimension_numbers = #tpu.dot_dimension_numbers<[1], [0], [0], [1], [0, 0, 1, 1], [], []>} : vector<8x8xbf16>, vector<8x8xbf16>, vector<8x8xf32> -> vector<8x8xf32>
    %cst_50 = arith.constant dense<0xFF800000> : vector<8xf32>
    %88 = vector.multi_reduction <maximumf>, %87, %cst_50 [1] : vector<8x8xf32> to vector<8xf32>
    %89 = vector.shape_cast %88 : vector<8xf32> to vector<8x1xf32>
    %90 = vector.broadcast %89 : vector<8x1xf32> to vector<8x8xf32>
    %91 = arith.subf %87, %90 : vector<8x8xf32>
    %92 = math.exp %91 : vector<8x8xf32>
    %cst_51 = arith.constant dense<0.000000e+00> : vector<8xf32>
    %93 = vector.multi_reduction <add>, %92, %cst_51 [1] : vector<8x8xf32> to vector<8xf32>
    %94 = vector.shape_cast %93 : vector<8xf32> to vector<8x1xf32>
    %95 = arith.truncf %92 : vector<8x8xf32> to vector<8x8xbf16>
    %cst_52 = arith.constant dense<0.000000e+00> : vector<8x8xf32>
    %96 = tpu.matmul %95, %85, %cst_52 {dimension_numbers = #tpu.dot_dimension_numbers<[1], [0], [0], [1], [0, 0, 1, 1], [], []>} : vector<8x8xbf16>, vector<8x8xbf16>, vector<8x8xf32> -> vector<8x8xf32>
    %97 = tpu.reciprocal %94 {approx = true} : vector<8x1xf32> -> vector<8x1xf32>
    %98 = vector.broadcast %97 : vector<8x1xf32> to vector<8x8xf32>
    %99 = arith.mulf %96, %98 : vector<8x8xf32>
    %100 = arith.truncf %99 : vector<8x8xf32> to vector<8x8xbf16>
    %c0_53 = arith.constant 0 : index
    %c16_54 = arith.constant 16 : index
    %101 = vector.load %arg18[%c0_53, %c16_54] : memref<8x32xbf16, #tpu.memory_space<vmem>>, vector<8x8xbf16>
    tpu.vector_store %arg18[%c0_53, %c16_54], %100 {strides = array<i32>} : memref<8x32xbf16, #tpu.memory_space<vmem>>, vector<8x8xbf16>,
    %c24 = arith.constant 24 : index
    %c0_55 = arith.constant 0 : index
    %102 = vector.load %arg16[%c24, %c0_55] : memref<32x8xbf16, #tpu.memory_space<vmem>>, vector<8x8xbf16>
    %c0_56 = arith.constant 0 : index
    %c24_57 = arith.constant 24 : index
    %103 = vector.load %arg17[%c0_56, %c24_57] : memref<8x32xbf16, #tpu.memory_space<vmem>>, vector<8x8xbf16>
    %c0_58 = arith.constant 0 : index
    %c24_59 = arith.constant 24 : index
    %104 = vector.load %arg15[%c0_58, %c24_59] : memref<8x32xbf16, #tpu.memory_space<vmem>>, vector<8x8xbf16>
    %cst_60 = arith.constant dense<0.000000e+00> : vector<8x8xf32>
    %105 = tpu.matmul %104, %102, %cst_60 {dimension_numbers = #tpu.dot_dimension_numbers<[1], [0], [0], [1], [0, 0, 1, 1], [], []>} : vector<8x8xbf16>, vector<8x8xbf16>, vector<8x8xf32> -> vector<8x8xf32>
    %cst_61 = arith.constant dense<0xFF800000> : vector<8xf32>
    %106 = vector.multi_reduction <maximumf>, %105, %cst_61 [1] : vector<8x8xf32> to vector<8xf32>
    %107 = vector.shape_cast %106 : vector<8xf32> to vector<8x1xf32>
    %108 = vector.broadcast %107 : vector<8x1xf32> to vector<8x8xf32>
    %109 = arith.subf %105, %108 : vector<8x8xf32>
    %110 = math.exp %109 : vector<8x8xf32>
    %cst_62 = arith.constant dense<0.000000e+00> : vector<8xf32>
    %111 = vector.multi_reduction <add>, %110, %cst_62 [1] : vector<8x8xf32> to vector<8xf32>
    %112 = vector.shape_cast %111 : vector<8xf32> to vector<8x1xf32>
    %113 = arith.truncf %110 : vector<8x8xf32> to vector<8x8xbf16>
    %cst_63 = arith.constant dense<0.000000e+00> : vector<8x8xf32>
    %114 = tpu.matmul %113, %103, %cst_63 {dimension_numbers = #tpu.dot_dimension_numbers<[1], [0], [0], [1], [0, 0, 1, 1], [], []>} : vector<8x8xbf16>, vector<8x8xbf16>, vector<8x8xf32> -> vector<8x8xf32>
    %115 = tpu.reciprocal %112 {approx = true} : vector<8x1xf32> -> vector<8x1xf32>
    %116 = vector.broadcast %115 : vector<8x1xf32> to vector<8x8xf32>
    %117 = arith.mulf %114, %116 : vector<8x8xf32>
    %118 = arith.truncf %117 : vector<8x8xf32> to vector<8x8xbf16>
    %c0_64 = arith.constant 0 : index
    %c24_65 = arith.constant 24 : index
    %119 = vector.load %arg18[%c0_64, %c24_65] : memref<8x32xbf16, #tpu.memory_space<vmem>>, vector<8x8xbf16>
    tpu.vector_store %arg18[%c0_64, %c24_65], %118 {strides = array<i32>} : memref<8x32xbf16, #tpu.memory_space<vmem>>, vector<8x8xbf16>,
    %c0_66 = arith.constant 0 : index
    %c0_67 = arith.constant 0 : index
    %120 = vector.load %arg18[%c0_66, %c0_67] : memref<8x32xbf16, #tpu.memory_space<vmem>>, vector<8x32xbf16>
    %c0_68 = arith.constant 0 : index
    %c0_69 = arith.constant 0 : index
    %121 = vector.load %arg6[%c0_68, %c0_69] : memref<32x32xbf16, #tpu.memory_space<vmem>>, vector<32x32xbf16>
    %cst_70 = arith.constant dense<0.000000e+00> : vector<8x32xf32>
    %122 = tpu.matmul %120, %121, %cst_70 {dimension_numbers = #tpu.dot_dimension_numbers<[1], [0], [0], [1], [0, 0, 1, 1], [], []>} : vector<8x32xbf16>, vector<32x32xbf16>, vector<8x32xf32> -> vector<8x32xf32>
    %123 = arith.addf %1, %122 : vector<8x32xf32>
    %c0_71 = arith.constant 0 : index
    %c0_72 = arith.constant 0 : index
    %124 = vector.load %arg7[%c0_71, %c0_72] : memref<1x32xf32, #tpu.memory_space<vmem>>, vector<1x32xf32>
    %125 = vector.shape_cast %124 : vector<1x32xf32> to vector<32xf32>
    %126 = vector.shape_cast %125 : vector<32xf32> to vector<1x32xf32>
    %127 = vector.broadcast %126 : vector<1x32xf32> to vector<8x32xf32>
    %128 = arith.addf %123, %127 : vector<8x32xf32>
    %cst_73 = arith.constant dense<0.000000e+00> : vector<8xf32>
    %129 = vector.multi_reduction <add>, %128, %cst_73 [1] : vector<8x32xf32> to vector<8xf32>
    %130 = vector.shape_cast %129 : vector<8xf32> to vector<8x1xf32>
    %cst_74 = arith.constant 3.200000e+01 : f32
    %131 = vector.broadcast %cst_74 : f32 to vector<8x1xf32>
    %132 = arith.divf %130, %131 : vector<8x1xf32>
    %133 = vector.broadcast %132 : vector<8x1xf32> to vector<8x32xf32>
    %134 = arith.subf %128, %133 : vector<8x32xf32>
    %135 = arith.mulf %134, %134 : vector<8x32xf32>
    %cst_75 = arith.constant dense<0.000000e+00> : vector<8xf32>
    %136 = vector.multi_reduction <add>, %135, %cst_75 [1] : vector<8x32xf32> to vector<8xf32>
    %137 = vector.shape_cast %136 : vector<8xf32> to vector<8x1xf32>
    %cst_76 = arith.constant 3.200000e+01 : f32
    %138 = vector.broadcast %cst_76 : f32 to vector<8x1xf32>
    %139 = arith.divf %137, %138 : vector<8x1xf32>
    %140 = vector.broadcast %132 : vector<8x1xf32> to vector<8x32xf32>
    %141 = arith.subf %128, %140 : vector<8x32xf32>
    %cst_77 = arith.constant 9.99999974E-6 : f32
    %142 = vector.broadcast %cst_77 : f32 to vector<8x1xf32>
    %143 = arith.addf %139, %142 : vector<8x1xf32>
    %144 = math.rsqrt %143 : vector<8x1xf32>
    %145 = vector.broadcast %144 : vector<8x1xf32> to vector<8x32xf32>
    %146 = arith.mulf %141, %145 : vector<8x32xf32>
    %c0_78 = arith.constant 0 : index
    %c0_79 = arith.constant 0 : index
    %147 = vector.load %arg8[%c0_78, %c0_79] : memref<1x32xf32, #tpu.memory_space<vmem>>, vector<1x32xf32>
    %148 = vector.shape_cast %147 : vector<1x32xf32> to vector<32xf32>
    %149 = vector.shape_cast %148 : vector<32xf32> to vector<1x32xf32>
    %150 = vector.broadcast %149 : vector<1x32xf32> to vector<8x32xf32>
    %151 = arith.mulf %146, %150 : vector<8x32xf32>
    %c0_80 = arith.constant 0 : index
    %c0_81 = arith.constant 0 : index
    %152 = vector.load %arg9[%c0_80, %c0_81] : memref<1x32xf32, #tpu.memory_space<vmem>>, vector<1x32xf32>
    %153 = vector.shape_cast %152 : vector<1x32xf32> to vector<32xf32>
    %154 = vector.shape_cast %153 : vector<32xf32> to vector<1x32xf32>
    %155 = vector.broadcast %154 : vector<1x32xf32> to vector<8x32xf32>
    %156 = arith.addf %151, %155 : vector<8x32xf32>
    %157 = arith.truncf %156 : vector<8x32xf32> to vector<8x32xbf16>
    %c0_82 = arith.constant 0 : index
    %c0_83 = arith.constant 0 : index
    %158 = vector.load %arg10[%c0_82, %c0_83] : memref<32x128xbf16, #tpu.memory_space<vmem>>, vector<32x128xbf16>
    %cst_84 = arith.constant dense<0.000000e+00> : vector<8x128xf32>
    %159 = tpu.matmul %157, %158, %cst_84 {dimension_numbers = #tpu.dot_dimension_numbers<[1], [0], [0], [1], [0, 0, 1, 1], [], []>} : vector<8x32xbf16>, vector<32x128xbf16>, vector<8x128xf32> -> vector<8x128xf32>
    %c0_85 = arith.constant 0 : index
    %c0_86 = arith.constant 0 : index
    %160 = vector.load %arg11[%c0_85, %c0_86] : memref<1x128xf32, #tpu.memory_space<vmem>>, vector<1x128xf32>
    %161 = vector.shape_cast %160 : vector<1x128xf32> to vector<128xf32>
    %162 = vector.shape_cast %161 : vector<128xf32> to vector<1x128xf32>
    %163 = vector.broadcast %162 : vector<1x128xf32> to vector<8x128xf32>
    %164 = arith.addf %159, %163 : vector<8x128xf32>
    %cst_87 = arith.constant 1.702000e+00 : f32
    %165 = vector.broadcast %cst_87 : f32 to vector<8x128xf32>
    %166 = arith.mulf %165, %164 : vector<8x128xf32>
    %167 = arith.negf %166 : vector<8x128xf32>
    %168 = math.exp %167 : vector<8x128xf32>
    %cst_88 = arith.constant 1.000000e+00 : f32
    %169 = vector.broadcast %cst_88 : f32 to vector<8x128xf32>
    %170 = arith.addf %169, %168 : vector<8x128xf32>
    %171 = arith.divf %169, %170 : vector<8x128xf32>
    %172 = arith.mulf %164, %171 : vector<8x128xf32>
    %173 = arith.truncf %172 : vector<8x128xf32> to vector<8x128xbf16>
    %c0_89 = arith.constant 0 : index
    %c0_90 = arith.constant 0 : index
    %174 = vector.load %arg12[%c0_89, %c0_90] : memref<128x32xbf16, #tpu.memory_space<vmem>>, vector<128x32xbf16>
    %cst_91 = arith.constant dense<0.000000e+00> : vector<8x32xf32>
    %175 = tpu.matmul %173, %174, %cst_91 {dimension_numbers = #tpu.dot_dimension_numbers<[1], [0], [0], [1], [0, 0, 1, 1], [], []>} : vector<8x128xbf16>, vector<128x32xbf16>, vector<8x32xf32> -> vector<8x32xf32>
    %c0_92 = arith.constant 0 : index
    %c0_93 = arith.constant 0 : index
    %176 = vector.load %arg13[%c0_92, %c0_93] : memref<1x32xf32, #tpu.memory_space<vmem>>, vector<1x32xf32>
    %177 = vector.shape_cast %176 : vector<1x32xf32> to vector<32xf32>
    %178 = vector.shape_cast %177 : vector<32xf32> to vector<1x32xf32>
    %179 = vector.broadcast %178 : vector<1x32xf32> to vector<8x32xf32>
    %180 = arith.addf %175, %179 : vector<8x32xf32>
    %181 = arith.addf %128, %180 : vector<8x32xf32>
    %c0_94 = arith.constant 0 : index
    %c0_95 = arith.constant 0 : index
    %c0_96 = arith.constant 0 : index
    %182 = vector.load %arg14[%c0_94, %c0_95, %c0_96] : memref<1x8x32xf32, #tpu.memory_space<vmem>>, vector<1x8x32xf32>
    %183 = vector.shape_cast %182 : vector<1x8x32xf32> to vector<8x32xf32>
    %184 = vector.shape_cast %181 : vector<8x32xf32> to vector<1x8x32xf32>
    tpu.vector_store %arg14[%c0_94, %c0_95, %c0_96], %184 {strides = array<i32>} : memref<1x8x32xf32, #tpu.memory_space<vmem>>, vector<1x8x32xf32>,
    return
  }
  func.func @transform_0(%arg0: i32) -> (i32, i32, i32) {
    %c0_i32 = arith.constant 0 : i32
    %c0_i32_0 = arith.constant 0 : i32
    %c0_i32_1 = arith.constant 0 : i32
    return %arg0, %c0_i32, %c0_i32_0 : i32, i32, i32
  }
  func.func @transform_1(%arg0: i32) -> (i32, i32) {
    %c0_i32 = arith.constant 0 : i32
    %c0_i32_0 = arith.constant 0 : i32
    %c0_i32_1 = arith.constant 0 : i32
    return %c0_i32, %c0_i32_0 : i32, i32
  }
  func.func @transform_2(%arg0: i32) -> (i32, i32) {
    %c0_i32 = arith.constant 0 : i32
    %c0_i32_0 = arith.constant 0 : i32
    %c0_i32_1 = arith.constant 0 : i32
    return %c0_i32, %c0_i32_0 : i32, i32
  }
  func.func @transform_3(%arg0: i32) -> (i32, i32) {
    %c0_i32 = arith.constant 0 : i32
    %c0_i32_0 = arith.constant 0 : i32
    %c0_i32_1 = arith.constant 0 : i32
    return %c0_i32, %c0_i32_0 : i32, i32
  }
  func.func @transform_4(%arg0: i32) -> (i32, i32) {
    %c0_i32 = arith.constant 0 : i32
    %c0_i32_0 = arith.constant 0 : i32
    %c0_i32_1 = arith.constant 0 : i32
    return %c0_i32, %c0_i32_0 : i32, i32
  }
  func.func @transform_5(%arg0: i32) -> (i32, i32) {
    %c0_i32 = arith.constant 0 : i32
    %c0_i32_0 = arith.constant 0 : i32
    %c0_i32_1 = arith.constant 0 : i32
    return %c0_i32, %c0_i32_0 : i32, i32
  }
  func.func @transform_6(%arg0: i32) -> (i32, i32) {
    %c0_i32 = arith.constant 0 : i32
    %c0_i32_0 = arith.constant 0 : i32
    %c0_i32_1 = arith.constant 0 : i32
    return %c0_i32, %c0_i32_0 : i32, i32
  }
  func.func @transform_7(%arg0: i32) -> (i32, i32) {
    %c0_i32 = arith.constant 0 : i32
    %c0_i32_0 = arith.constant 0 : i32
    %c0_i32_1 = arith.constant 0 : i32
    return %c0_i32, %c0_i32_0 : i32, i32
  }
  func.func @transform_8(%arg0: i32) -> (i32, i32) {
    %c0_i32 = arith.constant 0 : i32
    %c0_i32_0 = arith.constant 0 : i32
    %c0_i32_1 = arith.constant 0 : i32
    return %c0_i32, %c0_i32_0 : i32, i32
  }
  func.func @transform_9(%arg0: i32) -> (i32, i32) {
    %c0_i32 = arith.constant 0 : i32
    %c0_i32_0 = arith.constant 0 : i32
    %c0_i32_1 = arith.constant 0 : i32
    return %c0_i32, %c0_i32_0 : i32, i32
  }
  func.func @transform_10(%arg0: i32) -> (i32, i32) {
    %c0_i32 = arith.constant 0 : i32
    %c0_i32_0 = arith.constant 0 : i32
    %c0_i32_1 = arith.constant 0 : i32
    return %c0_i32, %c0_i32_0 : i32, i32
  }
  func.func @transform_11(%arg0: i32) -> (i32, i32) {
    %c0_i32 = arith.constant 0 : i32
    %c0_i32_0 = arith.constant 0 : i32
    %c0_i32_1 = arith.constant 0 : i32
    return %c0_i32, %c0_i32_0 : i32, i32
  }
  func.func @transform_12(%arg0: i32) -> (i32, i32) {
    %c0_i32 = arith.constant 0 : i32
    %c0_i32_0 = arith.constant 0 : i32
    %c0_i32_1 = arith.constant 0 : i32
    return %c0_i32, %c0_i32_0 : i32, i32
  }
  func.func @transform_13(%arg0: i32) -> (i32, i32, i32) {
    %c0_i32 = arith.constant 0 : i32
    %c0_i32_0 = arith.constant 0 : i32
    %c0_i32_1 = arith.constant 0 : i32
    return %arg0, %c0_i32, %c0_i32_0 : i32, i32, i32
  }
}

module attributes {stable_mosaic.version = 11 : i64} {
  func.func @prenorm_attention_kernel(%arg0: i32, %arg1: memref<1x8x32xf32, #tpu.memory_space<vmem>>, %arg2: memref<1x32xf32, #tpu.memory_space<vmem>>, %arg3: memref<1x32xf32, #tpu.memory_space<vmem>>, %arg4: memref<32x96xbf16, #tpu.memory_space<vmem>>, %arg5: memref<1x96xf32, #tpu.memory_space<vmem>>, %arg6: memref<32x32xbf16, #tpu.memory_space<vmem>>, %arg7: memref<1x32xf32, #tpu.memory_space<vmem>>, %arg8: memref<1x32xf32, #tpu.memory_space<vmem>>, %arg9: memref<1x32xf32, #tpu.memory_space<vmem>>, %arg10: memref<32x128xbf16, #tpu.memory_space<vmem>>, %arg11: memref<1x128xf32, #tpu.memory_space<vmem>>, %arg12: memref<128x32xbf16, #tpu.memory_space<vmem>>, %arg13: memref<1x32xf32, #tpu.memory_space<vmem>>, %arg14: memref<1x8x32xf32, #tpu.memory_space<vmem>>, %arg15: memref<8x32xbf16, #tpu.memory_space<vmem>>, %arg16: memref<32x8xbf16, #tpu.memory_space<vmem>>, %arg17: memref<8x32xbf16, #tpu.memory_space<vmem>>, %arg18: memref<8x32xbf16, #tpu.memory_space<vmem>>) attributes {dimension_semantics = [#tpu.dimension_semantics<parallel>], iteration_bounds = array<i64: 2>, scalar_prefetch = 0 : i64, scratch_operands = 4 : i64, tpu.core_type = #tpu.core_type<tc>, window_params = [{transform_indices = @transform_0, window_bounds = array<i64: 1, 8, 32>}, {pipeline_mode = #tpu.pipeline_mode<synchronous>, transform_indices = @transform_1, window_bounds = array<i64: 1, 32>}, {pipeline_mode = #tpu.pipeline_mode<synchronous>, transform_indices = @transform_2, window_bounds = array<i64: 1, 32>}, {pipeline_mode = #tpu.pipeline_mode<synchronous>, transform_indices = @transform_3, window_bounds = array<i64: 32, 96>}, {pipeline_mode = #tpu.pipeline_mode<synchronous>, transform_indices = @transform_4, window_bounds = array<i64: 1, 96>}, {pipeline_mode = #tpu.pipeline_mode<synchronous>, transform_indices = @transform_5, window_bounds = array<i64: 32, 32>}, {pipeline_mode = #tpu.pipeline_mode<synchronous>, transform_indices = @transform_6, window_bounds = array<i64: 1, 32>}, {pipeline_mode = #tpu.pipeline_mode<synchronous>, transform_indices = @transform_7, window_bounds = array<i64: 1, 32>}, {pipeline_mode = #tpu.pipeline_mode<synchronous>, transform_indices = @transform_8, window_bounds = array<i64: 1, 32>}, {pipeline_mode = #tpu.pipeline_mode<synchronous>, transform_indices = @transform_9, window_bounds = array<i64: 32, 128>}, {pipeline_mode = #tpu.pipeline_mode<synchronous>, transform_indices = @transform_10, window_bounds = array<i64: 1, 128>}, {pipeline_mode = #tpu.pipeline_mode<synchronous>, transform_indices = @transform_11, window_bounds = array<i64: 128, 32>}, {pipeline_mode = #tpu.pipeline_mode<synchronous>, transform_indices = @transform_12, window_bounds = array<i64: 1, 32>}, {transform_indices = @transform_13, window_bounds = array<i64: 1, 8, 32>}]} {
    %c0 = arith.constant 0 : index
    %c0_0 = arith.constant 0 : index
    %c0_1 = arith.constant 0 : index
    %0 = vector.load %arg1[%c0, %c0_0, %c0_1] : memref<1x8x32xf32, #tpu.memory_space<vmem>>, vector<1x8x32xf32>
    %1 = vector.shape_cast %0 : vector<1x8x32xf32> to vector<8x32xf32>
    %cst = arith.constant dense<0.000000e+00> : vector<8xf32>
    %2 = vector.multi_reduction <add>, %1, %cst [1] : vector<8x32xf32> to vector<8xf32>
    %3 = vector.shape_cast %2 : vector<8xf32> to vector<8x1xf32>
    %cst_2 = arith.constant 3.200000e+01 : f32
    %4 = vector.broadcast %cst_2 : f32 to vector<8x1xf32>
    %5 = arith.divf %3, %4 : vector<8x1xf32>
    %6 = vector.broadcast %5 : vector<8x1xf32> to vector<8x32xf32>
    %7 = arith.subf %1, %6 : vector<8x32xf32>
    %8 = arith.mulf %7, %7 : vector<8x32xf32>
    %cst_3 = arith.constant dense<0.000000e+00> : vector<8xf32>
    %9 = vector.multi_reduction <add>, %8, %cst_3 [1] : vector<8x32xf32> to vector<8xf32>
    %10 = vector.shape_cast %9 : vector<8xf32> to vector<8x1xf32>
    %cst_4 = arith.constant 3.200000e+01 : f32
    %11 = vector.broadcast %cst_4 : f32 to vector<8x1xf32>
    %12 = arith.divf %10, %11 : vector<8x1xf32>
    %13 = vector.broadcast %5 : vector<8x1xf32> to vector<8x32xf32>
    %14 = arith.subf %1, %13 : vector<8x32xf32>
    %cst_5 = arith.constant 9.99999974E-6 : f32
    %15 = vector.broadcast %cst_5 : f32 to vector<8x1xf32>
    %16 = arith.addf %12, %15 : vector<8x1xf32>
    %17 = math.rsqrt %16 : vector<8x1xf32>
    %18 = vector.broadcast %17 : vector<8x1xf32> to vector<8x32xf32>
    %19 = arith.mulf %14, %18 : vector<8x32xf32>
    %c0_6 = arith.constant 0 : index
    %c0_7 = arith.constant 0 : index
    %20 = vector.load %arg2[%c0_6, %c0_7] : memref<1x32xf32, #tpu.memory_space<vmem>>, vector<1x32xf32>
    %21 = vector.shape_cast %20 : vector<1x32xf32> to vector<32xf32>
    %22 = vector.shape_cast %21 : vector<32xf32> to vector<1x32xf32>
    %23 = vector.broadcast %22 : vector<1x32xf32> to vector<8x32xf32>
    %24 = arith.mulf %19, %23 : vector<8x32xf32>
    %c0_8 = arith.constant 0 : index
    %c0_9 = arith.constant 0 : index
    %25 = vector.load %arg3[%c0_8, %c0_9] : memref<1x32xf32, #tpu.memory_space<vmem>>, vector<1x32xf32>
    %26 = vector.shape_cast %25 : vector<1x32xf32> to vector<32xf32>
    %27 = vector.shape_cast %26 : vector<32xf32> to vector<1x32xf32>
    %28 = vector.broadcast %27 : vector<1x32xf32> to vector<8x32xf32>
    %29 = arith.addf %24, %28 : vector<8x32xf32>
    %30 = arith.truncf %29 : vector<8x32xf32> to vector<8x32xbf16>
    %c0_10 = arith.constant 0 : index
    %c0_11 = arith.constant 0 : index
    %31 = vector.load %arg4[%c0_10, %c0_11] : memref<32x96xbf16, #tpu.memory_space<vmem>>, vector<32x96xbf16>
    %cst_12 = arith.constant dense<0.000000e+00> : vector<8x96xf32>
    %32 = tpu.matmul %30, %31, %cst_12 {dimension_numbers = #tpu.dot_dimension_numbers<[1], [0], [0], [1], [0, 0, 1, 1], [], []>} : vector<8x32xbf16>, vector<32x96xbf16>, vector<8x96xf32> -> vector<8x96xf32>
    %c0_13 = arith.constant 0 : index
    %c0_14 = arith.constant 0 : index
    %33 = vector.load %arg5[%c0_13, %c0_14] : memref<1x96xf32, #tpu.memory_space<vmem>>, vector<1x96xf32>
    %34 = vector.shape_cast %33 : vector<1x96xf32> to vector<96xf32>
    %35 = vector.shape_cast %34 : vector<96xf32> to vector<1x96xf32>
    %36 = vector.broadcast %35 : vector<1x96xf32> to vector<8x96xf32>
    %37 = arith.addf %32, %36 : vector<8x96xf32>
    %38 = vector.extract_strided_slice %37 {offsets = [0, 0], sizes = [8, 32], strides = [1, 1]} : vector<8x96xf32> to vector<8x32xf32>
    %39 = arith.truncf %38 : vector<8x32xf32> to vector<8x32xbf16>
    %c0_15 = arith.constant 0 : index
    %c0_16 = arith.constant 0 : index
    %40 = vector.load %arg15[%c0_15, %c0_16] : memref<8x32xbf16, #tpu.memory_space<vmem>>, vector<8x32xbf16>
    tpu.vector_store %arg15[%c0_15, %c0_16], %39 {strides = array<i32>} : memref<8x32xbf16, #tpu.memory_space<vmem>>, vector<8x32xbf16>,
    %41 = vector.extract_strided_slice %37 {offsets = [0, 32], sizes = [8, 32], strides = [1, 1]} : vector<8x96xf32> to vector<8x32xf32>
    %42 = tpu.transpose %41, [1, 0] : vector<8x32xf32> -> vector<32x8xf32>
    %43 = arith.truncf %42 : vector<32x8xf32> to vector<32x8xbf16>
    %c0_17 = arith.constant 0 : index
    %c0_18 = arith.constant 0 : index
    %44 = vector.load %arg16[%c0_17, %c0_18] : memref<32x8xbf16, #tpu.memory_space<vmem>>, vector<32x8xbf16>
    tpu.vector_store %arg16[%c0_17, %c0_18], %43 {strides = array<i32>} : memref<32x8xbf16, #tpu.memory_space<vmem>>, vector<32x8xbf16>,
    %45 = vector.extract_strided_slice %37 {offsets = [0, 64], sizes = [8, 32], strides = [1, 1]} : vector<8x96xf32> to vector<8x32xf32>
    %46 = arith.truncf %45 : vector<8x32xf32> to vector<8x32xbf16>
    %c0_19 = arith.constant 0 : index
    %c0_20 = arith.constant 0 : index
    %47 = vector.load %arg17[%c0_19, %c0_20] : memref<8x32xbf16, #tpu.memory_space<vmem>>, vector<8x32xbf16>
    tpu.vector_store %arg17[%c0_19, %c0_20], %46 {strides = array<i32>} : memref<8x32xbf16, #tpu.memory_space<vmem>>, vector<8x32xbf16>,
    %c0_21 = arith.constant 0 : index
    %c0_22 = arith.constant 0 : index
    %48 = vector.load %arg16[%c0_21, %c0_22] : memref<32x8xbf16, #tpu.memory_space<vmem>>, vector<8x8xbf16>
    %c0_23 = arith.constant 0 : index
    %c0_24 = arith.constant 0 : index
    %49 = vector.load %arg17[%c0_23, %c0_24] : memref<8x32xbf16, #tpu.memory_space<vmem>>, vector<8x8xbf16>
    %c0_25 = arith.constant 0 : index
    %c0_26 = arith.constant 0 : index
    %50 = vector.load %arg15[%c0_25, %c0_26] : memref<8x32xbf16, #tpu.memory_space<vmem>>, vector<8x8xbf16>
    %cst_27 = arith.constant dense<0.000000e+00> : vector<8x8xf32>
    %51 = tpu.matmul %50, %48, %cst_27 {dimension_numbers = #tpu.dot_dimension_numbers<[1], [0], [0], [1], [0, 0, 1, 1], [], []>} : vector<8x8xbf16>, vector<8x8xbf16>, vector<8x8xf32> -> vector<8x8xf32>
    %cst_28 = arith.constant dense<0xFF800000> : vector<8xf32>
    %52 = vector.multi_reduction <maximumf>, %51, %cst_28 [1] : vector<8x8xf32> to vector<8xf32>
    %53 = vector.shape_cast %52 : vector<8xf32> to vector<8x1xf32>
    %54 = vector.broadcast %53 : vector<8x1xf32> to vector<8x8xf32>
    %55 = arith.subf %51, %54 : vector<8x8xf32>
    %56 = math.exp %55 : vector<8x8xf32>
    %cst_29 = arith.constant dense<0.000000e+00> : vector<8xf32>
    %57 = vector.multi_reduction <add>, %56, %cst_29 [1] : vector<8x8xf32> to vector<8xf32>
    %58 = vector.shape_cast %57 : vector<8xf32> to vector<8x1xf32>
    %59 = arith.truncf %56 : vector<8x8xf32> to vector<8x8xbf16>
    %cst_30 = arith.constant dense<0.000000e+00> : vector<8x8xf32>
    %60 = tpu.matmul %59, %49, %cst_30 {dimension_numbers = #tpu.dot_dimension_numbers<[1], [0], [0], [1], [0, 0, 1, 1], [], []>} : vector<8x8xbf16>, vector<8x8xbf16>, vector<8x8xf32> -> vector<8x8xf32>
    %61 = tpu.reciprocal %58 {approx = true} : vector<8x1xf32> -> vector<8x1xf32>
    %62 = vector.broadcast %61 : vector<8x1xf32> to vector<8x8xf32>
    %63 = arith.mulf %60, %62 : vector<8x8xf32>
    %64 = arith.truncf %63 : vector<8x8xf32> to vector<8x8xbf16>
    %c0_31 = arith.constant 0 : index
    %c0_32 = arith.constant 0 : index
    %65 = vector.load %arg18[%c0_31, %c0_32] : memref<8x32xbf16, #tpu.memory_space<vmem>>, vector<8x8xbf16>
    tpu.vector_store %arg18[%c0_31, %c0_32], %64 {strides = array<i32>} : memref<8x32xbf16, #tpu.memory_space<vmem>>, vector<8x8xbf16>,
    %c8 = arith.constant 8 : index
    %c0_33 = arith.constant 0 : index
    %66 = vector.load %arg16[%c8, %c0_33] : memref<32x8xbf16, #tpu.memory_space<vmem>>, vector<8x8xbf16>
    %c0_34 = arith.constant 0 : index
    %c8_35 = arith.constant 8 : index
    %67 = vector.load %arg17[%c0_34, %c8_35] : memref<8x32xbf16, #tpu.memory_space<vmem>>, vector<8x8xbf16>
    %c0_36 = arith.constant 0 : index
    %c8_37 = arith.constant 8 : index
    %68 = vector.load %arg15[%c0_36, %c8_37] : memref<8x32xbf16, #tpu.memory_space<vmem>>, vector<8x8xbf16>
    %cst_38 = arith.constant dense<0.000000e+00> : vector<8x8xf32>
    %69 = tpu.matmul %68, %66, %cst_38 {dimension_numbers = #tpu.dot_dimension_numbers<[1], [0], [0], [1], [0, 0, 1, 1], [], []>} : vector<8x8xbf16>, vector<8x8xbf16>, vector<8x8xf32> -> vector<8x8xf32>
    %cst_39 = arith.constant dense<0xFF800000> : vector<8xf32>
    %70 = vector.multi_reduction <maximumf>, %69, %cst_39 [1] : vector<8x8xf32> to vector<8xf32>
    %71 = vector.shape_cast %70 : vector<8xf32> to vector<8x1xf32>
    %72 = vector.broadcast %71 : vector<8x1xf32> to vector<8x8xf32>
    %73 = arith.subf %69, %72 : vector<8x8xf32>
    %74 = math.exp %73 : vector<8x8xf32>
    %cst_40 = arith.constant dense<0.000000e+00> : vector<8xf32>
    %75 = vector.multi_reduction <add>, %74, %cst_40 [1] : vector<8x8xf32> to vector<8xf32>
    %76 = vector.shape_cast %75 : vector<8xf32> to vector<8x1xf32>
    %77 = arith.truncf %74 : vector<8x8xf32> to vector<8x8xbf16>
    %cst_41 = arith.constant dense<0.000000e+00> : vector<8x8xf32>
    %78 = tpu.matmul %77, %67, %cst_41 {dimension_numbers = #tpu.dot_dimension_numbers<[1], [0], [0], [1], [0, 0, 1, 1], [], []>} : vector<8x8xbf16>, vector<8x8xbf16>, vector<8x8xf32> -> vector<8x8xf32>
    %79 = tpu.reciprocal %76 {approx = true} : vector<8x1xf32> -> vector<8x1xf32>
    %80 = vector.broadcast %79 : vector<8x1xf32> to vector<8x8xf32>
    %81 = arith.mulf %78, %80 : vector<8x8xf32>
    %82 = arith.truncf %81 : vector<8x8xf32> to vector<8x8xbf16>
    %c0_42 = arith.constant 0 : index
    %c8_43 = arith.constant 8 : index
    %83 = vector.load %arg18[%c0_42, %c8_43] : memref<8x32xbf16, #tpu.memory_space<vmem>>, vector<8x8xbf16>
    tpu.vector_store %arg18[%c0_42, %c8_43], %82 {strides = array<i32>} : memref<8x32xbf16, #tpu.memory_space<vmem>>, vector<8x8xbf16>,
    %c16 = arith.constant 16 : index
    %c0_44 = arith.constant 0 : index
    %84 = vector.load %arg16[%c16, %c0_44] : memref<32x8xbf16, #tpu.memory_space<vmem>>, vector<8x8xbf16>
    %c0_45 = arith.constant 0 : index
    %c16_46 = arith.constant 16 : index
    %85 = vector.load %arg17[%c0_45, %c16_46] : memref<8x32xbf16, #tpu.memory_space<vmem>>, vector<8x8xbf16>
    %c0_47 = arith.constant 0 : index
    %c16_48 = arith.constant 16 : index
    %86 = vector.load %arg15[%c0_47, %c16_48] : memref<8x32xbf16, #tpu.memory_space<vmem>>, vector<8x8xbf16>
    %cst_49 = arith.constant dense<0.000000e+00> : vector<8x8xf32>
    %87 = tpu.matmul %86, %84, %cst_49 {dimension_numbers = #tpu.dot_dimension_numbers<[1], [0], [0], [1], [0, 0, 1, 1], [], []>} : vector<8x8xbf16>, vector<8x8xbf16>, vector<8x8xf32> -> vector<8x8xf32>
    %cst_50 = arith.constant dense<0xFF800000> : vector<8xf32>
    %88 = vector.multi_reduction <maximumf>, %87, %cst_50 [1] : vector<8x8xf32> to vector<8xf32>
    %89 = vector.shape_cast %88 : vector<8xf32> to vector<8x1xf32>
    %90 = vector.broadcast %89 : vector<8x1xf32> to vector<8x8xf32>
    %91 = arith.subf %87, %90 : vector<8x8xf32>
    %92 = math.exp %91 : vector<8x8xf32>
    %cst_51 = arith.constant dense<0.000000e+00> : vector<8xf32>
    %93 = vector.multi_reduction <add>, %92, %cst_51 [1] : vector<8x8xf32> to vector<8xf32>
    %94 = vector.shape_cast %93 : vector<8xf32> to vector<8x1xf32>
    %95 = arith.truncf %92 : vector<8x8xf32> to vector<8x8xbf16>
    %cst_52 = arith.constant dense<0.000000e+00> : vector<8x8xf32>
    %96 = tpu.matmul %95, %85, %cst_52 {dimension_numbers = #tpu.dot_dimension_numbers<[1], [0], [0], [1], [0, 0, 1, 1], [], []>} : vector<8x8xbf16>, vector<8x8xbf16>, vector<8x8xf32> -> vector<8x8xf32>
    %97 = tpu.reciprocal %94 {approx = true} : vector<8x1xf32> -> vector<8x1xf32>
    %98 = vector.broadcast %97 : vector<8x1xf32> to vector<8x8xf32>
    %99 = arith.mulf %96, %98 : vector<8x8xf32>
    %100 = arith.truncf %99 : vector<8x8xf32> to vector<8x8xbf16>
    %c0_53 = arith.constant 0 : index
    %c16_54 = arith.constant 16 : index
    %101 = vector.load %arg18[%c0_53, %c16_54] : memref<8x32xbf16, #tpu.memory_space<vmem>>, vector<8x8xbf16>
    tpu.vector_store %arg18[%c0_53, %c16_54], %100 {strides = array<i32>} : memref<8x32xbf16, #tpu.memory_space<vmem>>, vector<8x8xbf16>,
    %c24 = arith.constant 24 : index
    %c0_55 = arith.constant 0 : index
    %102 = vector.load %arg16[%c24, %c0_55] : memref<32x8xbf16, #tpu.memory_space<vmem>>, vector<8x8xbf16>
    %c0_56 = arith.constant 0 : index
    %c24_57 = arith.constant 24 : index
    %103 = vector.load %arg17[%c0_56, %c24_57] : memref<8x32xbf16, #tpu.memory_space<vmem>>, vector<8x8xbf16>
    %c0_58 = arith.constant 0 : index
    %c24_59 = arith.constant 24 : index
    %104 = vector.load %arg15[%c0_58, %c24_59] : memref<8x32xbf16, #tpu.memory_space<vmem>>, vector<8x8xbf16>
    %cst_60 = arith.constant dense<0.000000e+00> : vector<8x8xf32>
    %105 = tpu.matmul %104, %102, %cst_60 {dimension_numbers = #tpu.dot_dimension_numbers<[1], [0], [0], [1], [0, 0, 1, 1], [], []>} : vector<8x8xbf16>, vector<8x8xbf16>, vector<8x8xf32> -> vector<8x8xf32>
    %cst_61 = arith.constant dense<0xFF800000> : vector<8xf32>
    %106 = vector.multi_reduction <maximumf>, %105, %cst_61 [1] : vector<8x8xf32> to vector<8xf32>
    %107 = vector.shape_cast %106 : vector<8xf32> to vector<8x1xf32>
    %108 = vector.broadcast %107 : vector<8x1xf32> to vector<8x8xf32>
    %109 = arith.subf %105, %108 : vector<8x8xf32>
    %110 = math.exp %109 : vector<8x8xf32>
    %cst_62 = arith.constant dense<0.000000e+00> : vector<8xf32>
    %111 = vector.multi_reduction <add>, %110, %cst_62 [1] : vector<8x8xf32> to vector<8xf32>
    %112 = vector.shape_cast %111 : vector<8xf32> to vector<8x1xf32>
    %113 = arith.truncf %110 : vector<8x8xf32> to vector<8x8xbf16>
    %cst_63 = arith.constant dense<0.000000e+00> : vector<8x8xf32>
    %114 = tpu.matmul %113, %103, %cst_63 {dimension_numbers = #tpu.dot_dimension_numbers<[1], [0], [0], [1], [0, 0, 1, 1], [], []>} : vector<8x8xbf16>, vector<8x8xbf16>, vector<8x8xf32> -> vector<8x8xf32>
    %115 = tpu.reciprocal %112 {approx = true} : vector<8x1xf32> -> vector<8x1xf32>
    %116 = vector.broadcast %115 : vector<8x1xf32> to vector<8x8xf32>
    %117 = arith.mulf %114, %116 : vector<8x8xf32>
    %118 = arith.truncf %117 : vector<8x8xf32> to vector<8x8xbf16>
    %c0_64 = arith.constant 0 : index
    %c24_65 = arith.constant 24 : index
    %119 = vector.load %arg18[%c0_64, %c24_65] : memref<8x32xbf16, #tpu.memory_space<vmem>>, vector<8x8xbf16>
    tpu.vector_store %arg18[%c0_64, %c24_65], %118 {strides = array<i32>} : memref<8x32xbf16, #tpu.memory_space<vmem>>, vector<8x8xbf16>,
    %c0_66 = arith.constant 0 : index
    %c0_67 = arith.constant 0 : index
    %120 = vector.load %arg18[%c0_66, %c0_67] : memref<8x32xbf16, #tpu.memory_space<vmem>>, vector<8x32xbf16>
    %c0_68 = arith.constant 0 : index
    %c0_69 = arith.constant 0 : index
    %121 = vector.load %arg6[%c0_68, %c0_69] : memref<32x32xbf16, #tpu.memory_space<vmem>>, vector<32x32xbf16>
    %cst_70 = arith.constant dense<0.000000e+00> : vector<8x32xf32>
    %122 = tpu.matmul %120, %121, %cst_70 {dimension_numbers = #tpu.dot_dimension_numbers<[1], [0], [0], [1], [0, 0, 1, 1], [], []>} : vector<8x32xbf16>, vector<32x32xbf16>, vector<8x32xf32> -> vector<8x32xf32>
    %123 = arith.addf %1, %122 : vector<8x32xf32>
    %c0_71 = arith.constant 0 : index
    %c0_72 = arith.constant 0 : index
    %124 = vector.load %arg7[%c0_71, %c0_72] : memref<1x32xf32, #tpu.memory_space<vmem>>, vector<1x32xf32>
    %125 = vector.shape_cast %124 : vector<1x32xf32> to vector<32xf32>
    %126 = vector.shape_cast %125 : vector<32xf32> to vector<1x32xf32>
    %127 = vector.broadcast %126 : vector<1x32xf32> to vector<8x32xf32>
    %128 = arith.addf %123, %127 : vector<8x32xf32>
    %cst_73 = arith.constant dense<0.000000e+00> : vector<8xf32>
    %129 = vector.multi_reduction <add>, %128, %cst_73 [1] : vector<8x32xf32> to vector<8xf32>
    %130 = vector.shape_cast %129 : vector<8xf32> to vector<8x1xf32>
    %cst_74 = arith.constant 3.200000e+01 : f32
    %131 = vector.broadcast %cst_74 : f32 to vector<8x1xf32>
    %132 = arith.divf %130, %131 : vector<8x1xf32>
    %133 = vector.broadcast %132 : vector<8x1xf32> to vector<8x32xf32>
    %134 = arith.subf %128, %133 : vector<8x32xf32>
    %135 = arith.mulf %134, %134 : vector<8x32xf32>
    %cst_75 = arith.constant dense<0.000000e+00> : vector<8xf32>
    %136 = vector.multi_reduction <add>, %135, %cst_75 [1] : vector<8x32xf32> to vector<8xf32>
    %137 = vector.shape_cast %136 : vector<8xf32> to vector<8x1xf32>
    %cst_76 = arith.constant 3.200000e+01 : f32
    %138 = vector.broadcast %cst_76 : f32 to vector<8x1xf32>
    %139 = arith.divf %137, %138 : vector<8x1xf32>
    %140 = vector.broadcast %132 : vector<8x1xf32> to vector<8x32xf32>
    %141 = arith.subf %128, %140 : vector<8x32xf32>
    %cst_77 = arith.constant 9.99999974E-6 : f32
    %142 = vector.broadcast %cst_77 : f32 to vector<8x1xf32>
    %143 = arith.addf %139, %142 : vector<8x1xf32>
    %144 = math.rsqrt %143 : vector<8x1xf32>
    %145 = vector.broadcast %144 : vector<8x1xf32> to vector<8x32xf32>
    %146 = arith.mulf %141, %145 : vector<8x32xf32>
    %c0_78 = arith.constant 0 : index
    %c0_79 = arith.constant 0 : index
    %147 = vector.load %arg8[%c0_78, %c0_79] : memref<1x32xf32, #tpu.memory_space<vmem>>, vector<1x32xf32>
    %148 = vector.shape_cast %147 : vector<1x32xf32> to vector<32xf32>
    %149 = vector.shape_cast %148 : vector<32xf32> to vector<1x32xf32>
    %150 = vector.broadcast %149 : vector<1x32xf32> to vector<8x32xf32>
    %151 = arith.mulf %146, %150 : vector<8x32xf32>
    %c0_80 = arith.constant 0 : index
    %c0_81 = arith.constant 0 : index
    %152 = vector.load %arg9[%c0_80, %c0_81] : memref<1x32xf32, #tpu.memory_space<vmem>>, vector<1x32xf32>
    %153 = vector.shape_cast %152 : vector<1x32xf32> to vector<32xf32>
    %154 = vector.shape_cast %153 : vector<32xf32> to vector<1x32xf32>
    %155 = vector.broadcast %154 : vector<1x32xf32> to vector<8x32xf32>
    %156 = arith.addf %151, %155 : vector<8x32xf32>
    %157 = arith.truncf %156 : vector<8x32xf32> to vector<8x32xbf16>
    %c0_82 = arith.constant 0 : index
    %c0_83 = arith.constant 0 : index
    %158 = vector.load %arg10[%c0_82, %c0_83] : memref<32x128xbf16, #tpu.memory_space<vmem>>, vector<32x128xbf16>
    %cst_84 = arith.constant dense<0.000000e+00> : vector<8x128xf32>
    %159 = tpu.matmul %157, %158, %cst_84 {dimension_numbers = #tpu.dot_dimension_numbers<[1], [0], [0], [1], [0, 0, 1, 1], [], []>} : vector<8x32xbf16>, vector<32x128xbf16>, vector<8x128xf32> -> vector<8x128xf32>
    %c0_85 = arith.constant 0 : index
    %c0_86 = arith.constant 0 : index
    %160 = vector.load %arg11[%c0_85, %c0_86] : memref<1x128xf32, #tpu.memory_space<vmem>>, vector<1x128xf32>
    %161 = vector.shape_cast %160 : vector<1x128xf32> to vector<128xf32>
    %162 = vector.shape_cast %161 : vector<128xf32> to vector<1x128xf32>
    %163 = vector.broadcast %162 : vector<1x128xf32> to vector<8x128xf32>
    %164 = arith.addf %159, %163 : vector<8x128xf32>
    %cst_87 = arith.constant 1.702000e+00 : f32
    %165 = vector.broadcast %cst_87 : f32 to vector<8x128xf32>
    %166 = arith.mulf %165, %164 : vector<8x128xf32>
    %167 = arith.negf %166 : vector<8x128xf32>
    %168 = math.exp %167 : vector<8x128xf32>
    %cst_88 = arith.constant 1.000000e+00 : f32
    %169 = vector.broadcast %cst_88 : f32 to vector<8x128xf32>
    %170 = arith.addf %169, %168 : vector<8x128xf32>
    %171 = arith.divf %169, %170 : vector<8x128xf32>
    %172 = arith.mulf %164, %171 : vector<8x128xf32>
    %173 = arith.truncf %172 : vector<8x128xf32> to vector<8x128xbf16>
    %c0_89 = arith.constant 0 : index
    %c0_90 = arith.constant 0 : index
    %174 = vector.load %arg12[%c0_89, %c0_90] : memref<128x32xbf16, #tpu.memory_space<vmem>>, vector<128x32xbf16>
    %cst_91 = arith.constant dense<0.000000e+00> : vector<8x32xf32>
    %175 = tpu.matmul %173, %174, %cst_91 {dimension_numbers = #tpu.dot_dimension_numbers<[1], [0], [0], [1], [0, 0, 1, 1], [], []>} : vector<8x128xbf16>, vector<128x32xbf16>, vector<8x32xf32> -> vector<8x32xf32>
    %c0_92 = arith.constant 0 : index
    %c0_93 = arith.constant 0 : index
    %176 = vector.load %arg13[%c0_92, %c0_93] : memref<1x32xf32, #tpu.memory_space<vmem>>, vector<1x32xf32>
    %177 = vector.shape_cast %176 : vector<1x32xf32> to vector<32xf32>
    %178 = vector.shape_cast %177 : vector<32xf32> to vector<1x32xf32>
    %179 = vector.broadcast %178 : vector<1x32xf32> to vector<8x32xf32>
    %180 = arith.addf %175, %179 : vector<8x32xf32>
    %181 = arith.addf %128, %180 : vector<8x32xf32>
    %c0_94 = arith.constant 0 : index
    %c0_95 = arith.constant 0 : index
    %c0_96 = arith.constant 0 : index
    %182 = vector.load %arg14[%c0_94, %c0_95, %c0_96] : memref<1x8x32xf32, #tpu.memory_space<vmem>>, vector<1x8x32xf32>
    %183 = vector.shape_cast %182 : vector<1x8x32xf32> to vector<8x32xf32>
    %184 = vector.shape_cast %181 : vector<8x32xf32> to vector<1x8x32xf32>
    tpu.vector_store %arg14[%c0_94, %c0_95, %c0_96], %184 {strides = array<i32>} : memref<1x8x32xf32, #tpu.memory_space<vmem>>, vector<1x8x32xf32>,
    return
  }
  func.func @transform_0(%arg0: i32) -> (i32, i32, i32) {
    %c0_i32 = arith.constant 0 : i32
    %c0_i32_0 = arith.constant 0 : i32
    %c0_i32_1 = arith.constant 0 : i32
    return %arg0, %c0_i32, %c0_i32_0 : i32, i32, i32
  }
  func.func @transform_1(%arg0: i32) -> (i32, i32) {
    %c0_i32 = arith.constant 0 : i32
    %c0_i32_0 = arith.constant 0 : i32
    %c0_i32_1 = arith.constant 0 : i32
    return %c0_i32, %c0_i32_0 : i32, i32
  }
  func.func @transform_2(%arg0: i32) -> (i32, i32) {
    %c0_i32 = arith.constant 0 : i32
    %c0_i32_0 = arith.constant 0 : i32
    %c0_i32_1 = arith.constant 0 : i32
    return %c0_i32, %c0_i32_0 : i32, i32
  }
  func.func @transform_3(%arg0: i32) -> (i32, i32) {
    %c0_i32 = arith.constant 0 : i32
    %c0_i32_0 = arith.constant 0 : i32
    %c0_i32_1 = arith.constant 0 : i32
    return %c0_i32, %c0_i32_0 : i32, i32
  }
  func.func @transform_4(%arg0: i32) -> (i32, i32) {
    %c0_i32 = arith.constant 0 : i32
    %c0_i32_0 = arith.constant 0 : i32
    %c0_i32_1 = arith.constant 0 : i32
    return %c0_i32, %c0_i32_0 : i32, i32
  }
  func.func @transform_5(%arg0: i32) -> (i32, i32) {
    %c0_i32 = arith.constant 0 : i32
    %c0_i32_0 = arith.constant 0 : i32
    %c0_i32_1 = arith.constant 0 : i32
    return %c0_i32, %c0_i32_0 : i32, i32
  }
  func.func @transform_6(%arg0: i32) -> (i32, i32) {
    %c0_i32 = arith.constant 0 : i32
    %c0_i32_0 = arith.constant 0 : i32
    %c0_i32_1 = arith.constant 0 : i32
    return %c0_i32, %c0_i32_0 : i32, i32
  }
  func.func @transform_7(%arg0: i32) -> (i32, i32) {
    %c0_i32 = arith.constant 0 : i32
    %c0_i32_0 = arith.constant 0 : i32
    %c0_i32_1 = arith.constant 0 : i32
    return %c0_i32, %c0_i32_0 : i32, i32
  }
  func.func @transform_8(%arg0: i32) -> (i32, i32) {
    %c0_i32 = arith.constant 0 : i32
    %c0_i32_0 = arith.constant 0 : i32
    %c0_i32_1 = arith.constant 0 : i32
    return %c0_i32, %c0_i32_0 : i32, i32
  }
  func.func @transform_9(%arg0: i32) -> (i32, i32) {
    %c0_i32 = arith.constant 0 : i32
    %c0_i32_0 = arith.constant 0 : i32
    %c0_i32_1 = arith.constant 0 : i32
    return %c0_i32, %c0_i32_0 : i32, i32
  }
  func.func @transform_10(%arg0: i32) -> (i32, i32) {
    %c0_i32 = arith.constant 0 : i32
    %c0_i32_0 = arith.constant 0 : i32
    %c0_i32_1 = arith.constant 0 : i32
    return %c0_i32, %c0_i32_0 : i32, i32
  }
  func.func @transform_11(%arg0: i32) -> (i32, i32) {
    %c0_i32 = arith.constant 0 : i32
    %c0_i32_0 = arith.constant 0 : i32
    %c0_i32_1 = arith.constant 0 : i32
    return %c0_i32, %c0_i32_0 : i32, i32
  }
  func.func @transform_12(%arg0: i32) -> (i32, i32) {
    %c0_i32 = arith.constant 0 : i32
    %c0_i32_0 = arith.constant 0 : i32
    %c0_i32_1 = arith.constant 0 : i32
    return %c0_i32, %c0_i32_0 : i32, i32
  }
  func.func @transform_13(%arg0: i32) -> (i32, i32, i32) {
    %c0_i32 = arith.constant 0 : i32
    %c0_i32_0 = arith.constant 0 : i32
    %c0_i32_1 = arith.constant 0 : i32
    return %arg0, %c0_i32, %c0_i32_0 : i32, i32, i32
  }
}

</mosaic_0001>

<llo_original>
// kernel: tpu_custom_call.1
$region0: #{tpu_custom_call.1}
  #allocation0 [shape = 'u32[]', space=smem, size = 0x4, offset = 0x4, fixed_abs, tag = 'smem constant byte address 0x4 - core index']
  #allocation1 [shape = 'u32[72,128]{1,0:T(1,128)}', space=vmem, size = 0x9000, scoped, tag = 'internal scratch']
  #allocation2 [shape = 'bf16[8,32]{1,0:T(8,128)(2,1)}', space=vmem, size = 0x800, scoped, tag = 'scratch operand']
  #allocation3 [shape = 'bf16[32,8]{1,0:T(8,128)(2,1)}', space=vmem, size = 0x2000, scoped, tag = 'scratch operand']
  #allocation4 [shape = 'bf16[8,32]{1,0:T(8,128)(2,1)}', space=vmem, size = 0x800, scoped, tag = 'scratch operand']
  #allocation5 [shape = 'bf16[8,32]{1,0:T(8,128)(2,1)}', space=vmem, size = 0x800, scoped, tag = 'scratch operand']
  %s0 = inlined_call_operand.vmem [shape: f32[2,8,32], index: 0, kind: input, shape index: {}]
  %s1 = inlined_call_operand.vmem [shape: f32[1,32], index: 1, kind: input, shape index: {}]
  %s2 = inlined_call_operand.vmem [shape: f32[1,32], index: 2, kind: input, shape index: {}]
  %s3 = inlined_call_operand.vmem [shape: bf16[32,96], index: 3, kind: input, shape index: {}]
  %s4 = inlined_call_operand.vmem [shape: f32[1,96], index: 4, kind: input, shape index: {}]
  %s5 = inlined_call_operand.vmem [shape: bf16[32,32], index: 5, kind: input, shape index: {}]
  %s6 = inlined_call_operand.vmem [shape: f32[1,32], index: 6, kind: input, shape index: {}]
  %s7 = inlined_call_operand.vmem [shape: f32[1,32], index: 7, kind: input, shape index: {}]
  %s8 = inlined_call_operand.vmem [shape: f32[1,32], index: 8, kind: input, shape index: {}]
  %s9 = inlined_call_operand.vmem [shape: bf16[32,128], index: 9, kind: input, shape index: {}]
  %s10 = inlined_call_operand.vmem [shape: f32[1,128], index: 10, kind: input, shape index: {}]
  %s11 = inlined_call_operand.vmem [shape: bf16[128,32], index: 11, kind: input, shape index: {}]
  %s12 = inlined_call_operand.vmem [shape: f32[1,32], index: 12, kind: input, shape index: {}]
  %s13 = inlined_call_operand.hbm [shape: f32[2,8,32], index: 13, kind: output, shape index: {}]
  %s14 = sld [smem:[#allocation0]]
  $region85: #{tpu_custom_call.1} parent=0
    _
  %s16 = ssub.s32 1, %s14
  %s17 = scalar_select 0, %s16, %s14
  $region1: #{tpu_custom_call.1} parent=0
    #allocation6 [shape = 'u8[8192]{0}', space=vmem, size = 0x2000, scoped, tag = 'output window, operand 0']
    #allocation7 [shape = 's32[2]{0}', space=sflag, size = 0x8, scoped, tag = 'scoped memory for tpu_custom_call.1']
    %18 = vsyncpa [#allocation7], 0
    %s19 = scalar_lea.sflag [#allocation7], 1
    %20 = vsyncpa %s19, 0
    loop: start=0, step=1, limit=4
    $region2: #{tpu_custom_call.1} parent=1 // loop_pre_header
      _
    $region3: #{tpu_custom_call.1} parent=1 // loop_header
      %s22 = sphi 0, %s26
      %p23 = scmp.ge.s32.totalorder %s22, 4
      %s32 = sphi 0, %s34
      %s35 = sphi 0, %s32
      %s36 = sphi 0, %s35
      %s52 = sphi 0, %s36
      %s56 = sphi 0, %s56
      %s58 = sphi 0, %s56
      %s59 = sphi 0, %s58
      %s73 = sphi 0, %s59
      %s77 = sphi 0, %s77
      %s79 = sphi 0, %s77
      %s80 = sphi 0, %s79
      %s94 = sphi 0, %s80
      %s98 = sphi 0, %s98
      %s100 = sphi 0, %s98
      %s101 = sphi 0, %s100
      %s115 = sphi 0, %s101
      %s119 = sphi 0, %s119
      %s121 = sphi 0, %s119
      %s122 = sphi 0, %s121
      %s136 = sphi 0, %s122
      %s140 = sphi 0, %s140
      %s142 = sphi 0, %s140
      %s143 = sphi 0, %s142
      %s157 = sphi 0, %s143
      %s161 = sphi 0, %s161
      %s163 = sphi 0, %s161
      %s164 = sphi 0, %s163
      %s178 = sphi 0, %s164
      %s182 = sphi 0, %s182
      %s184 = sphi 0, %s182
      %s185 = sphi 0, %s184
      %s199 = sphi 0, %s185
      %s203 = sphi 0, %s203
      %s205 = sphi 0, %s203
      %s206 = sphi 0, %s205
      %s220 = sphi 0, %s206
      %s224 = sphi 0, %s224
      %s226 = sphi 0, %s224
      %s227 = sphi 0, %s226
      %s241 = sphi 0, %s227
      %s245 = sphi 0, %s245
      %s247 = sphi 0, %s245
      %s248 = sphi 0, %s247
      %s262 = sphi 0, %s248
      %s266 = sphi 0, %s266
      %s268 = sphi 0, %s266
      %s269 = sphi 0, %s268
      %s283 = sphi 0, %s269
      %s287 = sphi 0, %s287
      %s289 = sphi 0, %s287
      %s290 = sphi 0, %s289
      %s304 = sphi 0, %s290
      %s310 = sphi 0, %s312
      %s313 = sphi 0, %s310
      %s314 = sphi 0, %s313
      %s330 = sphi 0, %s314
    $region4: #{tpu_custom_call.1} parent=1 // loop_header_branch
      %25 = sbr.rel (%p23) target = $region8
    $region5: #{tpu_custom_call.1} parent=1 // loop_body
      %s27 = ssub.s32 %s22, 1
      %s28 = ssub.s32 %s22, 2
      %s29 = sadd.s32 %s22, 1
      %s30 = ssub.s32 %s22, %s29
      %p31 = scmp.eq.s32.totalorder %s30, 0
      %s33 = sadd.s32 %s32, 1
      %s34 = scalar_select %p31, %s32, %s33
      %p37 = pneg %p31
      %p38 = scmp.eq.s32.totalorder %s22, 1
      %p39 = por %p37, %p38
      %p40 = scmp.ne.s32.totalorder %s32, %s35
      %p41 = scmp.eq.s32.totalorder %s22, 0
      %p42 = por %p40, %p41
      %p43 = scmp.ne.s32.totalorder %s32, %s35
      %p44 = scmp.eq.s32.totalorder %s27, 1
      %p45 = por %p43, %p44
      %p46 = scmp.ne.s32.totalorder %s35, %s36
      %p47 = scmp.eq.s32.totalorder %s27, 0
      %p48 = por %p46, %p47
      %p49 = scmp.ne.s32.totalorder %s35, %s36
      %p50 = scmp.eq.s32.totalorder %s28, 1
      %p51 = por %p49, %p50
      %p53 = scmp.ne.s32.totalorder %s36, %s52
      %p54 = scmp.eq.s32.totalorder %s28, 0
      %p55 = por %p53, %p54
      %s57 = sadd.s32 %s56, 1
      %p60 = scmp.eq.s32.totalorder %s22, 1
      %p61 = scmp.ne.s32.totalorder %s56, %s58
      %p62 = scmp.eq.s32.totalorder %s22, 0
      %p63 = por %p61, %p62
      %p64 = scmp.ne.s32.totalorder %s56, %s58
      %p65 = scmp.eq.s32.totalorder %s27, 1
      %p66 = por %p64, %p65
      %p67 = scmp.ne.s32.totalorder %s58, %s59
      %p68 = scmp.eq.s32.totalorder %s27, 0
      %p69 = por %p67, %p68
      %p70 = scmp.ne.s32.totalorder %s58, %s59
      %p71 = scmp.eq.s32.totalorder %s28, 1
      %p72 = por %p70, %p71
      %p74 = scmp.ne.s32.totalorder %s59, %s73
      %p75 = scmp.eq.s32.totalorder %s28, 0
      %p76 = por %p74, %p75
      %s78 = sadd.s32 %s77, 1
      %p81 = scmp.eq.s32.totalorder %s22, 1
      %p82 = scmp.ne.s32.totalorder %s77, %s79
      %p83 = scmp.eq.s32.totalorder %s22, 0
      %p84 = por %p82, %p83
      %p85 = scmp.ne.s32.totalorder %s77, %s79
      %p86 = scmp.eq.s32.totalorder %s27, 1
      %p87 = por %p85, %p86
      %p88 = scmp.ne.s32.totalorder %s79, %s80
      %p89 = scmp.eq.s32.totalorder %s27, 0
      %p90 = por %p88, %p89
      %p91 = scmp.ne.s32.totalorder %s79, %s80
      %p92 = scmp.eq.s32.totalorder %s28, 1
      %p93 = por %p91, %p92
      %p95 = scmp.ne.s32.totalorder %s80, %s94
      %p96 = scmp.eq.s32.totalorder %s28, 0
      %p97 = por %p95, %p96
      %s99 = sadd.s32 %s98, 1
      %p102 = scmp.eq.s32.totalorder %s22, 1
      %p103 = scmp.ne.s32.totalorder %s98, %s100
      %p104 = scmp.eq.s32.totalorder %s22, 0
      %p105 = por %p103, %p104
      %p106 = scmp.ne.s32.totalorder %s98, %s100
      %p107 = scmp.eq.s32.totalorder %s27, 1
      %p108 = por %p106, %p107
      %p109 = scmp.ne.s32.totalorder %s100, %s101
      %p110 = scmp.eq.s32.totalorder %s27, 0
      %p111 = por %p109, %p110
      %p112 = scmp.ne.s32.totalorder %s100, %s101
      %p113 = scmp.eq.s32.totalorder %s28, 1
      %p114 = por %p112, %p113
      %p116 = scmp.ne.s32.totalorder %s101, %s115
      %p117 = scmp.eq.s32.totalorder %s28, 0
      %p118 = por %p116, %p117
      %s120 = sadd.s32 %s119, 1
      %p123 = scmp.eq.s32.totalorder %s22, 1
      %p124 = scmp.ne.s32.totalorder %s119, %s121
      %p125 = scmp.eq.s32.totalorder %s22, 0
      %p126 = por %p124, %p125
      %p127 = scmp.ne.s32.totalorder %s119, %s121
      %p128 = scmp.eq.s32.totalorder %s27, 1
      %p129 = por %p127, %p128
      %p130 = scmp.ne.s32.totalorder %s121, %s122
      %p131 = scmp.eq.s32.totalorder %s27, 0
      %p132 = por %p130, %p131
      %p133 = scmp.ne.s32.totalorder %s121, %s122
      %p134 = scmp.eq.s32.totalorder %s28, 1
      %p135 = por %p133, %p134
      %p137 = scmp.ne.s32.totalorder %s122, %s136
      %p138 = scmp.eq.s32.totalorder %s28, 0
      %p139 = por %p137, %p138
      %s141 = sadd.s32 %s140, 1
      %p144 = scmp.eq.s32.totalorder %s22, 1
      %p145 = scmp.ne.s32.totalorder %s140, %s142
      %p146 = scmp.eq.s32.totalorder %s22, 0
      %p147 = por %p145, %p146
      %p148 = scmp.ne.s32.totalorder %s140, %s142
      %p149 = scmp.eq.s32.totalorder %s27, 1
      %p150 = por %p148, %p149
      %p151 = scmp.ne.s32.totalorder %s142, %s143
      %p152 = scmp.eq.s32.totalorder %s27, 0
      %p153 = por %p151, %p152
      %p154 = scmp.ne.s32.totalorder %s142, %s143
      %p155 = scmp.eq.s32.totalorder %s28, 1
      %p156 = por %p154, %p155
      %p158 = scmp.ne.s32.totalorder %s143, %s157
      %p159 = scmp.eq.s32.totalorder %s28, 0
      %p160 = por %p158, %p159
      %s162 = sadd.s32 %s161, 1
      %p165 = scmp.eq.s32.totalorder %s22, 1
      %p166 = scmp.ne.s32.totalorder %s161, %s163
      %p167 = scmp.eq.s32.totalorder %s22, 0
      %p168 = por %p166, %p167
      %p169 = scmp.ne.s32.totalorder %s161, %s163
      %p170 = scmp.eq.s32.totalorder %s27, 1
      %p171 = por %p169, %p170
      %p172 = scmp.ne.s32.totalorder %s163, %s164
      %p173 = scmp.eq.s32.totalorder %s27, 0
      %p174 = por %p172, %p173
      %p175 = scmp.ne.s32.totalorder %s163, %s164
      %p176 = scmp.eq.s32.totalorder %s28, 1
      %p177 = por %p175, %p176
      %p179 = scmp.ne.s32.totalorder %s164, %s178
      %p180 = scmp.eq.s32.totalorder %s28, 0
      %p181 = por %p179, %p180
      %s183 = sadd.s32 %s182, 1
      %p186 = scmp.eq.s32.totalorder %s22, 1
      %p187 = scmp.ne.s32.totalorder %s182, %s184
      %p188 = scmp.eq.s32.totalorder %s22, 0
      %p189 = por %p187, %p188
      %p190 = scmp.ne.s32.totalorder %s182, %s184
      %p191 = scmp.eq.s32.totalorder %s27, 1
      %p192 = por %p190, %p191
      %p193 = scmp.ne.s32.totalorder %s184, %s185
      %p194 = scmp.eq.s32.totalorder %s27, 0
      %p195 = por %p193, %p194
      %p196 = scmp.ne.s32.totalorder %s184, %s185
      %p197 = scmp.eq.s32.totalorder %s28, 1
      %p198 = por %p196, %p197
      %p200 = scmp.ne.s32.totalorder %s185, %s199
      %p201 = scmp.eq.s32.totalorder %s28, 0
      %p202 = por %p200, %p201
      %s204 = sadd.s32 %s203, 1
      %p207 = scmp.eq.s32.totalorder %s22, 1
      %p208 = scmp.ne.s32.totalorder %s203, %s205
      %p209 = scmp.eq.s32.totalorder %s22, 0
      %p210 = por %p208, %p209
      %p211 = scmp.ne.s32.totalorder %s203, %s205
      %p212 = scmp.eq.s32.totalorder %s27, 1
      %p213 = por %p211, %p212
      %p214 = scmp.ne.s32.totalorder %s205, %s206
      %p215 = scmp.eq.s32.totalorder %s27, 0
      %p216 = por %p214, %p215
      %p217 = scmp.ne.s32.totalorder %s205, %s206
      %p218 = scmp.eq.s32.totalorder %s28, 1
      %p219 = por %p217, %p218
      %p221 = scmp.ne.s32.totalorder %s206, %s220
      %p222 = scmp.eq.s32.totalorder %s28, 0
      %p223 = por %p221, %p222
      %s225 = sadd.s32 %s224, 1
      %p228 = scmp.eq.s32.totalorder %s22, 1
      %p229 = scmp.ne.s32.totalorder %s224, %s226
      %p230 = scmp.eq.s32.totalorder %s22, 0
      %p231 = por %p229, %p230
      %p232 = scmp.ne.s32.totalorder %s224, %s226
      %p233 = scmp.eq.s32.totalorder %s27, 1
      %p234 = por %p232, %p233
      %p235 = scmp.ne.s32.totalorder %s226, %s227
      %p236 = scmp.eq.s32.totalorder %s27, 0
      %p237 = por %p235, %p236
      %p238 = scmp.ne.s32.totalorder %s226, %s227
      %p239 = scmp.eq.s32.totalorder %s28, 1
      %p240 = por %p238, %p239
      %p242 = scmp.ne.s32.totalorder %s227, %s241
      %p243 = scmp.eq.s32.totalorder %s28, 0
      %p244 = por %p242, %p243
      %s246 = sadd.s32 %s245, 1
      %p249 = scmp.eq.s32.totalorder %s22, 1
      %p250 = scmp.ne.s32.totalorder %s245, %s247
      %p251 = scmp.eq.s32.totalorder %s22, 0
      %p252 = por %p250, %p251
      %p253 = scmp.ne.s32.totalorder %s245, %s247
      %p254 = scmp.eq.s32.totalorder %s27, 1
      %p255 = por %p253, %p254
      %p256 = scmp.ne.s32.totalorder %s247, %s248
      %p257 = scmp.eq.s32.totalorder %s27, 0
      %p258 = por %p256, %p257
      %p259 = scmp.ne.s32.totalorder %s247, %s248
      %p260 = scmp.eq.s32.totalorder %s28, 1
      %p261 = por %p259, %p260
      %p263 = scmp.ne.s32.totalorder %s248, %s262
      %p264 = scmp.eq.s32.totalorder %s28, 0
      %p265 = por %p263, %p264
      %s267 = sadd.s32 %s266, 1
      %p270 = scmp.eq.s32.totalorder %s22, 1
      %p271 = scmp.ne.s32.totalorder %s266, %s268
      %p272 = scmp.eq.s32.totalorder %s22, 0
      %p273 = por %p271, %p272
      %p274 = scmp.ne.s32.totalorder %s266, %s268
      %p275 = scmp.eq.s32.totalorder %s27, 1
      %p276 = por %p274, %p275
      %p277 = scmp.ne.s32.totalorder %s268, %s269
      %p278 = scmp.eq.s32.totalorder %s27, 0
      %p279 = por %p277, %p278
      %p280 = scmp.ne.s32.totalorder %s268, %s269
      %p281 = scmp.eq.s32.totalorder %s28, 1
      %p282 = por %p280, %p281
      %p284 = scmp.ne.s32.totalorder %s269, %s283
      %p285 = scmp.eq.s32.totalorder %s28, 0
      %p286 = por %p284, %p285
      %s288 = sadd.s32 %s287, 1
      %p291 = scmp.eq.s32.totalorder %s22, 1
      %p292 = scmp.ne.s32.totalorder %s287, %s289
      %p293 = scmp.eq.s32.totalorder %s22, 0
      %p294 = por %p292, %p293
      %p295 = scmp.ne.s32.totalorder %s287, %s289
      %p296 = scmp.eq.s32.totalorder %s27, 1
      %p297 = por %p295, %p296
      %p298 = scmp.ne.s32.totalorder %s289, %s290
      %p299 = scmp.eq.s32.totalorder %s27, 0
      %p300 = por %p298, %p299
      %p301 = scmp.ne.s32.totalorder %s289, %s290
      %p302 = scmp.eq.s32.totalorder %s28, 1
      %p303 = por %p301, %p302
      %p305 = scmp.ne.s32.totalorder %s290, %s304
      %p306 = scmp.eq.s32.totalorder %s28, 0
      %p307 = por %p305, %p306
      %s308 = ssub.s32 %s22, %s29
      %p309 = scmp.eq.s32.totalorder %s308, 0
      %s311 = sadd.s32 %s310, 1
      %s312 = scalar_select %p309, %s310, %s311
      %p315 = pneg %p309
      %p316 = scmp.eq.s32.totalorder %s22, 1
      %p317 = por %p315, %p316
      %p318 = scmp.ne.s32.totalorder %s310, %s313
      %p319 = scmp.eq.s32.totalorder %s22, 0
      %p320 = por %p318, %p319
      %p321 = scmp.ne.s32.totalorder %s310, %s313
      %p322 = scmp.eq.s32.totalorder %s27, 1
      %p323 = por %p321, %p322
      %p324 = scmp.ne.s32.totalorder %s313, %s314
      %p325 = scmp.eq.s32.totalorder %s27, 0
      %p326 = por %p324, %p325
      %p327 = scmp.ne.s32.totalorder %s313, %s314
      %p328 = scmp.eq.s32.totalorder %s28, 1
      %p329 = por %p327, %p328
      %p331 = scmp.ne.s32.totalorder %s314, %s330
      %p332 = scmp.eq.s32.totalorder %s28, 0
      %p333 = por %p331, %p332
      %p334 = scmp.le.s32.totalorder 1, %s22
      %p335 = scmp.lt.s32.totalorder %s22, 3
      %p336 = pnand %p334, %p335
      %p337 = pneg %p336
      // Predicated region
      $region9: #{tpu_custom_call.1} parent=5 // pred_check
        _
      $region10: #{tpu_custom_call.1} parent=5 // pred_check_branch
        %339 = sbr.rel (%p336) target = $region12
      $region11: #{tpu_custom_call.1} parent=5 // pred_region
        %s340 = ssub.s32 %s22, 1
        // Predicated region
        $region13: #{tpu_custom_call.1} parent=11 // pred_check
          %p341 = pneg %p69
        $region14: #{tpu_custom_call.1} parent=11 // pred_check_branch
          %343 = sbr.rel (%p341) target = $region16
        $region15: #{tpu_custom_call.1} parent=11 // pred_region
          _
        $region16: #{tpu_custom_call.1} parent=11 // pred_fallthru
          _
        // Predicated region
        $region17: #{tpu_custom_call.1} parent=11 // pred_check
          %p344 = pneg %p90
        $region18: #{tpu_custom_call.1} parent=11 // pred_check_branch
          %346 = sbr.rel (%p344) target = $region20
        $region19: #{tpu_custom_call.1} parent=11 // pred_region
          _
        $region20: #{tpu_custom_call.1} parent=11 // pred_fallthru
          _
        // Predicated region
        $region21: #{tpu_custom_call.1} parent=11 // pred_check
          %p347 = pneg %p111
        $region22: #{tpu_custom_call.1} parent=11 // pred_check_branch
          %349 = sbr.rel (%p347) target = $region24
        $region23: #{tpu_custom_call.1} parent=11 // pred_region
          _
        $region24: #{tpu_custom_call.1} parent=11 // pred_fallthru
          _
        // Predicated region
        $region25: #{tpu_custom_call.1} parent=11 // pred_check
          %p350 = pneg %p132
        $region26: #{tpu_custom_call.1} parent=11 // pred_check_branch
          %352 = sbr.rel (%p350) target = $region28
        $region27: #{tpu_custom_call.1} parent=11 // pred_region
          _
        $region28: #{tpu_custom_call.1} parent=11 // pred_fallthru
          _
        // Predicated region
        $region29: #{tpu_custom_call.1} parent=11 // pred_check
          %p353 = pneg %p153
        $region30: #{tpu_custom_call.1} parent=11 // pred_check_branch
          %355 = sbr.rel (%p353) target = $region32
        $region31: #{tpu_custom_call.1} parent=11 // pred_region
          _
        $region32: #{tpu_custom_call.1} parent=11 // pred_fallthru
          _
        // Predicated region
        $region33: #{tpu_custom_call.1} parent=11 // pred_check
          %p356 = pneg %p174
        $region34: #{tpu_custom_call.1} parent=11 // pred_check_branch
          %358 = sbr.rel (%p356) target = $region36
        $region35: #{tpu_custom_call.1} parent=11 // pred_region
          _
        $region36: #{tpu_custom_call.1} parent=11 // pred_fallthru
          _
        // Predicated region
        $region37: #{tpu_custom_call.1} parent=11 // pred_check
          %p359 = pneg %p195
        $region38: #{tpu_custom_call.1} parent=11 // pred_check_branch
          %361 = sbr.rel (%p359) target = $region40
        $region39: #{tpu_custom_call.1} parent=11 // pred_region
          _
        $region40: #{tpu_custom_call.1} parent=11 // pred_fallthru
          _
        // Predicated region
        $region41: #{tpu_custom_call.1} parent=11 // pred_check
          %p362 = pneg %p216
        $region42: #{tpu_custom_call.1} parent=11 // pred_check_branch
          %364 = sbr.rel (%p362) target = $region44
        $region43: #{tpu_custom_call.1} parent=11 // pred_region
          _
        $region44: #{tpu_custom_call.1} parent=11 // pred_fallthru
          _
        // Predicated region
        $region45: #{tpu_custom_call.1} parent=11 // pred_check
          %p365 = pneg %p237
        $region46: #{tpu_custom_call.1} parent=11 // pred_check_branch
          %367 = sbr.rel (%p365) target = $region48
        $region47: #{tpu_custom_call.1} parent=11 // pred_region
          _
        $region48: #{tpu_custom_call.1} parent=11 // pred_fallthru
          _
        // Predicated region
        $region49: #{tpu_custom_call.1} parent=11 // pred_check
          %p368 = pneg %p258
        $region50: #{tpu_custom_call.1} parent=11 // pred_check_branch
          %370 = sbr.rel (%p368) target = $region52
        $region51: #{tpu_custom_call.1} parent=11 // pred_region
          _
        $region52: #{tpu_custom_call.1} parent=11 // pred_fallthru
          _
        // Predicated region
        $region53: #{tpu_custom_call.1} parent=11 // pred_check
          %p371 = pneg %p279
        $region54: #{tpu_custom_call.1} parent=11 // pred_check_branch
          %373 = sbr.rel (%p371) target = $region56
        $region55: #{tpu_custom_call.1} parent=11 // pred_region
          _
        $region56: #{tpu_custom_call.1} parent=11 // pred_fallthru
          _
        // Predicated region
        $region57: #{tpu_custom_call.1} parent=11 // pred_check
          %p374 = pneg %p300
        $region58: #{tpu_custom_call.1} parent=11 // pred_check_branch
          %376 = sbr.rel (%p374) target = $region60
        $region59: #{tpu_custom_call.1} parent=11 // pred_region
          _
        $region60: #{tpu_custom_call.1} parent=11 // pred_fallthru
          _
      $region12: #{tpu_custom_call.1} parent=5 // pred_fallthru
        _
      %p377 = scmp.lt.s32.totalorder %s22, 2
      // Predicated region
      $region61: #{tpu_custom_call.1} parent=5 // pred_check
        %p378 = pneg %p377
      $region62: #{tpu_custom_call.1} parent=5 // pred_check_branch
        %380 = sbr.rel (%p378) target = $region64
      $region63: #{tpu_custom_call.1} parent=5 // pred_region
        // Predicated region
        $region65: #{tpu_custom_call.1} parent=63 // pred_check
          %p381 = pneg %p42
        $region66: #{tpu_custom_call.1} parent=63 // pred_check_branch
          %383 = sbr.rel (%p381) target = $region68
        $region67: #{tpu_custom_call.1} parent=63 // pred_region
          %p384 = scmp.lt.s32.totalorder %s22, 1
          %s385 = scalar_select %p384, %s22, 1
          %s386 = smul.addr %s385, 8
          %s387 = scalar_lea.vmem %s0, %s386
        $region68: #{tpu_custom_call.1} parent=63 // pred_fallthru
          _
      $region64: #{tpu_custom_call.1} parent=5 // pred_fallthru
        _
      %p388 = scmp.le.s32.totalorder 1, %s22
      %p389 = scmp.lt.s32.totalorder %s22, 3
      %p390 = pnand %p388, %p389
      %p391 = pneg %p390
      // Predicated region
      $region69: #{tpu_custom_call.1} parent=5 // pred_check
        _
      $region70: #{tpu_custom_call.1} parent=5 // pred_check_branch
        %393 = sbr.rel (%p390) target = $region72
      $region71: #{tpu_custom_call.1} parent=5 // pred_region
        %s394 = ssub.s32 %s22, 1
        %p395 = scmp.lt.s32.totalorder %s27, 1
        %s396 = scalar_select %p395, %s27, 1
        %s397 = smul.addr %s396, 8
        %s398 = scalar_lea.vmem %s0, %s397
        %p399 = pneg %p48
        %p400 = pneg %p45
        %p401 = pneg %p69
        %p402 = pneg %p66
        %p403 = pneg %p90
        %p404 = pneg %p87
        %p405 = pneg %p111
        %p406 = pneg %p108
        %p407 = pneg %p132
        %p408 = pneg %p129
        %p409 = pneg %p153
        %p410 = pneg %p150
        %p411 = pneg %p174
        %p412 = pneg %p171
        %p413 = pneg %p195
        %p414 = pneg %p192
        %p415 = pneg %p216
        %p416 = pneg %p213
        %p417 = pneg %p237
        %p418 = pneg %p234
        %p419 = pneg %p258
        %p420 = pneg %p255
        %p421 = pneg %p279
        %p422 = pneg %p276
        %p423 = pneg %p300
        %p424 = pneg %p297
        %p425 = pneg %p326
        %p426 = pneg %p323
        %s427 = sand.u32 %s313, 1
        %s428 = scalar_lea.sflag [#allocation7], %s427
        %s429 = sand.u32 %s313, 1
        %s430 = smul.addr %s429, 8
        %s431 = scalar_lea.vmem [#allocation6], %s430
        %p432 = scmp.lt.s32.totalorder %s27, 1
        %s433 = scalar_select %p432, %s27, 1
        %s434 = smul.addr %s433, 8
        %s435 = scalar_lea.vmem %s0, %s434
        %v437 = vld [vmem:[%s435] sm:$0xff]
        %vm438 = vcmask 261120
        %v439 = vsel %vm438, %v437, 0.0
        %440 = vadd.xlane.f32.xlu0 %v439
        %v441 = vpop.xlane.xlu0 %440
        %v442 = vrcp.pop 32.0
        %v443 = vmul.f32 32.0, %v442
        %v444 = vsub.f32 1.0, %v443
        %v445 = vmul.f32 %v442, %v444
        %v446 = vadd.f32 %v442, %v445
        %vm447 = vweird.f32 %v442
        %v448 = vsel %vm447, %v442, %v446
        %v449 = vmul.f32 %v441, %v448
        %v450 = vsub.f32 %v437, %v449
        %v451 = vmul.f32 %v450, %v450
        %v452 = vsel %vm438, %v451, 0.0
        %453 = vadd.xlane.f32.xlu0 %v452
        %v454 = vpop.xlane.xlu0 %453
        %v455 = vmul.f32 %v454, %v448
        %v456 = vadd.f32 %v455, 1e-05
        %v457 = vrsqrt.pop %v456
        %v458 = vmul.f32 %v457, %v456
        %v459 = vmul.f32 %v458, %v457
        %v460 = vmul.f32 0.5, %v459
        %v461 = vsub.f32 1.5, %v460
        %v462 = vmul.f32 %v457, %v461
        %vm463 = vweird.f32 %v456
        %vm464 = vweird.f32 %v457
        %vm465 = vmor %vm463, %vm464
        %v466 = vsel %vm465, %v457, %v462
        %v467 = vmul.f32 %v450, %v466
        %v468 = vld [vmem:[%s1] sm:$0x1]
        %v470 = vperm.slane %v468, 0
        %v472 = vmul.f32 %v467, %v470
        %v473 = vld [vmem:[%s2] sm:$0x1]
        %v475 = vperm.slane %v473, 0
        %v477 = vadd.f32 %v472, %v475
        %v478 = vpack.c.bf16 %v477, %v477
        %v479 = vld [vmem:[%s3] sm:$0xf]
        %v480 = vld [vmem:[%s3 + $0x4] sm:$0xf]
        %v481 = vld [vmem:[%s3 + $0x8] sm:$0xf]
        %v482 = vld [vmem:[%s3 + $0xc] sm:$0xf]
        %v483 = vld [vmem:[%s4] sm:$0x1]
        %v485 = vperm.slane %v483, 0
        %v491 = vunpack.c.l.b16 %v479
        %v492 = vunpack.c.l.b16 %v480
        %v493 = vunpack.c.l.b16 %v481
        %v494 = vunpack.c.l.b16 %v482
        %v495 = vpack.c.b16 %v492, %v491
        %v496 = vpack.c.b16 %v494, %v493
        %v500 = vsel %vm438, %v478, 0
        %502 = vmatpush.bf16.msra.mxu0 0
        %503 = vmatpush.bf16.msra.mxu0 0
        %504 = vmatpush.bf16.msra.mxu0 0
        %505 = vmatpush.bf16.msra.mxu0 0
        %506 = vmatpush.bf16.msra.mxu0 0
        %507 = vmatpush.bf16.msra.mxu0 0
        %508 = vmatpush.bf16.msra.mxu0 %v496
        %509 = vmatpush.bf16.msra.mxu0 %v495
        %510 = vmatmul.bf16.gmra.mxu0 %v500
        %v511 = vpop.f32.mrf.mxu0
        %v512 = vadd.f32 %v485, %v511
        %v513 = vpop.f32.mrf.mxu0
        %514 = vdwg.mxu0
        %v515 = vpack.c.bf16 %v512, %v512
        %vm516 = vcmask 257024
        %517 = vst.msk [vmem:[#allocation2] sm:$0xf] %vm516, %v515
        %519 = vrot.lane.b32.xlu0 %v512, 96
        %v520 = vpop.permute.xlu0 %519
        %522 = vxpose.xlu0.b32.start [1/16] %v520, 128
        %523 = vxpose.xlu0.b32.cont [2/16] 0.0, 128
        %524 = vxpose.xlu0.b32.cont [3/16] 0.0, 128
        %525 = vxpose.xlu0.b32.cont [4/16] 0.0, 128
        %526 = vxpose.xlu0.b32.cont [5/16] 0.0, 128
        %527 = vxpose.xlu0.b32.cont [6/16] 0.0, 128
        %528 = vxpose.xlu0.b32.cont [7/16] 0.0, 128
        %529 = vxpose.xlu0.b32.cont [8/16] 0.0, 128
        %530 = vxpose.xlu0.b32.cont [9/16] 0.0, 128
        %531 = vxpose.xlu0.b32.cont [10/16] 0.0, 128
        %532 = vxpose.xlu0.b32.cont [11/16] 0.0, 128
        %533 = vxpose.xlu0.b32.cont [12/16] 0.0, 128
        %534 = vxpose.xlu0.b32.cont [13/16] 0.0, 128
        %535 = vxpose.xlu0.b32.cont [14/16] 0.0, 128
        %536 = vxpose.xlu0.b32.cont [15/16] 0.0, 128
        %537 = vxpose.xlu0.b32.end [16/16] 0.0, 128
        %v538 = vpop.trf.xlu0
        %v539 = vpop.trf.xlu0
        %v540 = vpop.trf.xlu0
        %v541 = vpop.trf.xlu0
        %v542 = vpop.trf.xlu0
        %v543 = vpop.trf.xlu0
        %v544 = vpop.trf.xlu0
        %v545 = vpop.trf.xlu0
        %v546 = vpop.trf.xlu0
        %v547 = vpop.trf.xlu0
        %v548 = vpop.trf.xlu0
        %v549 = vpop.trf.xlu0
        %v550 = vpop.trf.xlu0
        %v551 = vpop.trf.xlu0
        %v552 = vpop.trf.xlu0
        %v553 = vpop.trf.xlu0
        %v554 = vpack.c.bf16 %v538, %v538
        %v555 = vpack.c.bf16 %v539, %v539
        %v556 = vpack.c.bf16 %v540, %v540
        %v557 = vpack.c.bf16 %v541, %v541
        %vm558 = vcmask 60416
        %559 = vst.msk [vmem:[#allocation3] sm:$0xf] %vm558, %v554
        %560 = vst.msk [vmem:[#allocation3 + $0x4] sm:$0xf] %vm558, %v555
        %561 = vst.msk [vmem:[#allocation3 + $0x8] sm:$0xf] %vm558, %v556
        %562 = vst.msk [vmem:[#allocation3 + $0xc] sm:$0xf] %vm558, %v557
        %564 = vrot.lane.b32.xlu0 %v515, 64
        %v565 = vpop.permute.xlu0 %564
        %567 = vst.msk [vmem:[#allocation4] sm:$0xf] %vm516, %v565
        %v568 = vld [vmem:[#allocation3] sm:$0xf]
        %v569 = vld [vmem:[#allocation4] sm:$0xf]
        %v570 = vld [vmem:[#allocation2] sm:$0xf]
        %vm571 = vcmask 64512
        %v573 = vsel %vm571, %v570, 0
        %vm575 = vcmask 1043456
        %v577 = vsel %vm575, %v568, 0
        %579 = vmatpush.bf16.msra.mxu0 0
        %580 = vmatpush.bf16.msra.mxu0 0
        %581 = vmatpush.bf16.msra.mxu0 0
        %582 = vmatpush.bf16.msra.mxu0 0
        %583 = vmatpush.bf16.msra.mxu0 0
        %584 = vmatpush.bf16.msra.mxu0 0
        %585 = vmatpush.bf16.msra.mxu0 0
        %586 = vmatpush.bf16.msra.mxu0 %v577
        %587 = vmatmul.bf16.gmra.mxu0 %v573
        %v588 = vpop.f32.mrf.mxu0
        %v589 = vadd.f32 0.0, %v588
        %v590 = vpop.f32.mrf.mxu0
        %591 = vdwg.mxu0
        %v592 = vsel %vm571, %v589, -inf
        %593 = vmax.xlane.f32.xlu0 %v592
        %v594 = vpop.xlane.xlu0 %593
        %v595 = vsub.f32 %v589, %v594
        %v596 = vmul.f32 %v595, 1.442695
        %v597 = vpow.pop %v596
        %v598 = vsel %vm571, %v597, 0.0
        %599 = vadd.xlane.f32.xlu0 %v598
        %v600 = vpop.xlane.xlu0 %599
        %v601 = vpack.c.bf16 %v597, %v597
        %v603 = vsel %vm571, %v601, 0
        %v606 = vsel %vm575, %v569, 0
        %608 = vmatpush.bf16.msra.mxu0 0
        %609 = vmatpush.bf16.msra.mxu0 0
        %610 = vmatpush.bf16.msra.mxu0 0
        %611 = vmatpush.bf16.msra.mxu0 0
        %612 = vmatpush.bf16.msra.mxu0 0
        %613 = vmatpush.bf16.msra.mxu0 0
        %614 = vmatpush.bf16.msra.mxu0 0
        %615 = vmatpush.bf16.msra.mxu0 %v606
        %616 = vmatmul.bf16.gmra.mxu0 %v603
        %v617 = vpop.f32.mrf.mxu0
        %v618 = vadd.f32 0.0, %v617
        %v619 = vpop.f32.mrf.mxu0
        %620 = vdwg.mxu0
        %v621 = vrcp.pop %v600
        %v622 = vmul.f32 %v618, %v621
        %v623 = vpack.c.bf16 %v622, %v622
        %624 = vst.msk [vmem:[#allocation5] sm:$0xf] %vm558, %v623
        %v625 = vld [vmem:[#allocation3 + $0x4] sm:$0xf]
        %v626 = vld [vmem:[#allocation4] sm:$0xf]
        %v627 = vld [vmem:[#allocation2] sm:$0xf]
        %v629 = vunpack.c.l.b16 %v627
        %v630 = vpack.c.b16 %v629, %v629
        %631 = vrot.lane.b32.xlu0 %v630, 120
        %v632 = vpop.permute.xlu0 %631
        %v634 = vsel %vm571, %v632, 0
        %v637 = vsel %vm575, %v625, 0
        %639 = vmatpush.bf16.msra.mxu0 0
        %640 = vmatpush.bf16.msra.mxu0 0
        %641 = vmatpush.bf16.msra.mxu0 0
        %642 = vmatpush.bf16.msra.mxu0 0
        %643 = vmatpush.bf16.msra.mxu0 0
        %644 = vmatpush.bf16.msra.mxu0 0
        %645 = vmatpush.bf16.msra.mxu0 0
        %646 = vmatpush.bf16.msra.mxu0 %v637
        %647 = vmatmul.bf16.gmra.mxu0 %v634
        %v648 = vpop.f32.mrf.mxu0
        %v649 = vadd.f32 0.0, %v648
        %v650 = vpop.f32.mrf.mxu0
        %651 = vdwg.mxu0
        %v652 = vsel %vm571, %v649, -inf
        %653 = vmax.xlane.f32.xlu0 %v652
        %v654 = vpop.xlane.xlu0 %653
        %v655 = vsub.f32 %v649, %v654
        %v656 = vmul.f32 %v655, 1.442695
        %v657 = vpow.pop %v656
        %v658 = vsel %vm571, %v657, 0.0
        %659 = vadd.xlane.f32.xlu0 %v658
        %v660 = vpop.xlane.xlu0 %659
        %v661 = vpack.c.bf16 %v657, %v657
        %v663 = vunpack.c.l.b16 %v626
        %v664 = vpack.c.b16 %v663, %v663
        %665 = vrot.lane.b32.xlu0 %v664, 120
        %v666 = vpop.permute.xlu0 %665
        %v668 = vsel %vm571, %v661, 0
        %v671 = vsel %vm575, %v666, 0
        %673 = vmatpush.bf16.msra.mxu0 0
        %674 = vmatpush.bf16.msra.mxu0 0
        %675 = vmatpush.bf16.msra.mxu0 0
        %676 = vmatpush.bf16.msra.mxu0 0
        %677 = vmatpush.bf16.msra.mxu0 0
        %678 = vmatpush.bf16.msra.mxu0 0
        %679 = vmatpush.bf16.msra.mxu0 0
        %680 = vmatpush.bf16.msra.mxu0 %v671
        %681 = vmatmul.bf16.gmra.mxu0 %v668
        %v682 = vpop.f32.mrf.mxu0
        %v683 = vadd.f32 0.0, %v682
        %v684 = vpop.f32.mrf.mxu0
        %685 = vdwg.mxu0
        %v686 = vrcp.pop %v660
        %v687 = vmul.f32 %v683, %v686
        %v688 = vpack.c.bf16 %v687, %v687
        %690 = vrot.lane.b32.xlu0 %v688, 8
        %v691 = vpop.permute.xlu0 %690
        %vm693 = vcmask 126016
        %694 = vst.msk [vmem:[#allocation5] sm:$0xf] %vm693, %v691
        %v695 = vld [vmem:[#allocation3 + $0x8] sm:$0xf]
        %v696 = vld [vmem:[#allocation4] sm:$0xf]
        %v697 = vld [vmem:[#allocation2] sm:$0xf]
        %v699 = vunpack.c.l.b16 %v697
        %v700 = vpack.c.b16 %v699, %v699
        %701 = vrot.lane.b32.xlu0 %v700, 112
        %v702 = vpop.permute.xlu0 %701
        %v704 = vsel %vm571, %v702, 0
        %v707 = vsel %vm575, %v695, 0
        %709 = vmatpush.bf16.msra.mxu0 0
        %710 = vmatpush.bf16.msra.mxu0 0
        %711 = vmatpush.bf16.msra.mxu0 0
        %712 = vmatpush.bf16.msra.mxu0 0
        %713 = vmatpush.bf16.msra.mxu0 0
        %714 = vmatpush.bf16.msra.mxu0 0
        %715 = vmatpush.bf16.msra.mxu0 0
        %716 = vmatpush.bf16.msra.mxu0 %v707
        %717 = vmatmul.bf16.gmra.mxu0 %v704
        %v718 = vpop.f32.mrf.mxu0
        %v719 = vadd.f32 0.0, %v718
        %v720 = vpop.f32.mrf.mxu0
        %721 = vdwg.mxu0
        %v722 = vsel %vm571, %v719, -inf
        %723 = vmax.xlane.f32.xlu0 %v722
        %v724 = vpop.xlane.xlu0 %723
        %v725 = vsub.f32 %v719, %v724
        %v726 = vmul.f32 %v725, 1.442695
        %v727 = vpow.pop %v726
        %v728 = vsel %vm571, %v727, 0.0
        %729 = vadd.xlane.f32.xlu0 %v728
        %v730 = vpop.xlane.xlu0 %729
        %v731 = vpack.c.bf16 %v727, %v727
        %v733 = vunpack.c.l.b16 %v696
        %v734 = vpack.c.b16 %v733, %v733
        %735 = vrot.lane.b32.xlu0 %v734, 112
        %v736 = vpop.permute.xlu0 %735
        %v738 = vsel %vm571, %v731, 0
        %v741 = vsel %vm575, %v736, 0
        %743 = vmatpush.bf16.msra.mxu0 0
        %744 = vmatpush.bf16.msra.mxu0 0
        %745 = vmatpush.bf16.msra.mxu0 0
        %746 = vmatpush.bf16.msra.mxu0 0
        %747 = vmatpush.bf16.msra.mxu0 0
        %748 = vmatpush.bf16.msra.mxu0 0
        %749 = vmatpush.bf16.msra.mxu0 0
        %750 = vmatpush.bf16.msra.mxu0 %v741
        %751 = vmatmul.bf16.gmra.mxu0 %v738
        %v752 = vpop.f32.mrf.mxu0
        %v753 = vadd.f32 0.0, %v752
        %v754 = vpop.f32.mrf.mxu0
        %755 = vdwg.mxu0
        %v756 = vrcp.pop %v730
        %v757 = vmul.f32 %v753, %v756
        %v758 = vpack.c.bf16 %v757, %v757
        %760 = vrot.lane.b32.xlu0 %v758, 16
        %v761 = vpop.permute.xlu0 %760
        %vm763 = vcmask 191616
        %764 = vst.msk [vmem:[#allocation5] sm:$0xf] %vm763, %v761
        %v765 = vld [vmem:[#allocation3 + $0xc] sm:$0xf]
        %v766 = vld [vmem:[#allocation4] sm:$0xf]
        %v767 = vld [vmem:[#allocation2] sm:$0xf]
        %v769 = vunpack.c.l.b16 %v767
        %v770 = vpack.c.b16 %v769, %v769
        %771 = vrot.lane.b32.xlu0 %v770, 104
        %v772 = vpop.permute.xlu0 %771
        %v774 = vsel %vm571, %v772, 0
        %v777 = vsel %vm575, %v765, 0
        %779 = vmatpush.bf16.msra.mxu0 0
        %780 = vmatpush.bf16.msra.mxu0 0
        %781 = vmatpush.bf16.msra.mxu0 0
        %782 = vmatpush.bf16.msra.mxu0 0
        %783 = vmatpush.bf16.msra.mxu0 0
        %784 = vmatpush.bf16.msra.mxu0 0
        %785 = vmatpush.bf16.msra.mxu0 0
        %786 = vmatpush.bf16.msra.mxu0 %v777
        %787 = vmatmul.bf16.gmra.mxu0 %v774
        %v788 = vpop.f32.mrf.mxu0
        %v789 = vadd.f32 0.0, %v788
        %v790 = vpop.f32.mrf.mxu0
        %791 = vdwg.mxu0
        %v792 = vsel %vm571, %v789, -inf
        %793 = vmax.xlane.f32.xlu0 %v792
        %v794 = vpop.xlane.xlu0 %793
        %v795 = vsub.f32 %v789, %v794
        %v796 = vmul.f32 %v795, 1.442695
        %v797 = vpow.pop %v796
        %v798 = vsel %vm571, %v797, 0.0
        %799 = vadd.xlane.f32.xlu0 %v798
        %v800 = vpop.xlane.xlu0 %799
        %v801 = vpack.c.bf16 %v797, %v797
        %v803 = vunpack.c.l.b16 %v766
        %v804 = vpack.c.b16 %v803, %v803
        %805 = vrot.lane.b32.xlu0 %v804, 104
        %v806 = vpop.permute.xlu0 %805
        %v808 = vsel %vm571, %v801, 0
        %v811 = vsel %vm575, %v806, 0
        %813 = vmatpush.bf16.msra.mxu0 0
        %814 = vmatpush.bf16.msra.mxu0 0
        %815 = vmatpush.bf16.msra.mxu0 0
        %816 = vmatpush.bf16.msra.mxu0 0
        %817 = vmatpush.bf16.msra.mxu0 0
        %818 = vmatpush.bf16.msra.mxu0 0
        %819 = vmatpush.bf16.msra.mxu0 0
        %820 = vmatpush.bf16.msra.mxu0 %v811
        %821 = vmatmul.bf16.gmra.mxu0 %v808
        %v822 = vpop.f32.mrf.mxu0
        %v823 = vadd.f32 0.0, %v822
        %v824 = vpop.f32.mrf.mxu0
        %825 = vdwg.mxu0
        %v826 = vrcp.pop %v800
        %v827 = vmul.f32 %v823, %v826
        %v828 = vpack.c.bf16 %v827, %v827
        %830 = vrot.lane.b32.xlu0 %v828, 24
        %v831 = vpop.permute.xlu0 %830
        %vm833 = vcmask 257216
        %834 = vst.msk [vmem:[#allocation5] sm:$0xf] %vm833, %v831
        %v835 = vld [vmem:[#allocation5] sm:$0xf]
        %v836 = vld [vmem:[%s5] sm:$0xf]
        %v837 = vld [vmem:[%s5 + $0x4] sm:$0xf]
        %v838 = vld [vmem:[%s5 + $0x8] sm:$0xf]
        %v839 = vld [vmem:[%s5 + $0xc] sm:$0xf]
        %v844 = vunpack.c.l.b16 %v836
        %v845 = vunpack.c.l.b16 %v837
        %v846 = vunpack.c.l.b16 %v838
        %v847 = vunpack.c.l.b16 %v839
        %v848 = vpack.c.b16 %v845, %v844
        %v849 = vpack.c.b16 %v847, %v846
        %v853 = vsel %vm438, %v835, 0
        %855 = vmatpush.bf16.msra.mxu0 0
        %856 = vmatpush.bf16.msra.mxu0 0
        %857 = vmatpush.bf16.msra.mxu0 0
        %858 = vmatpush.bf16.msra.mxu0 0
        %859 = vmatpush.bf16.msra.mxu0 0
        %860 = vmatpush.bf16.msra.mxu0 0
        %861 = vmatpush.bf16.msra.mxu0 %v849
        %862 = vmatpush.bf16.msra.mxu0 %v848
        %863 = vmatmul.bf16.gmra.mxu0 %v853
        %v864 = vpop.f32.mrf.mxu0
        %v865 = vadd.f32 0.0, %v864
        %v866 = vpop.f32.mrf.mxu0
        %867 = vdwg.mxu0
        %v868 = vadd.f32 %v437, %v865
        %v869 = vld [vmem:[%s6] sm:$0x1]
        %v871 = vperm.slane %v869, 0
        %v873 = vadd.f32 %v868, %v871
        %v874 = vsel %vm438, %v873, 0.0
        %875 = vadd.xlane.f32.xlu0 %v874
        %v876 = vpop.xlane.xlu0 %875
        %v877 = vmul.f32 %v876, %v448
        %v878 = vsub.f32 %v873, %v877
        %v879 = vmul.f32 %v878, %v878
        %v880 = vsel %vm438, %v879, 0.0
        %881 = vadd.xlane.f32.xlu0 %v880
        %v882 = vpop.xlane.xlu0 %881
        %v883 = vmul.f32 %v882, %v448
        %v884 = vadd.f32 %v883, 1e-05
        %v885 = vrsqrt.pop %v884
        %v886 = vmul.f32 %v885, %v884
        %v887 = vmul.f32 %v886, %v885
        %v888 = vmul.f32 0.5, %v887
        %v889 = vsub.f32 1.5, %v888
        %v890 = vmul.f32 %v885, %v889
        %vm891 = vweird.f32 %v884
        %vm892 = vweird.f32 %v885
        %vm893 = vmor %vm891, %vm892
        %v894 = vsel %vm893, %v885, %v890
        %v895 = vmul.f32 %v878, %v894
        %v896 = vld [vmem:[%s7] sm:$0x1]
        %v898 = vperm.slane %v896, 0
        %v900 = vmul.f32 %v895, %v898
        %v901 = vld [vmem:[%s8] sm:$0x1]
        %v903 = vperm.slane %v901, 0
        %v905 = vadd.f32 %v900, %v903
        %v906 = vpack.c.bf16 %v905, %v905
        %v907 = vld [vmem:[%s9] sm:$0xf]
        %v908 = vld [vmem:[%s9 + $0x4] sm:$0xf]
        %v909 = vld [vmem:[%s9 + $0x8] sm:$0xf]
        %v910 = vld [vmem:[%s9 + $0xc] sm:$0xf]
        %v911 = vld [vmem:[%s10] sm:$0x1]
        %v913 = vperm.slane %v911, 0
        %v919 = vunpack.c.l.b16 %v907
        %v920 = vunpack.c.l.b16 %v908
        %v921 = vunpack.c.l.b16 %v909
        %v922 = vunpack.c.l.b16 %v910
        %v923 = vpack.c.b16 %v920, %v919
        %v924 = vpack.c.b16 %v922, %v921
        %v928 = vsel %vm438, %v906, 0
        %930 = vmatpush.bf16.msra.mxu0 0
        %931 = vmatpush.bf16.msra.mxu0 0
        %932 = vmatpush.bf16.msra.mxu0 0
        %933 = vmatpush.bf16.msra.mxu0 0
        %934 = vmatpush.bf16.msra.mxu0 0
        %935 = vmatpush.bf16.msra.mxu0 0
        %936 = vmatpush.bf16.msra.mxu0 %v924
        %937 = vmatpush.bf16.msra.mxu0 %v923
        %938 = vmatmul.bf16.gmra.mxu0 %v928
        %v939 = vpop.f32.mrf.mxu0
        %v940 = vadd.f32 %v913, %v939
        %v941 = vpop.f32.mrf.mxu0
        %942 = vdwg.mxu0
        %v943 = vmul.f32 %v940, 1.702
        %v944 = vxor.u32 %v943, 2147483648
        %v945 = vmul.f32 %v944, 1.442695
        %v946 = vpow.pop %v945
        %v947 = vadd.f32 %v946, 1.0
        %v948 = vrcp.pop %v947
        %v949 = vmul.f32 %v947, %v948
        %v950 = vsub.f32 1.0, %v949
        %v951 = vmul.f32 %v948, %v950
        %v952 = vadd.f32 %v948, %v951
        %vm953 = vweird.f32 %v947
        %vm954 = vweird.f32 %v948
        %vm955 = vmor %vm953, %vm954
        %v956 = vsel %vm955, %v948, %v952
        %v957 = vand.u32 2147483647, %v947
        %vm958 = vcmp.eq.f32.partialorder %v957, 8.507059e+37
        %v959 = vand.u32 %v947, 2147483648
        %v960 = vor.u32 1.1754944e-38, %v959
        %v961 = vsel %vm958, %v960, %v956
        %v962 = vmul.f32 1.0, %v961
        %v963 = vmul.f32 %v940, %v962
        %v964 = vpack.c.bf16 %v963, %v963
        %v965 = vld [vmem:[%s11] sm:$0xf]
        %v966 = vld [vmem:[%s11 + $0x4] sm:$0xf]
        %v967 = vld [vmem:[%s11 + $0x8] sm:$0xf]
        %v968 = vld [vmem:[%s11 + $0xc] sm:$0xf]
        %v969 = vld [vmem:[%s11 + $0x10] sm:$0xf]
        %v970 = vld [vmem:[%s11 + $0x14] sm:$0xf]
        %v971 = vld [vmem:[%s11 + $0x18] sm:$0xf]
        %v972 = vld [vmem:[%s11 + $0x1c] sm:$0xf]
        %v973 = vld [vmem:[%s11 + $0x20] sm:$0xf]
        %v974 = vld [vmem:[%s11 + $0x24] sm:$0xf]
        %v975 = vld [vmem:[%s11 + $0x28] sm:$0xf]
        %v976 = vld [vmem:[%s11 + $0x2c] sm:$0xf]
        %v977 = vld [vmem:[%s11 + $0x30] sm:$0xf]
        %v978 = vld [vmem:[%s11 + $0x34] sm:$0xf]
        %v979 = vld [vmem:[%s11 + $0x38] sm:$0xf]
        %v980 = vld [vmem:[%s11 + $0x3c] sm:$0xf]
        %v981 = vld [vmem:[%s12] sm:$0x1]
        %v983 = vperm.slane %v981, 0
        %v1001 = vunpack.c.l.b16 %v965
        %v1002 = vunpack.c.l.b16 %v966
        %v1003 = vunpack.c.l.b16 %v967
        %v1004 = vunpack.c.l.b16 %v968
        %v1005 = vunpack.c.l.b16 %v969
        %v1006 = vunpack.c.l.b16 %v970
        %v1007 = vunpack.c.l.b16 %v971
        %v1008 = vunpack.c.l.b16 %v972
        %v1009 = vunpack.c.l.b16 %v973
        %v1010 = vunpack.c.l.b16 %v974
        %v1011 = vunpack.c.l.b16 %v975
        %v1012 = vunpack.c.l.b16 %v976
        %v1013 = vunpack.c.l.b16 %v977
        %v1014 = vunpack.c.l.b16 %v978
        %v1015 = vunpack.c.l.b16 %v979
        %v1016 = vunpack.c.l.b16 %v980
        %v1017 = vpack.c.b16 %v1002, %v1001
        %v1018 = vpack.c.b16 %v1004, %v1003
        %v1019 = vpack.c.b16 %v1006, %v1005
        %v1020 = vpack.c.b16 %v1008, %v1007
        %v1021 = vpack.c.b16 %v1010, %v1009
        %v1022 = vpack.c.b16 %v1012, %v1011
        %v1023 = vpack.c.b16 %v1014, %v1013
        %v1024 = vpack.c.b16 %v1016, %v1015
        %1033 = vmatpush.bf16.msra.mxu0 %v1024
        %1034 = vmatpush.bf16.msra.mxu0 %v1023
        %1035 = vmatpush.bf16.msra.mxu0 %v1022
        %1036 = vmatpush.bf16.msra.mxu0 %v1021
        %1037 = vmatpush.bf16.msra.mxu0 %v1020
        %1038 = vmatpush.bf16.msra.mxu0 %v1019
        %1039 = vmatpush.bf16.msra.mxu0 %v1018
        %1040 = vmatpush.bf16.msra.mxu0 %v1017
        %1041 = vmatmul.bf16.gmra.mxu0 %v964
        %v1042 = vpop.f32.mrf.mxu0
        %v1043 = vadd.f32 %v983, %v1042
        %v1044 = vpop.f32.mrf.mxu0
        %1045 = vdwg.mxu0
        %v1046 = vadd.f32 %v873, %v1043
        %1047 = vst.msk [vmem:[%s431] sm:$0xff] %vm438, %v1046
        %s1048 = sand.u32 %s313, 1
        %s1049 = scalar_lea.sflag [#allocation7], %s1048
        %s1050 = sand.u32 %s313, 1
        %s1051 = smul.addr %s1050, 8
        %s1052 = scalar_lea.vmem [#allocation6], %s1051
        // Predicated region
        $region73: #{tpu_custom_call.1} parent=71 // pred_check
          %p1053 = pneg %p323
        $region74: #{tpu_custom_call.1} parent=71 // pred_check_branch
          %1055 = sbr.rel (%p1053) target = $region76
        $region75: #{tpu_custom_call.1} parent=71 // pred_region
          %1057 = vsyncadd %s1049, 0
          %s1058 = smul.addr %s27, 8
          %s1059 = scalar_lea.hbm %s13, %s1058
          %s1061 = sshll.u32 %s1052, 4
          %s1062 = int_to_ptr.vmem [resolvable:$true] %s1061
          %s1063 = sshll.u32 %s1059, 4
          %s1064 = int_to_ptr.hbm [resolvable:$true] %s1063
          %1066 = dma.vmem_to_hbm [thread:$0]  %s1062, 128, %s1064, %s1049
        $region76: #{tpu_custom_call.1} parent=71 // pred_fallthru
          _
      $region72: #{tpu_custom_call.1} parent=5 // pred_fallthru
        _
      %p1067 = scmp.le.s32.totalorder 2, %s22
      // Predicated region
      $region77: #{tpu_custom_call.1} parent=5 // pred_check
        %p1068 = pneg %p1067
      $region78: #{tpu_custom_call.1} parent=5 // pred_check_branch
        %1070 = sbr.rel (%p1068) target = $region80
      $region79: #{tpu_custom_call.1} parent=5 // pred_region
        %s1071 = ssub.s32 %s22, 2
        // Predicated region
        $region81: #{tpu_custom_call.1} parent=79 // pred_check
          %p1072 = pneg %p329
        $region82: #{tpu_custom_call.1} parent=79 // pred_check_branch
          %1074 = sbr.rel (%p1072) target = $region84
        $region83: #{tpu_custom_call.1} parent=79 // pred_region
          %s1075 = sand.u32 %s314, 1
          %s1076 = scalar_lea.sflag [#allocation7], %s1075
          %s1077 = sand.u32 %s314, 1
          %s1078 = smul.addr %s1077, 8
          %s1079 = scalar_lea.vmem [#allocation6], %s1078
          %1081 = dma.done %s1076, 128
        $region84: #{tpu_custom_call.1} parent=79 // pred_fallthru
          _
      $region80: #{tpu_custom_call.1} parent=5 // pred_fallthru
        _
    $region6: #{tpu_custom_call.1} parent=1 // loop_footer
      %s26 = sadd.s32 1, %s22
    $region7: #{tpu_custom_call.1} parent=1 // loop_footer_branch
      %21 = sbr.rel target = $region3
    $region8: #{tpu_custom_call.1} parent=1 // loop_exit
      _
    %1082 = vsyncpa [#allocation7], 1
    %s1083 = scalar_lea.sflag [#allocation7], 1
    %1084 = vsyncpa %s1083, 1

// kernel: tpu_custom_call.1
$region0: #{tpu_custom_call.1}
  #allocation0 [shape = 'u32[]', space=smem, size = 0x4, offset = 0x4, fixed_abs, tag = 'smem constant byte address 0x4 - core index']
  #allocation1 [shape = 'u32[72,128]{1,0:T(1,128)}', space=vmem, size = 0x9000, scoped, tag = 'internal scratch']
  #allocation2 [shape = 'bf16[8,32]{1,0:T(8,128)(2,1)}', space=vmem, size = 0x800, scoped, tag = 'scratch operand']
  #allocation3 [shape = 'bf16[32,8]{1,0:T(8,128)(2,1)}', space=vmem, size = 0x2000, scoped, tag = 'scratch operand']
  #allocation4 [shape = 'bf16[8,32]{1,0:T(8,128)(2,1)}', space=vmem, size = 0x800, scoped, tag = 'scratch operand']
  #allocation5 [shape = 'bf16[8,32]{1,0:T(8,128)(2,1)}', space=vmem, size = 0x800, scoped, tag = 'scratch operand']
  %s0 = inlined_call_operand.vmem [shape: f32[2,8,32], index: 0, kind: input, shape index: {}]
  %s1 = inlined_call_operand.vmem [shape: f32[1,32], index: 1, kind: input, shape index: {}]
  %s2 = inlined_call_operand.vmem [shape: f32[1,32], index: 2, kind: input, shape index: {}]
  %s3 = inlined_call_operand.vmem [shape: bf16[32,96], index: 3, kind: input, shape index: {}]
  %s4 = inlined_call_operand.vmem [shape: f32[1,96], index: 4, kind: input, shape index: {}]
  %s5 = inlined_call_operand.vmem [shape: bf16[32,32], index: 5, kind: input, shape index: {}]
  %s6 = inlined_call_operand.vmem [shape: f32[1,32], index: 6, kind: input, shape index: {}]
  %s7 = inlined_call_operand.vmem [shape: f32[1,32], index: 7, kind: input, shape index: {}]
  %s8 = inlined_call_operand.vmem [shape: f32[1,32], index: 8, kind: input, shape index: {}]
  %s9 = inlined_call_operand.vmem [shape: bf16[32,128], index: 9, kind: input, shape index: {}]
  %s10 = inlined_call_operand.vmem [shape: f32[1,128], index: 10, kind: input, shape index: {}]
  %s11 = inlined_call_operand.vmem [shape: bf16[128,32], index: 11, kind: input, shape index: {}]
  %s12 = inlined_call_operand.vmem [shape: f32[1,32], index: 12, kind: input, shape index: {}]
  %s13 = inlined_call_operand.hbm [shape: f32[2,8,32], index: 13, kind: output, shape index: {}]
  %s14 = sld [smem:[#allocation0]]
  $region85: #{tpu_custom_call.1} parent=0
    _
  %s16 = ssub.s32 1, %s14
  %s17 = scalar_select 0, %s16, %s14
  $region1: #{tpu_custom_call.1} parent=0
    #allocation6 [shape = 'u8[8192]{0}', space=vmem, size = 0x2000, scoped, tag = 'output window, operand 0']
    #allocation7 [shape = 's32[2]{0}', space=sflag, size = 0x8, scoped, tag = 'scoped memory for tpu_custom_call.1']
    %18 = vsyncpa [#allocation7], 0
    %s19 = scalar_lea.sflag [#allocation7], 1
    %20 = vsyncpa %s19, 0
    loop: start=0, step=1, limit=4
    $region2: #{tpu_custom_call.1} parent=1 // loop_pre_header
      _
    $region3: #{tpu_custom_call.1} parent=1 // loop_header
      %s22 = sphi 0, %s26
      %p23 = scmp.ge.s32.totalorder %s22, 4
      %s32 = sphi 0, %s34
      %s35 = sphi 0, %s32
      %s36 = sphi 0, %s35
      %s52 = sphi 0, %s36
      %s56 = sphi 0, %s56
      %s58 = sphi 0, %s56
      %s59 = sphi 0, %s58
      %s73 = sphi 0, %s59
      %s77 = sphi 0, %s77
      %s79 = sphi 0, %s77
      %s80 = sphi 0, %s79
      %s94 = sphi 0, %s80
      %s98 = sphi 0, %s98
      %s100 = sphi 0, %s98
      %s101 = sphi 0, %s100
      %s115 = sphi 0, %s101
      %s119 = sphi 0, %s119
      %s121 = sphi 0, %s119
      %s122 = sphi 0, %s121
      %s136 = sphi 0, %s122
      %s140 = sphi 0, %s140
      %s142 = sphi 0, %s140
      %s143 = sphi 0, %s142
      %s157 = sphi 0, %s143
      %s161 = sphi 0, %s161
      %s163 = sphi 0, %s161
      %s164 = sphi 0, %s163
      %s178 = sphi 0, %s164
      %s182 = sphi 0, %s182
      %s184 = sphi 0, %s182
      %s185 = sphi 0, %s184
      %s199 = sphi 0, %s185
      %s203 = sphi 0, %s203
      %s205 = sphi 0, %s203
      %s206 = sphi 0, %s205
      %s220 = sphi 0, %s206
      %s224 = sphi 0, %s224
      %s226 = sphi 0, %s224
      %s227 = sphi 0, %s226
      %s241 = sphi 0, %s227
      %s245 = sphi 0, %s245
      %s247 = sphi 0, %s245
      %s248 = sphi 0, %s247
      %s262 = sphi 0, %s248
      %s266 = sphi 0, %s266
      %s268 = sphi 0, %s266
      %s269 = sphi 0, %s268
      %s283 = sphi 0, %s269
      %s287 = sphi 0, %s287
      %s289 = sphi 0, %s287
      %s290 = sphi 0, %s289
      %s304 = sphi 0, %s290
      %s310 = sphi 0, %s312
      %s313 = sphi 0, %s310
      %s314 = sphi 0, %s313
      %s330 = sphi 0, %s314
    $region4: #{tpu_custom_call.1} parent=1 // loop_header_branch
      %25 = sbr.rel (%p23) target = $region8
    $region5: #{tpu_custom_call.1} parent=1 // loop_body
      %s27 = ssub.s32 %s22, 1
      %s28 = ssub.s32 %s22, 2
      %s29 = sadd.s32 %s22, 1
      %s30 = ssub.s32 %s22, %s29
      %p31 = scmp.eq.s32.totalorder %s30, 0
      %s33 = sadd.s32 %s32, 1
      %s34 = scalar_select %p31, %s32, %s33
      %p37 = pneg %p31
      %p38 = scmp.eq.s32.totalorder %s22, 1
      %p39 = por %p37, %p38
      %p40 = scmp.ne.s32.totalorder %s32, %s35
      %p41 = scmp.eq.s32.totalorder %s22, 0
      %p42 = por %p40, %p41
      %p43 = scmp.ne.s32.totalorder %s32, %s35
      %p44 = scmp.eq.s32.totalorder %s27, 1
      %p45 = por %p43, %p44
      %p46 = scmp.ne.s32.totalorder %s35, %s36
      %p47 = scmp.eq.s32.totalorder %s27, 0
      %p48 = por %p46, %p47
      %p49 = scmp.ne.s32.totalorder %s35, %s36
      %p50 = scmp.eq.s32.totalorder %s28, 1
      %p51 = por %p49, %p50
      %p53 = scmp.ne.s32.totalorder %s36, %s52
      %p54 = scmp.eq.s32.totalorder %s28, 0
      %p55 = por %p53, %p54
      %s57 = sadd.s32 %s56, 1
      %p60 = scmp.eq.s32.totalorder %s22, 1
      %p61 = scmp.ne.s32.totalorder %s56, %s58
      %p62 = scmp.eq.s32.totalorder %s22, 0
      %p63 = por %p61, %p62
      %p64 = scmp.ne.s32.totalorder %s56, %s58
      %p65 = scmp.eq.s32.totalorder %s27, 1
      %p66 = por %p64, %p65
      %p67 = scmp.ne.s32.totalorder %s58, %s59
      %p68 = scmp.eq.s32.totalorder %s27, 0
      %p69 = por %p67, %p68
      %p70 = scmp.ne.s32.totalorder %s58, %s59
      %p71 = scmp.eq.s32.totalorder %s28, 1
      %p72 = por %p70, %p71
      %p74 = scmp.ne.s32.totalorder %s59, %s73
      %p75 = scmp.eq.s32.totalorder %s28, 0
      %p76 = por %p74, %p75
      %s78 = sadd.s32 %s77, 1
      %p81 = scmp.eq.s32.totalorder %s22, 1
      %p82 = scmp.ne.s32.totalorder %s77, %s79
      %p83 = scmp.eq.s32.totalorder %s22, 0
      %p84 = por %p82, %p83
      %p85 = scmp.ne.s32.totalorder %s77, %s79
      %p86 = scmp.eq.s32.totalorder %s27, 1
      %p87 = por %p85, %p86
      %p88 = scmp.ne.s32.totalorder %s79, %s80
      %p89 = scmp.eq.s32.totalorder %s27, 0
      %p90 = por %p88, %p89
      %p91 = scmp.ne.s32.totalorder %s79, %s80
      %p92 = scmp.eq.s32.totalorder %s28, 1
      %p93 = por %p91, %p92
      %p95 = scmp.ne.s32.totalorder %s80, %s94
      %p96 = scmp.eq.s32.totalorder %s28, 0
      %p97 = por %p95, %p96
      %s99 = sadd.s32 %s98, 1
      %p102 = scmp.eq.s32.totalorder %s22, 1
      %p103 = scmp.ne.s32.totalorder %s98, %s100
      %p104 = scmp.eq.s32.totalorder %s22, 0
      %p105 = por %p103, %p104
      %p106 = scmp.ne.s32.totalorder %s98, %s100
      %p107 = scmp.eq.s32.totalorder %s27, 1
      %p108 = por %p106, %p107
      %p109 = scmp.ne.s32.totalorder %s100, %s101
      %p110 = scmp.eq.s32.totalorder %s27, 0
      %p111 = por %p109, %p110
      %p112 = scmp.ne.s32.totalorder %s100, %s101
      %p113 = scmp.eq.s32.totalorder %s28, 1
      %p114 = por %p112, %p113
      %p116 = scmp.ne.s32.totalorder %s101, %s115
      %p117 = scmp.eq.s32.totalorder %s28, 0
      %p118 = por %p116, %p117
      %s120 = sadd.s32 %s119, 1
      %p123 = scmp.eq.s32.totalorder %s22, 1
      %p124 = scmp.ne.s32.totalorder %s119, %s121
      %p125 = scmp.eq.s32.totalorder %s22, 0
      %p126 = por %p124, %p125
      %p127 = scmp.ne.s32.totalorder %s119, %s121
      %p128 = scmp.eq.s32.totalorder %s27, 1
      %p129 = por %p127, %p128
      %p130 = scmp.ne.s32.totalorder %s121, %s122
      %p131 = scmp.eq.s32.totalorder %s27, 0
      %p132 = por %p130, %p131
      %p133 = scmp.ne.s32.totalorder %s121, %s122
      %p134 = scmp.eq.s32.totalorder %s28, 1
      %p135 = por %p133, %p134
      %p137 = scmp.ne.s32.totalorder %s122, %s136
      %p138 = scmp.eq.s32.totalorder %s28, 0
      %p139 = por %p137, %p138
      %s141 = sadd.s32 %s140, 1
      %p144 = scmp.eq.s32.totalorder %s22, 1
      %p145 = scmp.ne.s32.totalorder %s140, %s142
      %p146 = scmp.eq.s32.totalorder %s22, 0
      %p147 = por %p145, %p146
      %p148 = scmp.ne.s32.totalorder %s140, %s142
      %p149 = scmp.eq.s32.totalorder %s27, 1
      %p150 = por %p148, %p149
      %p151 = scmp.ne.s32.totalorder %s142, %s143
      %p152 = scmp.eq.s32.totalorder %s27, 0
      %p153 = por %p151, %p152
      %p154 = scmp.ne.s32.totalorder %s142, %s143
      %p155 = scmp.eq.s32.totalorder %s28, 1
      %p156 = por %p154, %p155
      %p158 = scmp.ne.s32.totalorder %s143, %s157
      %p159 = scmp.eq.s32.totalorder %s28, 0
      %p160 = por %p158, %p159
      %s162 = sadd.s32 %s161, 1
      %p165 = scmp.eq.s32.totalorder %s22, 1
      %p166 = scmp.ne.s32.totalorder %s161, %s163
      %p167 = scmp.eq.s32.totalorder %s22, 0
      %p168 = por %p166, %p167
      %p169 = scmp.ne.s32.totalorder %s161, %s163
      %p170 = scmp.eq.s32.totalorder %s27, 1
      %p171 = por %p169, %p170
      %p172 = scmp.ne.s32.totalorder %s163, %s164
      %p173 = scmp.eq.s32.totalorder %s27, 0
      %p174 = por %p172, %p173
      %p175 = scmp.ne.s32.totalorder %s163, %s164
      %p176 = scmp.eq.s32.totalorder %s28, 1
      %p177 = por %p175, %p176
      %p179 = scmp.ne.s32.totalorder %s164, %s178
      %p180 = scmp.eq.s32.totalorder %s28, 0
      %p181 = por %p179, %p180
      %s183 = sadd.s32 %s182, 1
      %p186 = scmp.eq.s32.totalorder %s22, 1
      %p187 = scmp.ne.s32.totalorder %s182, %s184
      %p188 = scmp.eq.s32.totalorder %s22, 0
      %p189 = por %p187, %p188
      %p190 = scmp.ne.s32.totalorder %s182, %s184
      %p191 = scmp.eq.s32.totalorder %s27, 1
      %p192 = por %p190, %p191
      %p193 = scmp.ne.s32.totalorder %s184, %s185
      %p194 = scmp.eq.s32.totalorder %s27, 0
      %p195 = por %p193, %p194
      %p196 = scmp.ne.s32.totalorder %s184, %s185
      %p197 = scmp.eq.s32.totalorder %s28, 1
      %p198 = por %p196, %p197
      %p200 = scmp.ne.s32.totalorder %s185, %s199
      %p201 = scmp.eq.s32.totalorder %s28, 0
      %p202 = por %p200, %p201
      %s204 = sadd.s32 %s203, 1
      %p207 = scmp.eq.s32.totalorder %s22, 1
      %p208 = scmp.ne.s32.totalorder %s203, %s205
      %p209 = scmp.eq.s32.totalorder %s22, 0
      %p210 = por %p208, %p209
      %p211 = scmp.ne.s32.totalorder %s203, %s205
      %p212 = scmp.eq.s32.totalorder %s27, 1
      %p213 = por %p211, %p212
      %p214 = scmp.ne.s32.totalorder %s205, %s206
      %p215 = scmp.eq.s32.totalorder %s27, 0
      %p216 = por %p214, %p215
      %p217 = scmp.ne.s32.totalorder %s205, %s206
      %p218 = scmp.eq.s32.totalorder %s28, 1
      %p219 = por %p217, %p218
      %p221 = scmp.ne.s32.totalorder %s206, %s220
      %p222 = scmp.eq.s32.totalorder %s28, 0
      %p223 = por %p221, %p222
      %s225 = sadd.s32 %s224, 1
      %p228 = scmp.eq.s32.totalorder %s22, 1
      %p229 = scmp.ne.s32.totalorder %s224, %s226
      %p230 = scmp.eq.s32.totalorder %s22, 0
      %p231 = por %p229, %p230
      %p232 = scmp.ne.s32.totalorder %s224, %s226
      %p233 = scmp.eq.s32.totalorder %s27, 1
      %p234 = por %p232, %p233
      %p235 = scmp.ne.s32.totalorder %s226, %s227
      %p236 = scmp.eq.s32.totalorder %s27, 0
      %p237 = por %p235, %p236
      %p238 = scmp.ne.s32.totalorder %s226, %s227
      %p239 = scmp.eq.s32.totalorder %s28, 1
      %p240 = por %p238, %p239
      %p242 = scmp.ne.s32.totalorder %s227, %s241
      %p243 = scmp.eq.s32.totalorder %s28, 0
      %p244 = por %p242, %p243
      %s246 = sadd.s32 %s245, 1
      %p249 = scmp.eq.s32.totalorder %s22, 1
      %p250 = scmp.ne.s32.totalorder %s245, %s247
      %p251 = scmp.eq.s32.totalorder %s22, 0
      %p252 = por %p250, %p251
      %p253 = scmp.ne.s32.totalorder %s245, %s247
      %p254 = scmp.eq.s32.totalorder %s27, 1
      %p255 = por %p253, %p254
      %p256 = scmp.ne.s32.totalorder %s247, %s248
      %p257 = scmp.eq.s32.totalorder %s27, 0
      %p258 = por %p256, %p257
      %p259 = scmp.ne.s32.totalorder %s247, %s248
      %p260 = scmp.eq.s32.totalorder %s28, 1
      %p261 = por %p259, %p260
      %p263 = scmp.ne.s32.totalorder %s248, %s262
      %p264 = scmp.eq.s32.totalorder %s28, 0
      %p265 = por %p263, %p264
      %s267 = sadd.s32 %s266, 1
      %p270 = scmp.eq.s32.totalorder %s22, 1
      %p271 = scmp.ne.s32.totalorder %s266, %s268
      %p272 = scmp.eq.s32.totalorder %s22, 0
      %p273 = por %p271, %p272
      %p274 = scmp.ne.s32.totalorder %s266, %s268
      %p275 = scmp.eq.s32.totalorder %s27, 1
      %p276 = por %p274, %p275
      %p277 = scmp.ne.s32.totalorder %s268, %s269
      %p278 = scmp.eq.s32.totalorder %s27, 0
      %p279 = por %p277, %p278
      %p280 = scmp.ne.s32.totalorder %s268, %s269
      %p281 = scmp.eq.s32.totalorder %s28, 1
      %p282 = por %p280, %p281
      %p284 = scmp.ne.s32.totalorder %s269, %s283
      %p285 = scmp.eq.s32.totalorder %s28, 0
      %p286 = por %p284, %p285
      %s288 = sadd.s32 %s287, 1
      %p291 = scmp.eq.s32.totalorder %s22, 1
      %p292 = scmp.ne.s32.totalorder %s287, %s289
      %p293 = scmp.eq.s32.totalorder %s22, 0
      %p294 = por %p292, %p293
      %p295 = scmp.ne.s32.totalorder %s287, %s289
      %p296 = scmp.eq.s32.totalorder %s27, 1
      %p297 = por %p295, %p296
      %p298 = scmp.ne.s32.totalorder %s289, %s290
      %p299 = scmp.eq.s32.totalorder %s27, 0
      %p300 = por %p298, %p299
      %p301 = scmp.ne.s32.totalorder %s289, %s290
      %p302 = scmp.eq.s32.totalorder %s28, 1
      %p303 = por %p301, %p302
      %p305 = scmp.ne.s32.totalorder %s290, %s304
      %p306 = scmp.eq.s32.totalorder %s28, 0
      %p307 = por %p305, %p306
      %s308 = ssub.s32 %s22, %s29
      %p309 = scmp.eq.s32.totalorder %s308, 0
      %s311 = sadd.s32 %s310, 1
      %s312 = scalar_select %p309, %s310, %s311
      %p315 = pneg %p309
      %p316 = scmp.eq.s32.totalorder %s22, 1
      %p317 = por %p315, %p316
      %p318 = scmp.ne.s32.totalorder %s310, %s313
      %p319 = scmp.eq.s32.totalorder %s22, 0
      %p320 = por %p318, %p319
      %p321 = scmp.ne.s32.totalorder %s310, %s313
      %p322 = scmp.eq.s32.totalorder %s27, 1
      %p323 = por %p321, %p322
      %p324 = scmp.ne.s32.totalorder %s313, %s314
      %p325 = scmp.eq.s32.totalorder %s27, 0
      %p326 = por %p324, %p325
      %p327 = scmp.ne.s32.totalorder %s313, %s314
      %p328 = scmp.eq.s32.totalorder %s28, 1
      %p329 = por %p327, %p328
      %p331 = scmp.ne.s32.totalorder %s314, %s330
      %p332 = scmp.eq.s32.totalorder %s28, 0
      %p333 = por %p331, %p332
      %p334 = scmp.le.s32.totalorder 1, %s22
      %p335 = scmp.lt.s32.totalorder %s22, 3
      %p336 = pnand %p334, %p335
      %p337 = pneg %p336
      // Predicated region
      $region9: #{tpu_custom_call.1} parent=5 // pred_check
        _
      $region10: #{tpu_custom_call.1} parent=5 // pred_check_branch
        %339 = sbr.rel (%p336) target = $region12
      $region11: #{tpu_custom_call.1} parent=5 // pred_region
        %s340 = ssub.s32 %s22, 1
        // Predicated region
        $region13: #{tpu_custom_call.1} parent=11 // pred_check
          %p341 = pneg %p69
        $region14: #{tpu_custom_call.1} parent=11 // pred_check_branch
          %343 = sbr.rel (%p341) target = $region16
        $region15: #{tpu_custom_call.1} parent=11 // pred_region
          _
        $region16: #{tpu_custom_call.1} parent=11 // pred_fallthru
          _
        // Predicated region
        $region17: #{tpu_custom_call.1} parent=11 // pred_check
          %p344 = pneg %p90
        $region18: #{tpu_custom_call.1} parent=11 // pred_check_branch
          %346 = sbr.rel (%p344) target = $region20
        $region19: #{tpu_custom_call.1} parent=11 // pred_region
          _
        $region20: #{tpu_custom_call.1} parent=11 // pred_fallthru
          _
        // Predicated region
        $region21: #{tpu_custom_call.1} parent=11 // pred_check
          %p347 = pneg %p111
        $region22: #{tpu_custom_call.1} parent=11 // pred_check_branch
          %349 = sbr.rel (%p347) target = $region24
        $region23: #{tpu_custom_call.1} parent=11 // pred_region
          _
        $region24: #{tpu_custom_call.1} parent=11 // pred_fallthru
          _
        // Predicated region
        $region25: #{tpu_custom_call.1} parent=11 // pred_check
          %p350 = pneg %p132
        $region26: #{tpu_custom_call.1} parent=11 // pred_check_branch
          %352 = sbr.rel (%p350) target = $region28
        $region27: #{tpu_custom_call.1} parent=11 // pred_region
          _
        $region28: #{tpu_custom_call.1} parent=11 // pred_fallthru
          _
        // Predicated region
        $region29: #{tpu_custom_call.1} parent=11 // pred_check
          %p353 = pneg %p153
        $region30: #{tpu_custom_call.1} parent=11 // pred_check_branch
          %355 = sbr.rel (%p353) target = $region32
        $region31: #{tpu_custom_call.1} parent=11 // pred_region
          _
        $region32: #{tpu_custom_call.1} parent=11 // pred_fallthru
          _
        // Predicated region
        $region33: #{tpu_custom_call.1} parent=11 // pred_check
          %p356 = pneg %p174
        $region34: #{tpu_custom_call.1} parent=11 // pred_check_branch
          %358 = sbr.rel (%p356) target = $region36
        $region35: #{tpu_custom_call.1} parent=11 // pred_region
          _
        $region36: #{tpu_custom_call.1} parent=11 // pred_fallthru
          _
        // Predicated region
        $region37: #{tpu_custom_call.1} parent=11 // pred_check
          %p359 = pneg %p195
        $region38: #{tpu_custom_call.1} parent=11 // pred_check_branch
          %361 = sbr.rel (%p359) target = $region40
        $region39: #{tpu_custom_call.1} parent=11 // pred_region
          _
        $region40: #{tpu_custom_call.1} parent=11 // pred_fallthru
          _
        // Predicated region
        $region41: #{tpu_custom_call.1} parent=11 // pred_check
          %p362 = pneg %p216
        $region42: #{tpu_custom_call.1} parent=11 // pred_check_branch
          %364 = sbr.rel (%p362) target = $region44
        $region43: #{tpu_custom_call.1} parent=11 // pred_region
          _
        $region44: #{tpu_custom_call.1} parent=11 // pred_fallthru
          _
        // Predicated region
        $region45: #{tpu_custom_call.1} parent=11 // pred_check
          %p365 = pneg %p237
        $region46: #{tpu_custom_call.1} parent=11 // pred_check_branch
          %367 = sbr.rel (%p365) target = $region48
        $region47: #{tpu_custom_call.1} parent=11 // pred_region
          _
        $region48: #{tpu_custom_call.1} parent=11 // pred_fallthru
          _
        // Predicated region
        $region49: #{tpu_custom_call.1} parent=11 // pred_check
          %p368 = pneg %p258
        $region50: #{tpu_custom_call.1} parent=11 // pred_check_branch
          %370 = sbr.rel (%p368) target = $region52
        $region51: #{tpu_custom_call.1} parent=11 // pred_region
          _
        $region52: #{tpu_custom_call.1} parent=11 // pred_fallthru
          _
        // Predicated region
        $region53: #{tpu_custom_call.1} parent=11 // pred_check
          %p371 = pneg %p279
        $region54: #{tpu_custom_call.1} parent=11 // pred_check_branch
          %373 = sbr.rel (%p371) target = $region56
        $region55: #{tpu_custom_call.1} parent=11 // pred_region
          _
        $region56: #{tpu_custom_call.1} parent=11 // pred_fallthru
          _
        // Predicated region
        $region57: #{tpu_custom_call.1} parent=11 // pred_check
          %p374 = pneg %p300
        $region58: #{tpu_custom_call.1} parent=11 // pred_check_branch
          %376 = sbr.rel (%p374) target = $region60
        $region59: #{tpu_custom_call.1} parent=11 // pred_region
          _
        $region60: #{tpu_custom_call.1} parent=11 // pred_fallthru
          _
      $region12: #{tpu_custom_call.1} parent=5 // pred_fallthru
        _
      %p377 = scmp.lt.s32.totalorder %s22, 2
      // Predicated region
      $region61: #{tpu_custom_call.1} parent=5 // pred_check
        %p378 = pneg %p377
      $region62: #{tpu_custom_call.1} parent=5 // pred_check_branch
        %380 = sbr.rel (%p378) target = $region64
      $region63: #{tpu_custom_call.1} parent=5 // pred_region
        // Predicated region
        $region65: #{tpu_custom_call.1} parent=63 // pred_check
          %p381 = pneg %p42
        $region66: #{tpu_custom_call.1} parent=63 // pred_check_branch
          %383 = sbr.rel (%p381) target = $region68
        $region67: #{tpu_custom_call.1} parent=63 // pred_region
          %p384 = scmp.lt.s32.totalorder %s22, 1
          %s385 = scalar_select %p384, %s22, 1
          %s386 = smul.addr %s385, 8
          %s387 = scalar_lea.vmem %s0, %s386
        $region68: #{tpu_custom_call.1} parent=63 // pred_fallthru
          _
      $region64: #{tpu_custom_call.1} parent=5 // pred_fallthru
        _
      %p388 = scmp.le.s32.totalorder 1, %s22
      %p389 = scmp.lt.s32.totalorder %s22, 3
      %p390 = pnand %p388, %p389
      %p391 = pneg %p390
      // Predicated region
      $region69: #{tpu_custom_call.1} parent=5 // pred_check
        _
      $region70: #{tpu_custom_call.1} parent=5 // pred_check_branch
        %393 = sbr.rel (%p390) target = $region72
      $region71: #{tpu_custom_call.1} parent=5 // pred_region
        %s394 = ssub.s32 %s22, 1
        %p395 = scmp.lt.s32.totalorder %s27, 1
        %s396 = scalar_select %p395, %s27, 1
        %s397 = smul.addr %s396, 8
        %s398 = scalar_lea.vmem %s0, %s397
        %p399 = pneg %p48
        %p400 = pneg %p45
        %p401 = pneg %p69
        %p402 = pneg %p66
        %p403 = pneg %p90
        %p404 = pneg %p87
        %p405 = pneg %p111
        %p406 = pneg %p108
        %p407 = pneg %p132
        %p408 = pneg %p129
        %p409 = pneg %p153
        %p410 = pneg %p150
        %p411 = pneg %p174
        %p412 = pneg %p171
        %p413 = pneg %p195
        %p414 = pneg %p192
        %p415 = pneg %p216
        %p416 = pneg %p213
        %p417 = pneg %p237
        %p418 = pneg %p234
        %p419 = pneg %p258
        %p420 = pneg %p255
        %p421 = pneg %p279
        %p422 = pneg %p276
        %p423 = pneg %p300
        %p424 = pneg %p297
        %p425 = pneg %p326
        %p426 = pneg %p323
        %s427 = sand.u32 %s313, 1
        %s428 = scalar_lea.sflag [#allocation7], %s427
        %s429 = sand.u32 %s313, 1
        %s430 = smul.addr %s429, 8
        %s431 = scalar_lea.vmem [#allocation6], %s430
        %p432 = scmp.lt.s32.totalorder %s27, 1
        %s433 = scalar_select %p432, %s27, 1
        %s434 = smul.addr %s433, 8
        %s435 = scalar_lea.vmem %s0, %s434
        %v437 = vld [vmem:[%s435] sm:$0xff]
        %vm438 = vcmask 261120
        %v439 = vsel %vm438, %v437, 0.0
        %440 = vadd.xlane.f32.xlu0 %v439
        %v441 = vpop.xlane.xlu0 %440
        %v442 = vrcp.pop 32.0
        %v443 = vmul.f32 32.0, %v442
        %v444 = vsub.f32 1.0, %v443
        %v445 = vmul.f32 %v442, %v444
        %v446 = vadd.f32 %v442, %v445
        %vm447 = vweird.f32 %v442
        %v448 = vsel %vm447, %v442, %v446
        %v449 = vmul.f32 %v441, %v448
        %v450 = vsub.f32 %v437, %v449
        %v451 = vmul.f32 %v450, %v450
        %v452 = vsel %vm438, %v451, 0.0
        %453 = vadd.xlane.f32.xlu0 %v452
        %v454 = vpop.xlane.xlu0 %453
        %v455 = vmul.f32 %v454, %v448
        %v456 = vadd.f32 %v455, 1e-05
        %v457 = vrsqrt.pop %v456
        %v458 = vmul.f32 %v457, %v456
        %v459 = vmul.f32 %v458, %v457
        %v460 = vmul.f32 0.5, %v459
        %v461 = vsub.f32 1.5, %v460
        %v462 = vmul.f32 %v457, %v461
        %vm463 = vweird.f32 %v456
        %vm464 = vweird.f32 %v457
        %vm465 = vmor %vm463, %vm464
        %v466 = vsel %vm465, %v457, %v462
        %v467 = vmul.f32 %v450, %v466
        %v468 = vld [vmem:[%s1] sm:$0x1]
        %v470 = vperm.slane %v468, 0
        %v472 = vmul.f32 %v467, %v470
        %v473 = vld [vmem:[%s2] sm:$0x1]
        %v475 = vperm.slane %v473, 0
        %v477 = vadd.f32 %v472, %v475
        %v478 = vpack.c.bf16 %v477, %v477
        %v479 = vld [vmem:[%s3] sm:$0xf]
        %v480 = vld [vmem:[%s3 + $0x4] sm:$0xf]
        %v481 = vld [vmem:[%s3 + $0x8] sm:$0xf]
        %v482 = vld [vmem:[%s3 + $0xc] sm:$0xf]
        %v483 = vld [vmem:[%s4] sm:$0x1]
        %v485 = vperm.slane %v483, 0
        %v491 = vunpack.c.l.b16 %v479
        %v492 = vunpack.c.l.b16 %v480
        %v493 = vunpack.c.l.b16 %v481
        %v494 = vunpack.c.l.b16 %v482
        %v495 = vpack.c.b16 %v492, %v491
        %v496 = vpack.c.b16 %v494, %v493
        %v500 = vsel %vm438, %v478, 0
        %502 = vmatpush.bf16.msra.mxu0 0
        %503 = vmatpush.bf16.msra.mxu0 0
        %504 = vmatpush.bf16.msra.mxu0 0
        %505 = vmatpush.bf16.msra.mxu0 0
        %506 = vmatpush.bf16.msra.mxu0 0
        %507 = vmatpush.bf16.msra.mxu0 0
        %508 = vmatpush.bf16.msra.mxu0 %v496
        %509 = vmatpush.bf16.msra.mxu0 %v495
        %510 = vmatmul.bf16.gmra.mxu0 %v500
        %v511 = vpop.f32.mrf.mxu0
        %v512 = vadd.f32 %v485, %v511
        %v513 = vpop.f32.mrf.mxu0
        %514 = vdwg.mxu0
        %v515 = vpack.c.bf16 %v512, %v512
        %vm516 = vcmask 257024
        %517 = vst.msk [vmem:[#allocation2] sm:$0xf] %vm516, %v515
        %519 = vrot.lane.b32.xlu0 %v512, 96
        %v520 = vpop.permute.xlu0 %519
        %522 = vxpose.xlu0.b32.start [1/16] %v520, 128
        %523 = vxpose.xlu0.b32.cont [2/16] 0.0, 128
        %524 = vxpose.xlu0.b32.cont [3/16] 0.0, 128
        %525 = vxpose.xlu0.b32.cont [4/16] 0.0, 128
        %526 = vxpose.xlu0.b32.cont [5/16] 0.0, 128
        %527 = vxpose.xlu0.b32.cont [6/16] 0.0, 128
        %528 = vxpose.xlu0.b32.cont [7/16] 0.0, 128
        %529 = vxpose.xlu0.b32.cont [8/16] 0.0, 128
        %530 = vxpose.xlu0.b32.cont [9/16] 0.0, 128
        %531 = vxpose.xlu0.b32.cont [10/16] 0.0, 128
        %532 = vxpose.xlu0.b32.cont [11/16] 0.0, 128
        %533 = vxpose.xlu0.b32.cont [12/16] 0.0, 128
        %534 = vxpose.xlu0.b32.cont [13/16] 0.0, 128
        %535 = vxpose.xlu0.b32.cont [14/16] 0.0, 128
        %536 = vxpose.xlu0.b32.cont [15/16] 0.0, 128
        %537 = vxpose.xlu0.b32.end [16/16] 0.0, 128
        %v538 = vpop.trf.xlu0
        %v539 = vpop.trf.xlu0
        %v540 = vpop.trf.xlu0
        %v541 = vpop.trf.xlu0
        %v542 = vpop.trf.xlu0
        %v543 = vpop.trf.xlu0
        %v544 = vpop.trf.xlu0
        %v545 = vpop.trf.xlu0
        %v546 = vpop.trf.xlu0
        %v547 = vpop.trf.xlu0
        %v548 = vpop.trf.xlu0
        %v549 = vpop.trf.xlu0
        %v550 = vpop.trf.xlu0
        %v551 = vpop.trf.xlu0
        %v552 = vpop.trf.xlu0
        %v553 = vpop.trf.xlu0
        %v554 = vpack.c.bf16 %v538, %v538
        %v555 = vpack.c.bf16 %v539, %v539
        %v556 = vpack.c.bf16 %v540, %v540
        %v557 = vpack.c.bf16 %v541, %v541
        %vm558 = vcmask 60416
        %559 = vst.msk [vmem:[#allocation3] sm:$0xf] %vm558, %v554
        %560 = vst.msk [vmem:[#allocation3 + $0x4] sm:$0xf] %vm558, %v555
        %561 = vst.msk [vmem:[#allocation3 + $0x8] sm:$0xf] %vm558, %v556
        %562 = vst.msk [vmem:[#allocation3 + $0xc] sm:$0xf] %vm558, %v557
        %564 = vrot.lane.b32.xlu0 %v515, 64
        %v565 = vpop.permute.xlu0 %564
        %567 = vst.msk [vmem:[#allocation4] sm:$0xf] %vm516, %v565
        %v568 = vld [vmem:[#allocation3] sm:$0xf]
        %v569 = vld [vmem:[#allocation4] sm:$0xf]
        %v570 = vld [vmem:[#allocation2] sm:$0xf]
        %vm571 = vcmask 64512
        %v573 = vsel %vm571, %v570, 0
        %vm575 = vcmask 1043456
        %v577 = vsel %vm575, %v568, 0
        %579 = vmatpush.bf16.msra.mxu0 0
        %580 = vmatpush.bf16.msra.mxu0 0
        %581 = vmatpush.bf16.msra.mxu0 0
        %582 = vmatpush.bf16.msra.mxu0 0
        %583 = vmatpush.bf16.msra.mxu0 0
        %584 = vmatpush.bf16.msra.mxu0 0
        %585 = vmatpush.bf16.msra.mxu0 0
        %586 = vmatpush.bf16.msra.mxu0 %v577
        %587 = vmatmul.bf16.gmra.mxu0 %v573
        %v588 = vpop.f32.mrf.mxu0
        %v589 = vadd.f32 0.0, %v588
        %v590 = vpop.f32.mrf.mxu0
        %591 = vdwg.mxu0
        %v592 = vsel %vm571, %v589, -inf
        %593 = vmax.xlane.f32.xlu0 %v592
        %v594 = vpop.xlane.xlu0 %593
        %v595 = vsub.f32 %v589, %v594
        %v596 = vmul.f32 %v595, 1.442695
        %v597 = vpow.pop %v596
        %v598 = vsel %vm571, %v597, 0.0
        %599 = vadd.xlane.f32.xlu0 %v598
        %v600 = vpop.xlane.xlu0 %599
        %v601 = vpack.c.bf16 %v597, %v597
        %v603 = vsel %vm571, %v601, 0
        %v606 = vsel %vm575, %v569, 0
        %608 = vmatpush.bf16.msra.mxu0 0
        %609 = vmatpush.bf16.msra.mxu0 0
        %610 = vmatpush.bf16.msra.mxu0 0
        %611 = vmatpush.bf16.msra.mxu0 0
        %612 = vmatpush.bf16.msra.mxu0 0
        %613 = vmatpush.bf16.msra.mxu0 0
        %614 = vmatpush.bf16.msra.mxu0 0
        %615 = vmatpush.bf16.msra.mxu0 %v606
        %616 = vmatmul.bf16.gmra.mxu0 %v603
        %v617 = vpop.f32.mrf.mxu0
        %v618 = vadd.f32 0.0, %v617
        %v619 = vpop.f32.mrf.mxu0
        %620 = vdwg.mxu0
        %v621 = vrcp.pop %v600
        %v622 = vmul.f32 %v618, %v621
        %v623 = vpack.c.bf16 %v622, %v622
        %624 = vst.msk [vmem:[#allocation5] sm:$0xf] %vm558, %v623
        %v625 = vld [vmem:[#allocation3 + $0x4] sm:$0xf]
        %v626 = vld [vmem:[#allocation4] sm:$0xf]
        %v627 = vld [vmem:[#allocation2] sm:$0xf]
        %v629 = vunpack.c.l.b16 %v627
        %v630 = vpack.c.b16 %v629, %v629
        %631 = vrot.lane.b32.xlu0 %v630, 120
        %v632 = vpop.permute.xlu0 %631
        %v634 = vsel %vm571, %v632, 0
        %v637 = vsel %vm575, %v625, 0
        %639 = vmatpush.bf16.msra.mxu0 0
        %640 = vmatpush.bf16.msra.mxu0 0
        %641 = vmatpush.bf16.msra.mxu0 0
        %642 = vmatpush.bf16.msra.mxu0 0
        %643 = vmatpush.bf16.msra.mxu0 0
        %644 = vmatpush.bf16.msra.mxu0 0
        %645 = vmatpush.bf16.msra.mxu0 0
        %646 = vmatpush.bf16.msra.mxu0 %v637
        %647 = vmatmul.bf16.gmra.mxu0 %v634
        %v648 = vpop.f32.mrf.mxu0
        %v649 = vadd.f32 0.0, %v648
        %v650 = vpop.f32.mrf.mxu0
        %651 = vdwg.mxu0
        %v652 = vsel %vm571, %v649, -inf
        %653 = vmax.xlane.f32.xlu0 %v652
        %v654 = vpop.xlane.xlu0 %653
        %v655 = vsub.f32 %v649, %v654
        %v656 = vmul.f32 %v655, 1.442695
        %v657 = vpow.pop %v656
        %v658 = vsel %vm571, %v657, 0.0
        %659 = vadd.xlane.f32.xlu0 %v658
        %v660 = vpop.xlane.xlu0 %659
        %v661 = vpack.c.bf16 %v657, %v657
        %v663 = vunpack.c.l.b16 %v626
        %v664 = vpack.c.b16 %v663, %v663
        %665 = vrot.lane.b32.xlu0 %v664, 120
        %v666 = vpop.permute.xlu0 %665
        %v668 = vsel %vm571, %v661, 0
        %v671 = vsel %vm575, %v666, 0
        %673 = vmatpush.bf16.msra.mxu0 0
        %674 = vmatpush.bf16.msra.mxu0 0
        %675 = vmatpush.bf16.msra.mxu0 0
        %676 = vmatpush.bf16.msra.mxu0 0
        %677 = vmatpush.bf16.msra.mxu0 0
        %678 = vmatpush.bf16.msra.mxu0 0
        %679 = vmatpush.bf16.msra.mxu0 0
        %680 = vmatpush.bf16.msra.mxu0 %v671
        %681 = vmatmul.bf16.gmra.mxu0 %v668
        %v682 = vpop.f32.mrf.mxu0
        %v683 = vadd.f32 0.0, %v682
        %v684 = vpop.f32.mrf.mxu0
        %685 = vdwg.mxu0
        %v686 = vrcp.pop %v660
        %v687 = vmul.f32 %v683, %v686
        %v688 = vpack.c.bf16 %v687, %v687
        %690 = vrot.lane.b32.xlu0 %v688, 8
        %v691 = vpop.permute.xlu0 %690
        %vm693 = vcmask 126016
        %694 = vst.msk [vmem:[#allocation5] sm:$0xf] %vm693, %v691
        %v695 = vld [vmem:[#allocation3 + $0x8] sm:$0xf]
        %v696 = vld [vmem:[#allocation4] sm:$0xf]
        %v697 = vld [vmem:[#allocation2] sm:$0xf]
        %v699 = vunpack.c.l.b16 %v697
        %v700 = vpack.c.b16 %v699, %v699
        %701 = vrot.lane.b32.xlu0 %v700, 112
        %v702 = vpop.permute.xlu0 %701
        %v704 = vsel %vm571, %v702, 0
        %v707 = vsel %vm575, %v695, 0
        %709 = vmatpush.bf16.msra.mxu0 0
        %710 = vmatpush.bf16.msra.mxu0 0
        %711 = vmatpush.bf16.msra.mxu0 0
        %712 = vmatpush.bf16.msra.mxu0 0
        %713 = vmatpush.bf16.msra.mxu0 0
        %714 = vmatpush.bf16.msra.mxu0 0
        %715 = vmatpush.bf16.msra.mxu0 0
        %716 = vmatpush.bf16.msra.mxu0 %v707
        %717 = vmatmul.bf16.gmra.mxu0 %v704
        %v718 = vpop.f32.mrf.mxu0
        %v719 = vadd.f32 0.0, %v718
        %v720 = vpop.f32.mrf.mxu0
        %721 = vdwg.mxu0
        %v722 = vsel %vm571, %v719, -inf
        %723 = vmax.xlane.f32.xlu0 %v722
        %v724 = vpop.xlane.xlu0 %723
        %v725 = vsub.f32 %v719, %v724
        %v726 = vmul.f32 %v725, 1.442695
        %v727 = vpow.pop %v726
        %v728 = vsel %vm571, %v727, 0.0
        %729 = vadd.xlane.f32.xlu0 %v728
        %v730 = vpop.xlane.xlu0 %729
        %v731 = vpack.c.bf16 %v727, %v727
        %v733 = vunpack.c.l.b16 %v696
        %v734 = vpack.c.b16 %v733, %v733
        %735 = vrot.lane.b32.xlu0 %v734, 112
        %v736 = vpop.permute.xlu0 %735
        %v738 = vsel %vm571, %v731, 0
        %v741 = vsel %vm575, %v736, 0
        %743 = vmatpush.bf16.msra.mxu0 0
        %744 = vmatpush.bf16.msra.mxu0 0
        %745 = vmatpush.bf16.msra.mxu0 0
        %746 = vmatpush.bf16.msra.mxu0 0
        %747 = vmatpush.bf16.msra.mxu0 0
        %748 = vmatpush.bf16.msra.mxu0 0
        %749 = vmatpush.bf16.msra.mxu0 0
        %750 = vmatpush.bf16.msra.mxu0 %v741
        %751 = vmatmul.bf16.gmra.mxu0 %v738
        %v752 = vpop.f32.mrf.mxu0
        %v753 = vadd.f32 0.0, %v752
        %v754 = vpop.f32.mrf.mxu0
        %755 = vdwg.mxu0
        %v756 = vrcp.pop %v730
        %v757 = vmul.f32 %v753, %v756
        %v758 = vpack.c.bf16 %v757, %v757
        %760 = vrot.lane.b32.xlu0 %v758, 16
        %v761 = vpop.permute.xlu0 %760
        %vm763 = vcmask 191616
        %764 = vst.msk [vmem:[#allocation5] sm:$0xf] %vm763, %v761
        %v765 = vld [vmem:[#allocation3 + $0xc] sm:$0xf]
        %v766 = vld [vmem:[#allocation4] sm:$0xf]
        %v767 = vld [vmem:[#allocation2] sm:$0xf]
        %v769 = vunpack.c.l.b16 %v767
        %v770 = vpack.c.b16 %v769, %v769
        %771 = vrot.lane.b32.xlu0 %v770, 104
        %v772 = vpop.permute.xlu0 %771
        %v774 = vsel %vm571, %v772, 0
        %v777 = vsel %vm575, %v765, 0
        %779 = vmatpush.bf16.msra.mxu0 0
        %780 = vmatpush.bf16.msra.mxu0 0
        %781 = vmatpush.bf16.msra.mxu0 0
        %782 = vmatpush.bf16.msra.mxu0 0
        %783 = vmatpush.bf16.msra.mxu0 0
        %784 = vmatpush.bf16.msra.mxu0 0
        %785 = vmatpush.bf16.msra.mxu0 0
        %786 = vmatpush.bf16.msra.mxu0 %v777
        %787 = vmatmul.bf16.gmra.mxu0 %v774
        %v788 = vpop.f32.mrf.mxu0
        %v789 = vadd.f32 0.0, %v788
        %v790 = vpop.f32.mrf.mxu0
        %791 = vdwg.mxu0
        %v792 = vsel %vm571, %v789, -inf
        %793 = vmax.xlane.f32.xlu0 %v792
        %v794 = vpop.xlane.xlu0 %793
        %v795 = vsub.f32 %v789, %v794
        %v796 = vmul.f32 %v795, 1.442695
        %v797 = vpow.pop %v796
        %v798 = vsel %vm571, %v797, 0.0
        %799 = vadd.xlane.f32.xlu0 %v798
        %v800 = vpop.xlane.xlu0 %799
        %v801 = vpack.c.bf16 %v797, %v797
        %v803 = vunpack.c.l.b16 %v766
        %v804 = vpack.c.b16 %v803, %v803
        %805 = vrot.lane.b32.xlu0 %v804, 104
        %v806 = vpop.permute.xlu0 %805
        %v808 = vsel %vm571, %v801, 0
        %v811 = vsel %vm575, %v806, 0
        %813 = vmatpush.bf16.msra.mxu0 0
        %814 = vmatpush.bf16.msra.mxu0 0
        %815 = vmatpush.bf16.msra.mxu0 0
        %816 = vmatpush.bf16.msra.mxu0 0
        %817 = vmatpush.bf16.msra.mxu0 0
        %818 = vmatpush.bf16.msra.mxu0 0
        %819 = vmatpush.bf16.msra.mxu0 0
        %820 = vmatpush.bf16.msra.mxu0 %v811
        %821 = vmatmul.bf16.gmra.mxu0 %v808
        %v822 = vpop.f32.mrf.mxu0
        %v823 = vadd.f32 0.0, %v822
        %v824 = vpop.f32.mrf.mxu0
        %825 = vdwg.mxu0
        %v826 = vrcp.pop %v800
        %v827 = vmul.f32 %v823, %v826
        %v828 = vpack.c.bf16 %v827, %v827
        %830 = vrot.lane.b32.xlu0 %v828, 24
        %v831 = vpop.permute.xlu0 %830
        %vm833 = vcmask 257216
        %834 = vst.msk [vmem:[#allocation5] sm:$0xf] %vm833, %v831
        %v835 = vld [vmem:[#allocation5] sm:$0xf]
        %v836 = vld [vmem:[%s5] sm:$0xf]
        %v837 = vld [vmem:[%s5 + $0x4] sm:$0xf]
        %v838 = vld [vmem:[%s5 + $0x8] sm:$0xf]
        %v839 = vld [vmem:[%s5 + $0xc] sm:$0xf]
        %v844 = vunpack.c.l.b16 %v836
        %v845 = vunpack.c.l.b16 %v837
        %v846 = vunpack.c.l.b16 %v838
        %v847 = vunpack.c.l.b16 %v839
        %v848 = vpack.c.b16 %v845, %v844
        %v849 = vpack.c.b16 %v847, %v846
        %v853 = vsel %vm438, %v835, 0
        %855 = vmatpush.bf16.msra.mxu0 0
        %856 = vmatpush.bf16.msra.mxu0 0
        %857 = vmatpush.bf16.msra.mxu0 0
        %858 = vmatpush.bf16.msra.mxu0 0
        %859 = vmatpush.bf16.msra.mxu0 0
        %860 = vmatpush.bf16.msra.mxu0 0
        %861 = vmatpush.bf16.msra.mxu0 %v849
        %862 = vmatpush.bf16.msra.mxu0 %v848
        %863 = vmatmul.bf16.gmra.mxu0 %v853
        %v864 = vpop.f32.mrf.mxu0
        %v865 = vadd.f32 0.0, %v864
        %v866 = vpop.f32.mrf.mxu0
        %867 = vdwg.mxu0
        %v868 = vadd.f32 %v437, %v865
        %v869 = vld [vmem:[%s6] sm:$0x1]
        %v871 = vperm.slane %v869, 0
        %v873 = vadd.f32 %v868, %v871
        %v874 = vsel %vm438, %v873, 0.0
        %875 = vadd.xlane.f32.xlu0 %v874
        %v876 = vpop.xlane.xlu0 %875
        %v877 = vmul.f32 %v876, %v448
        %v878 = vsub.f32 %v873, %v877
        %v879 = vmul.f32 %v878, %v878
        %v880 = vsel %vm438, %v879, 0.0
        %881 = vadd.xlane.f32.xlu0 %v880
        %v882 = vpop.xlane.xlu0 %881
        %v883 = vmul.f32 %v882, %v448
        %v884 = vadd.f32 %v883, 1e-05
        %v885 = vrsqrt.pop %v884
        %v886 = vmul.f32 %v885, %v884
        %v887 = vmul.f32 %v886, %v885
        %v888 = vmul.f32 0.5, %v887
        %v889 = vsub.f32 1.5, %v888
        %v890 = vmul.f32 %v885, %v889
        %vm891 = vweird.f32 %v884
        %vm892 = vweird.f32 %v885
        %vm893 = vmor %vm891, %vm892
        %v894 = vsel %vm893, %v885, %v890
        %v895 = vmul.f32 %v878, %v894
        %v896 = vld [vmem:[%s7] sm:$0x1]
        %v898 = vperm.slane %v896, 0
        %v900 = vmul.f32 %v895, %v898
        %v901 = vld [vmem:[%s8] sm:$0x1]
        %v903 = vperm.slane %v901, 0
        %v905 = vadd.f32 %v900, %v903
        %v906 = vpack.c.bf16 %v905, %v905
        %v907 = vld [vmem:[%s9] sm:$0xf]
        %v908 = vld [vmem:[%s9 + $0x4] sm:$0xf]
        %v909 = vld [vmem:[%s9 + $0x8] sm:$0xf]
        %v910 = vld [vmem:[%s9 + $0xc] sm:$0xf]
        %v911 = vld [vmem:[%s10] sm:$0x1]
        %v913 = vperm.slane %v911, 0
        %v919 = vunpack.c.l.b16 %v907
        %v920 = vunpack.c.l.b16 %v908
        %v921 = vunpack.c.l.b16 %v909
        %v922 = vunpack.c.l.b16 %v910
        %v923 = vpack.c.b16 %v920, %v919
        %v924 = vpack.c.b16 %v922, %v921
        %v928 = vsel %vm438, %v906, 0
        %930 = vmatpush.bf16.msra.mxu0 0
        %931 = vmatpush.bf16.msra.mxu0 0
        %932 = vmatpush.bf16.msra.mxu0 0
        %933 = vmatpush.bf16.msra.mxu0 0
        %934 = vmatpush.bf16.msra.mxu0 0
        %935 = vmatpush.bf16.msra.mxu0 0
        %936 = vmatpush.bf16.msra.mxu0 %v924
        %937 = vmatpush.bf16.msra.mxu0 %v923
        %938 = vmatmul.bf16.gmra.mxu0 %v928
        %v939 = vpop.f32.mrf.mxu0
        %v940 = vadd.f32 %v913, %v939
        %v941 = vpop.f32.mrf.mxu0
        %942 = vdwg.mxu0
        %v943 = vmul.f32 %v940, 1.702
        %v944 = vxor.u32 %v943, 2147483648
        %v945 = vmul.f32 %v944, 1.442695
        %v946 = vpow.pop %v945
        %v947 = vadd.f32 %v946, 1.0
        %v948 = vrcp.pop %v947
        %v949 = vmul.f32 %v947, %v948
        %v950 = vsub.f32 1.0, %v949
        %v951 = vmul.f32 %v948, %v950
        %v952 = vadd.f32 %v948, %v951
        %vm953 = vweird.f32 %v947
        %vm954 = vweird.f32 %v948
        %vm955 = vmor %vm953, %vm954
        %v956 = vsel %vm955, %v948, %v952
        %v957 = vand.u32 2147483647, %v947
        %vm958 = vcmp.eq.f32.partialorder %v957, 8.507059e+37
        %v959 = vand.u32 %v947, 2147483648
        %v960 = vor.u32 1.1754944e-38, %v959
        %v961 = vsel %vm958, %v960, %v956
        %v962 = vmul.f32 1.0, %v961
        %v963 = vmul.f32 %v940, %v962
        %v964 = vpack.c.bf16 %v963, %v963
        %v965 = vld [vmem:[%s11] sm:$0xf]
        %v966 = vld [vmem:[%s11 + $0x4] sm:$0xf]
        %v967 = vld [vmem:[%s11 + $0x8] sm:$0xf]
        %v968 = vld [vmem:[%s11 + $0xc] sm:$0xf]
        %v969 = vld [vmem:[%s11 + $0x10] sm:$0xf]
        %v970 = vld [vmem:[%s11 + $0x14] sm:$0xf]
        %v971 = vld [vmem:[%s11 + $0x18] sm:$0xf]
        %v972 = vld [vmem:[%s11 + $0x1c] sm:$0xf]
        %v973 = vld [vmem:[%s11 + $0x20] sm:$0xf]
        %v974 = vld [vmem:[%s11 + $0x24] sm:$0xf]
        %v975 = vld [vmem:[%s11 + $0x28] sm:$0xf]
        %v976 = vld [vmem:[%s11 + $0x2c] sm:$0xf]
        %v977 = vld [vmem:[%s11 + $0x30] sm:$0xf]
        %v978 = vld [vmem:[%s11 + $0x34] sm:$0xf]
        %v979 = vld [vmem:[%s11 + $0x38] sm:$0xf]
        %v980 = vld [vmem:[%s11 + $0x3c] sm:$0xf]
        %v981 = vld [vmem:[%s12] sm:$0x1]
        %v983 = vperm.slane %v981, 0
        %v1001 = vunpack.c.l.b16 %v965
        %v1002 = vunpack.c.l.b16 %v966
        %v1003 = vunpack.c.l.b16 %v967
        %v1004 = vunpack.c.l.b16 %v968
        %v1005 = vunpack.c.l.b16 %v969
        %v1006 = vunpack.c.l.b16 %v970
        %v1007 = vunpack.c.l.b16 %v971
        %v1008 = vunpack.c.l.b16 %v972
        %v1009 = vunpack.c.l.b16 %v973
        %v1010 = vunpack.c.l.b16 %v974
        %v1011 = vunpack.c.l.b16 %v975
        %v1012 = vunpack.c.l.b16 %v976
        %v1013 = vunpack.c.l.b16 %v977
        %v1014 = vunpack.c.l.b16 %v978
        %v1015 = vunpack.c.l.b16 %v979
        %v1016 = vunpack.c.l.b16 %v980
        %v1017 = vpack.c.b16 %v1002, %v1001
        %v1018 = vpack.c.b16 %v1004, %v1003
        %v1019 = vpack.c.b16 %v1006, %v1005
        %v1020 = vpack.c.b16 %v1008, %v1007
        %v1021 = vpack.c.b16 %v1010, %v1009
        %v1022 = vpack.c.b16 %v1012, %v1011
        %v1023 = vpack.c.b16 %v1014, %v1013
        %v1024 = vpack.c.b16 %v1016, %v1015
        %1033 = vmatpush.bf16.msra.mxu0 %v1024
        %1034 = vmatpush.bf16.msra.mxu0 %v1023
        %1035 = vmatpush.bf16.msra.mxu0 %v1022
        %1036 = vmatpush.bf16.msra.mxu0 %v1021
        %1037 = vmatpush.bf16.msra.mxu0 %v1020
        %1038 = vmatpush.bf16.msra.mxu0 %v1019
        %1039 = vmatpush.bf16.msra.mxu0 %v1018
        %1040 = vmatpush.bf16.msra.mxu0 %v1017
        %1041 = vmatmul.bf16.gmra.mxu0 %v964
        %v1042 = vpop.f32.mrf.mxu0
        %v1043 = vadd.f32 %v983, %v1042
        %v1044 = vpop.f32.mrf.mxu0
        %1045 = vdwg.mxu0
        %v1046 = vadd.f32 %v873, %v1043
        %1047 = vst.msk [vmem:[%s431] sm:$0xff] %vm438, %v1046
        %s1048 = sand.u32 %s313, 1
        %s1049 = scalar_lea.sflag [#allocation7], %s1048
        %s1050 = sand.u32 %s313, 1
        %s1051 = smul.addr %s1050, 8
        %s1052 = scalar_lea.vmem [#allocation6], %s1051
        // Predicated region
        $region73: #{tpu_custom_call.1} parent=71 // pred_check
          %p1053 = pneg %p323
        $region74: #{tpu_custom_call.1} parent=71 // pred_check_branch
          %1055 = sbr.rel (%p1053) target = $region76
        $region75: #{tpu_custom_call.1} parent=71 // pred_region
          %1057 = vsyncadd %s1049, 0
          %s1058 = smul.addr %s27, 8
          %s1059 = scalar_lea.hbm %s13, %s1058
          %s1061 = sshll.u32 %s1052, 4
          %s1062 = int_to_ptr.vmem [resolvable:$true] %s1061
          %s1063 = sshll.u32 %s1059, 4
          %s1064 = int_to_ptr.hbm [resolvable:$true] %s1063
          %1066 = dma.vmem_to_hbm [thread:$0]  %s1062, 128, %s1064, %s1049
        $region76: #{tpu_custom_call.1} parent=71 // pred_fallthru
          _
      $region72: #{tpu_custom_call.1} parent=5 // pred_fallthru
        _
      %p1067 = scmp.le.s32.totalorder 2, %s22
      // Predicated region
      $region77: #{tpu_custom_call.1} parent=5 // pred_check
        %p1068 = pneg %p1067
      $region78: #{tpu_custom_call.1} parent=5 // pred_check_branch
        %1070 = sbr.rel (%p1068) target = $region80
      $region79: #{tpu_custom_call.1} parent=5 // pred_region
        %s1071 = ssub.s32 %s22, 2
        // Predicated region
        $region81: #{tpu_custom_call.1} parent=79 // pred_check
          %p1072 = pneg %p329
        $region82: #{tpu_custom_call.1} parent=79 // pred_check_branch
          %1074 = sbr.rel (%p1072) target = $region84
        $region83: #{tpu_custom_call.1} parent=79 // pred_region
          %s1075 = sand.u32 %s314, 1
          %s1076 = scalar_lea.sflag [#allocation7], %s1075
          %s1077 = sand.u32 %s314, 1
          %s1078 = smul.addr %s1077, 8
          %s1079 = scalar_lea.vmem [#allocation6], %s1078
          %1081 = dma.done %s1076, 128
        $region84: #{tpu_custom_call.1} parent=79 // pred_fallthru
          _
      $region80: #{tpu_custom_call.1} parent=5 // pred_fallthru
        _
    $region6: #{tpu_custom_call.1} parent=1 // loop_footer
      %s26 = sadd.s32 1, %s22
    $region7: #{tpu_custom_call.1} parent=1 // loop_footer_branch
      %21 = sbr.rel target = $region3
    $region8: #{tpu_custom_call.1} parent=1 // loop_exit
      _
    %1082 = vsyncpa [#allocation7], 1
    %s1083 = scalar_lea.sflag [#allocation7], 1
    %1084 = vsyncpa %s1083, 1

</llo_original>
